<compile_context>
chip_gen: v7x
topology: tpu7x:2x2x1
jax: 0.10.0
libtpu: 0.0.40
codegen_flags: <defaults>
</compile_context>

<pallas_src>
import math
import functools

import jax
import jax.numpy as jnp
from jax.experimental import pallas as pl
from jax.experimental.pallas import tpu as pltpu


_LN_EPS = 1e-6


def _vmem_limit_and_row_tile():
    """Derive scoped-VMEM limit and max row tile from the chip's VMEM size."""
    try:
        cap = int(pltpu.get_tpu_info().vmem_capacity_bytes)
    except Exception:
        cap = 64 * 1024 * 1024                      # conservative (v7x-like)
    limit = min(96 * 1024 * 1024, cap * 3 // 4)     # 96 MiB on v5e/v6e, 48 MiB on v7x
    row_tile = 512 if cap >= 100 * 1024 * 1024 else 256
    return limit, row_tile


_VMEM_LIMIT, _MAX_ROW_TILE = _vmem_limit_and_row_tile()


def _cparams(sem):
    return pltpu.CompilerParams(dimension_semantics=sem,
                                vmem_limit_bytes=_VMEM_LIMIT)


def _probe_buffered_one():
    """Feature-test single-buffered (resident) BlockSpecs once at import."""
    try:
        def k(x_ref, o_ref):
            o_ref[...] = x_ref[...] + 1.0
        x = jnp.zeros((8, 128), jnp.float32)
        out = pl.pallas_call(
            k,
            grid=(1,),
            in_specs=[pl.BlockSpec((8, 128), lambda i: (0, 0),
                                   pipeline_mode=pl.Buffered(1))],
            out_specs=pl.BlockSpec((8, 128), lambda i: (0, 0)),
            out_shape=jax.ShapeDtypeStruct((8, 128), jnp.float32),
        )(x)
        jax.block_until_ready(out)
        return True
    except Exception:
        return False


_HAS_BUFFERED_1 = _probe_buffered_one()


def _resident(shape):
    """BlockSpec for a grid-invariant operand (single-buffered when supported)."""
    nd = len(shape)
    imap = lambda i: (0,) * nd
    if _HAS_BUFFERED_1:
        return pl.BlockSpec(shape, imap, pipeline_mode=pl.Buffered(1))
    return pl.BlockSpec(shape, imap)


def _choose_row_tile(m):
    if m <= _MAX_ROW_TILE:
        return max(8, ((m + 7) // 8) * 8)
    return _MAX_ROW_TILE


def _pad_rows(x2d, tm):
    m = x2d.shape[0]
    pm = pl.cdiv(m, tm) * tm
    if pm == m:
        return x2d
    return jnp.pad(x2d, ((0, pm - m), (0, 0)))


# ----------------------------- Pallas kernels ------------------------------

def _embed_pe_kernel(e_ref, pe_ref, o_ref, *, scale):
    # e: [S, D] f32 (one batch), pe: [S, D] f32 shared -> bf16 out
    o_ref[...] = (e_ref[...] * scale + pe_ref[...]).astype(o_ref.dtype)


def _proj_addnorm_kernel(ctx_ref, res_ref, w_ref, b_ref, g_ref, bt_ref, o_ref,
                         *, eps):
    # Fused: LayerNorm(res + (ctx @ w_o + b_o)); ctx/res/w bf16, math in f32.
    y = jnp.dot(ctx_ref[...], w_ref[...],
                preferred_element_type=jnp.float32) + b_ref[...]
    s = res_ref[...].astype(jnp.float32) + y
    mean = jnp.mean(s, axis=-1, keepdims=True)
    var = jnp.mean((s - mean) ** 2, axis=-1, keepdims=True)   # unbiased=False
    n = (s - mean) * jax.lax.rsqrt(var + eps)
    o_ref[...] = (g_ref[...] * n + bt_ref[...]).astype(o_ref.dtype)


def _ffn_addnorm_kernel(x_ref, w1_ref, b1_ref, w2_ref, b2_ref, g_ref, bt_ref,
                        o_ref, *, eps):
    # Fused: LayerNorm(x + (relu(x @ W1 + b1) @ W2 + b2))
    x = x_ref[...]                                             # bf16
    h = jnp.dot(x, w1_ref[...], preferred_element_type=jnp.float32) + b1_ref[...]
    h = jnp.maximum(h, 0.0)
    y = jnp.dot(h.astype(jnp.bfloat16), w2_ref[...],
                preferred_element_type=jnp.float32) + b2_ref[...]
    s = x.astype(jnp.float32) + y
    mean = jnp.mean(s, axis=-1, keepdims=True)
    var = jnp.mean((s - mean) ** 2, axis=-1, keepdims=True)
    n = (s - mean) * jax.lax.rsqrt(var + eps)
    o_ref[...] = (g_ref[...] * n + bt_ref[...]).astype(o_ref.dtype)


def _attn_heads_to_out(q, k, v, bias, n_heads, o_ref):
    """q (scaled): [Sq, D] f32, k/v: [Sk, D] f32, bias: [Sq, Sk] f32 or None.

    Each head's PV result is written directly into o_ref[:, lo:hi] (no concat,
    bounded live ranges).  Softmax math in f32; MXU matmuls in bf16.
    """
    d = q.shape[-1]
    dk = d // n_heads
    for h in range(n_heads):                       # static unroll over heads
        lo, hi = h * dk, (h + 1) * dk
        qh = q[:, lo:hi].astype(jnp.bfloat16)
        kh = k[:, lo:hi].astype(jnp.bfloat16)
        vh = v[:, lo:hi].astype(jnp.bfloat16)
        s = jax.lax.dot_general(qh, kh, (((1,), (1,)), ((), ())),
                                preferred_element_type=jnp.float32)
        if bias is not None:
            s = s + bias
        m = jnp.max(s, axis=-1, keepdims=True)
        p = jnp.exp(s - m)
        inv = pl.reciprocal(jnp.sum(p, axis=-1, keepdims=True), approx=False)
        p = p * inv
        o_ref[:, lo:hi] = jnp.dot(p.astype(jnp.bfloat16), vh,
                                  preferred_element_type=jnp.float32
                                  ).astype(o_ref.dtype)


def _self_attn_core(x_ref, w_ref, bias, o_ref, n_heads, scale):
    x = x_ref[...]                                             # [S, D] bf16
    d = x.shape[-1]
    qkv = jnp.dot(x, w_ref[...], preferred_element_type=jnp.float32)   # [S, 3D]
    q = qkv[:, :d] * scale                                     # fold scale once
    _attn_heads_to_out(q, qkv[:, d:2 * d], qkv[:, 2 * d:], bias, n_heads, o_ref)


def _self_attn_kernel(x_ref, w_ref, o_ref, *, n_heads, scale):
    _self_attn_core(x_ref, w_ref, None, o_ref, n_heads, scale)


def _self_attn_bias_kernel(x_ref, w_ref, b_ref, o_ref, *, n_heads, scale):
    _self_attn_core(x_ref, w_ref, b_ref[...].astype(jnp.float32), o_ref,
                    n_heads, scale)


def _cross_attn_core(x_ref, enc_ref, wq_ref, wkv_ref, bias, o_ref, n_heads,
                     scale):
    d = x_ref.shape[-1]
    q = jnp.dot(x_ref[...], wq_ref[...],
                preferred_element_type=jnp.float32) * scale            # [Sq, D]
    kv = jnp.dot(enc_ref[...], wkv_ref[...],
                 preferred_element_type=jnp.float32)                   # [Sk, 2D]
    _attn_heads_to_out(q, kv[:, :d], kv[:, d:], bias, n_heads, o_ref)


def _cross_attn_kernel(x_ref, enc_ref, wq_ref, wkv_ref, o_ref, *, n_heads,
                       scale):
    _cross_attn_core(x_ref, enc_ref, wq_ref, wkv_ref, None, o_ref, n_heads,
                     scale)


def _cross_attn_bias_kernel(x_ref, enc_ref, wq_ref, wkv_ref, b_ref, o_ref, *,
                            n_heads, scale):
    _cross_attn_core(x_ref, enc_ref, wq_ref, wkv_ref,
                     b_ref[...].astype(jnp.float32), o_ref, n_heads, scale)


# ----------------------------- kernel wrappers ------------------------------

def embed_scale_pe(emb, pe_slice, scale):
    """emb * sqrt(D) + pe ; pe shared across batch via index_map -> bf16."""
    b, s, d = emb.shape
    return pl.pallas_call(
        functools.partial(_embed_pe_kernel, scale=scale),
        grid=(b,),
        in_specs=[pl.BlockSpec((None, s, d), lambda i: (i, 0, 0)),
                  _resident((None, s, d))],
        out_specs=pl.BlockSpec((None, s, d), lambda i: (i, 0, 0)),
        out_shape=jax.ShapeDtypeStruct((b, s, d), jnp.bfloat16),
        compiler_params=_cparams(("parallel",)),
    )(emb, pe_slice)


def proj_addnorm(ctx2d, res2d, w, b, gamma, beta, eps=_LN_EPS):
    """LayerNorm(res + ctx @ w + b) fused, tiled over rows. bf16 in / bf16 out."""
    m, d = ctx2d.shape
    tm = _choose_row_tile(m)
    ctx_p = _pad_rows(ctx2d, tm)
    res_p = _pad_rows(res2d, tm)
    pm = ctx_p.shape[0]
    out = pl.pallas_call(
        functools.partial(_proj_addnorm_kernel, eps=eps),
        grid=(pm // tm,),
        in_specs=[pl.BlockSpec((tm, d), lambda i: (i, 0)),
                  pl.BlockSpec((tm, d), lambda i: (i, 0)),
                  _resident((d, d)),
                  _resident((1, d)),
                  _resident((1, d)),
                  _resident((1, d))],
        out_specs=pl.BlockSpec((tm, d), lambda i: (i, 0)),
        out_shape=jax.ShapeDtypeStruct((pm, d), jnp.bfloat16),
        compiler_params=_cparams(("parallel",)),
    )(ctx_p, res_p, w, b, gamma, beta)
    return out[:m] if pm != m else out


def ffn_addnorm(x2d, w1, b1, w2, b2, gamma, beta, eps=_LN_EPS):
    """LayerNorm(x + FFN(x)) fused, tiled over rows. bf16 in / bf16 out."""
    m, d = x2d.shape
    f = w1.shape[1]
    tm = _choose_row_tile(m)
    x_p = _pad_rows(x2d, tm)
    pm = x_p.shape[0]
    out = pl.pallas_call(
        functools.partial(_ffn_addnorm_kernel, eps=eps),
        grid=(pm // tm,),
        in_specs=[pl.BlockSpec((tm, d), lambda i: (i, 0)),
                  _resident((d, f)),
                  _resident((1, f)),
                  _resident((f, d)),
                  _resident((1, d)),
                  _resident((1, d)),
                  _resident((1, d))],
        out_specs=pl.BlockSpec((tm, d), lambda i: (i, 0)),
        out_shape=jax.ShapeDtypeStruct((pm, d), jnp.bfloat16),
        compiler_params=_cparams(("parallel",)),
    )(x_p, w1, b1, w2, b2, gamma, beta)
    return out[:m] if pm != m else out


def self_attention(x, wqkv, bias, n_heads):
    """x: [B, Sq, D] bf16; wqkv: [D, 3D] bf16 resident; bias: None or
    [Bb, Sq, Sq] bf16 (Bb in {1, B}).  QKV projection fused in-kernel."""
    b, sq, d = x.shape
    scale = 1.0 / math.sqrt(d // n_heads)
    in_specs = [pl.BlockSpec((None, sq, d), lambda i: (i, 0, 0)),
                _resident((d, 3 * d))]
    args = [x, wqkv]
    if bias is None:
        kern = functools.partial(_self_attn_kernel, n_heads=n_heads, scale=scale)
    else:
        sk = bias.shape[-1]
        bmap = (lambda i: (0, 0, 0)) if bias.shape[0] == 1 else (lambda i: (i, 0, 0))
        in_specs.append(pl.BlockSpec((None, sq, sk), bmap))
        args.append(bias)
        kern = functools.partial(_self_attn_bias_kernel, n_heads=n_heads,
                                 scale=scale)
    return pl.pallas_call(
        kern,
        grid=(b,),
        in_specs=in_specs,
        out_specs=pl.BlockSpec((None, sq, d), lambda i: (i, 0, 0)),
        out_shape=jax.ShapeDtypeStruct((b, sq, d), jnp.bfloat16),
        compiler_params=_cparams(("parallel",)),
    )(*args)


def cross_attention(x, enc, wq, wkv, bias, n_heads):
    """x: [B, Sq, D] bf16; enc: [B, Sk, D] bf16; wq: [D, D], wkv: [D, 2D] bf16
    resident; bias: None or [Bb, Sq, Sk] bf16.  Q/KV projections fused."""
    b, sq, d = x.shape
    sk = enc.shape[1]
    scale = 1.0 / math.sqrt(d // n_heads)
    in_specs = [pl.BlockSpec((None, sq, d), lambda i: (i, 0, 0)),
                pl.BlockSpec((None, sk, d), lambda i: (i, 0, 0)),
                _resident((d, d)),
                _resident((d, 2 * d))]
    args = [x, enc, wq, wkv]
    if bias is None:
        kern = functools.partial(_cross_attn_kernel, n_heads=n_heads, scale=scale)
    else:
        bmap = (lambda i: (0, 0, 0)) if bias.shape[0] == 1 else (lambda i: (i, 0, 0))
        in_specs.append(pl.BlockSpec((None, sq, sk), bmap))
        args.append(bias)
        kern = functools.partial(_cross_attn_bias_kernel, n_heads=n_heads,
                                 scale=scale)
    return pl.pallas_call(
        kern,
        grid=(b,),
        in_specs=in_specs,
        out_specs=pl.BlockSpec((None, sq, d), lambda i: (i, 0, 0)),
        out_shape=jax.ShapeDtypeStruct((b, sq, d), jnp.bfloat16),
        compiler_params=_cparams(("parallel",)),
    )(*args)


# ----------------------------- model assembly ------------------------------

def _mask_to_bias(mask):
    """bool mask (True = masked) -> additive bf16 bias [Bb, Sq, Sk], Bb in {1, B}."""
    if mask is None:
        return None
    m = jnp.asarray(mask)
    if m.ndim == 4:
        m = m[:, 0]          # masks are head-uniform; keep compact [Bb, Sq, Sk]
    elif m.ndim == 2:
        m = m[None]
    return jnp.where(m, -1e9, 0.0).astype(jnp.bfloat16)


def decoder_layer(lp, x, enc, self_bias, cross_bias, n_heads):
    b, s, d = x.shape
    m = b * s

    # --- self attention (QKV projection fused into the kernel) ---
    sa = self_attention(x, lp["self_wqkv"], self_bias, n_heads)       # [B,S,D] bf16
    x2d = x.reshape(m, d)
    x2d = proj_addnorm(sa.reshape(m, d), x2d, lp["self_wo"], lp["self_bo"],
                       lp["ln1_g"], lp["ln1_b"])

    # --- cross attention (Q / KV projections fused into the kernel) ---
    xb = x2d.reshape(b, s, d)
    ca = cross_attention(xb, enc, lp["cross_wq"], lp["cross_wkv"],
                         cross_bias, n_heads)                          # [B,S,D] bf16
    x2d = proj_addnorm(ca.reshape(m, d), x2d, lp["cross_wo"], lp["cross_bo"],
                       lp["ln2_g"], lp["ln2_b"])

    # --- feed forward + residual + LayerNorm (single fused kernel) ---
    x2d = ffn_addnorm(x2d, lp["ff_w1"], lp["ff_b1"], lp["ff_w2"], lp["ff_b2"],
                      lp["ln3_g"], lp["ln3_b"])
    return x2d.reshape(b, s, d)


def decoder_forward(params, tokens, enc_out, self_attn_mask, cross_attn_mask,
                    *, n_heads):
    b, s = tokens.shape
    d = params["embedding"].shape[1]

    # embedding lookup (gather) kept as JAX glue; dropout = identity
    emb = jnp.take(params["embedding"], tokens, axis=0)                # [B,S,D] f32
    x = embed_scale_pe(emb, params["pe"][:, :s, :], math.sqrt(d))      # bf16

    self_bias = _mask_to_bias(self_attn_mask)
    cross_bias = _mask_to_bias(cross_attn_mask)
    enc = enc_out.astype(jnp.bfloat16)

    for lp in params["layers"]:
        x = decoder_layer(lp, x, enc, self_bias, cross_bias, n_heads)
    return x.astype(jnp.float32)


decoder_forward_jit = jax.jit(decoder_forward, static_argnames=("n_heads",))


# ----------------------------- parameter init ------------------------------

def _xavier(key, shape):
    fan_in, fan_out = shape
    limit = math.sqrt(6.0 / (fan_in + fan_out))
    return jax.random.uniform(key, shape, jnp.float32, -limit, limit)


def _linear_bias(key, fan_in, n):
    bound = 1.0 / math.sqrt(fan_in)
    return jax.random.uniform(key, (1, n), jnp.float32, -bound, bound)


def make_positional_encoding(max_seq_len, d_model):
    position = jnp.arange(max_seq_len, dtype=jnp.float32)[:, None]
    div_term = jnp.exp(jnp.arange(0, d_model, 2, dtype=jnp.float32)
                       * (-math.log(10000.0) / d_model))
    ang = position * div_term
    pe = jnp.zeros((max_seq_len, d_model), jnp.float32)
    pe = pe.at[:, 0::2].set(jnp.sin(ang))
    pe = pe.at[:, 1::2].set(jnp.cos(ang))
    return pe[None]  # [1, max_seq_len, d_model]


def init_params(key, vocab_size, d_model, n_heads, n_layers, d_ff, max_seq_len):
    del n_heads  # head count only affects runtime reshaping, not param shapes
    keys = jax.random.split(key, 1 + n_layers)
    params = {
        "embedding": _xavier(keys[0], (vocab_size, d_model)),
        "pe": make_positional_encoding(max_seq_len, d_model),
        "layers": [],
    }
    for li in range(n_layers):
        lk = jax.random.split(keys[1 + li], 14)
        wq, wk, wv = (_xavier(lk[i], (d_model, d_model)) for i in range(3))
        wo = _xavier(lk[3], (d_model, d_model))
        cwq, cwk, cwv = (_xavier(lk[4 + i], (d_model, d_model)) for i in range(3))
        cwo = _xavier(lk[7], (d_model, d_model))
        lp = {
            "self_wqkv": jnp.concatenate([wq, wk, wv], axis=1).astype(jnp.bfloat16),
            "self_wo": wo.astype(jnp.bfloat16),
            "self_bo": _linear_bias(lk[8], d_model, d_model),
            "cross_wq": cwq.astype(jnp.bfloat16),
            "cross_wkv": jnp.concatenate([cwk, cwv], axis=1).astype(jnp.bfloat16),
            "cross_wo": cwo.astype(jnp.bfloat16),
            "cross_bo": _linear_bias(lk[9], d_model, d_model),
            "ff_w1": _xavier(lk[10], (d_model, d_ff)).astype(jnp.bfloat16),
            "ff_b1": _linear_bias(lk[11], d_model, d_ff),
            "ff_w2": _xavier(lk[12], (d_ff, d_model)).astype(jnp.bfloat16),
            "ff_b2": _linear_bias(lk[13], d_ff, d_model),
            "ln1_g": jnp.ones((1, d_model), jnp.float32),
            "ln1_b": jnp.zeros((1, d_model), jnp.float32),
            "ln2_g": jnp.ones((1, d_model), jnp.float32),
            "ln2_b": jnp.zeros((1, d_model), jnp.float32),
            "ln3_g": jnp.ones((1, d_model), jnp.float32),
            "ln3_b": jnp.zeros((1, d_model), jnp.float32),
        }
        params["layers"].append(lp)
    return params


# --------------------------------- main -------------------------------------

if __name__ == "__main__":
    # small, decoder-consistent shapes
    vocab_size, d_model, n_heads, n_layers, d_ff, max_seq_len = 50, 32, 4, 2, 64, 16
    B, S, S_src = 2, 8, 8

    key = jax.random.PRNGKey(0)
    k_par, k_tok, k_enc = jax.random.split(key, 3)

    params = init_params(k_par, vocab_size, d_model, n_heads, n_layers,
                         d_ff, max_seq_len)
    tokens = jax.random.randint(k_tok, (B, S), 0, vocab_size, dtype=jnp.int32)
    encoder_output = jax.random.normal(k_enc, (B, S_src, d_model), jnp.float32)

    # causal self-attention mask (True = masked), no cross-attention mask
    causal_mask = jnp.triu(jnp.ones((S, S), dtype=bool), k=1)[None, None]  # [1,1,S,S]

    out = decoder_forward_jit(params, tokens, encoder_output,
                              causal_mask, None, n_heads=n_heads)
    out = jax.block_until_ready(out)
    assert out.shape == (B, S, d_model)
    assert bool(jnp.all(jnp.isfinite(out)))
    print("KERNEL_OK")
</pallas_src>

<mosaic_0001>
module attributes {stable_mosaic.version = 11 : i64} {
  func.func @k(%arg0: i32, %arg1: memref<8x128xf32, #tpu.memory_space<vmem>>, %arg2: memref<8x128xf32, #tpu.memory_space<vmem>>) attributes {dimension_semantics = [#tpu.dimension_semantics<arbitrary>], iteration_bounds = array<i64: 1>, scalar_prefetch = 0 : i64, scratch_operands = 0 : i64, tpu.core_type = #tpu.core_type<tc>, window_params = [{pipeline_mode = #tpu.pipeline_mode<synchronous>, transform_indices = @transform_0, window_bounds = array<i64: 8, 128>}, {pipeline_mode = #tpu.pipeline_mode<synchronous>, transform_indices = @transform_1, window_bounds = array<i64: 8, 128>}]} {
    %c0 = arith.constant 0 : index
    %c0_0 = arith.constant 0 : index
    %0 = vector.load %arg1[%c0, %c0_0] : memref<8x128xf32, #tpu.memory_space<vmem>>, vector<8x128xf32>
    %cst = arith.constant 1.000000e+00 : f32
    %1 = vector.broadcast %cst : f32 to vector<8x128xf32>
    %2 = arith.addf %0, %1 : vector<8x128xf32>
    %c0_1 = arith.constant 0 : index
    %c0_2 = arith.constant 0 : index
    %3 = vector.load %arg2[%c0_1, %c0_2] : memref<8x128xf32, #tpu.memory_space<vmem>>, vector<8x128xf32>
    tpu.vector_store %arg2[%c0_1, %c0_2], %2 {strides = array<i32>} : memref<8x128xf32, #tpu.memory_space<vmem>>, vector<8x128xf32>,
    return
  }
  func.func @transform_0(%arg0: i32) -> (i32, i32) {
    %c0_i32 = arith.constant 0 : i32
    %c0_i32_0 = arith.constant 0 : i32
    %c0_i32_1 = arith.constant 0 : i32
    return %c0_i32, %c0_i32_0 : i32, i32
  }
  func.func @transform_1(%arg0: i32) -> (i32, i32) {
    %c0_i32 = arith.constant 0 : i32
    %c0_i32_0 = arith.constant 0 : i32
    %c0_i32_1 = arith.constant 0 : i32
    return %c0_i32, %c0_i32_0 : i32, i32
  }
}

module attributes {stable_mosaic.version = 11 : i64} {
  func.func @_cross_attn_kernel(%arg0: i32, %arg1: memref<1x8x32xbf16, #tpu.memory_space<vmem>>, %arg2: memref<1x8x32xbf16, #tpu.memory_space<vmem>>, %arg3: memref<32x32xbf16, #tpu.memory_space<vmem>>, %arg4: memref<32x64xbf16, #tpu.memory_space<vmem>>, %arg5: memref<1x8x32xbf16, #tpu.memory_space<vmem>>) attributes {dimension_semantics = [#tpu.dimension_semantics<parallel>], iteration_bounds = array<i64: 2>, scalar_prefetch = 0 : i64, scratch_operands = 0 : i64, tpu.core_type = #tpu.core_type<tc>, window_params = [{transform_indices = @transform_0, window_bounds = array<i64: 1, 8, 32>}, {transform_indices = @transform_1, window_bounds = array<i64: 1, 8, 32>}, {pipeline_mode = #tpu.pipeline_mode<synchronous>, transform_indices = @transform_2, window_bounds = array<i64: 32, 32>}, {pipeline_mode = #tpu.pipeline_mode<synchronous>, transform_indices = @transform_3, window_bounds = array<i64: 32, 64>}, {transform_indices = @transform_4, window_bounds = array<i64: 1, 8, 32>}]} {
    %c0 = arith.constant 0 : index
    %c0_0 = arith.constant 0 : index
    %c0_1 = arith.constant 0 : index
    %0 = vector.load %arg1[%c0, %c0_0, %c0_1] : memref<1x8x32xbf16, #tpu.memory_space<vmem>>, vector<1x8x32xbf16>
    %1 = vector.shape_cast %0 : vector<1x8x32xbf16> to vector<8x32xbf16>
    %c0_2 = arith.constant 0 : index
    %c0_3 = arith.constant 0 : index
    %2 = vector.load %arg3[%c0_2, %c0_3] : memref<32x32xbf16, #tpu.memory_space<vmem>>, vector<32x32xbf16>
    %cst = arith.constant dense<0.000000e+00> : vector<8x32xf32>
    %3 = tpu.matmul %1, %2, %cst {dimension_numbers = #tpu.dot_dimension_numbers<[1], [0], [0], [1], [0, 0, 1, 1], [], []>} : vector<8x32xbf16>, vector<32x32xbf16>, vector<8x32xf32> -> vector<8x32xf32>
    %cst_4 = arith.constant 0.353553385 : f32
    %4 = vector.broadcast %cst_4 : f32 to vector<8x32xf32>
    %5 = arith.mulf %3, %4 : vector<8x32xf32>
    %c0_5 = arith.constant 0 : index
    %c0_6 = arith.constant 0 : index
    %c0_7 = arith.constant 0 : index
    %6 = vector.load %arg2[%c0_5, %c0_6, %c0_7] : memref<1x8x32xbf16, #tpu.memory_space<vmem>>, vector<1x8x32xbf16>
    %7 = vector.shape_cast %6 : vector<1x8x32xbf16> to vector<8x32xbf16>
    %c0_8 = arith.constant 0 : index
    %c0_9 = arith.constant 0 : index
    %8 = vector.load %arg4[%c0_8, %c0_9] : memref<32x64xbf16, #tpu.memory_space<vmem>>, vector<32x64xbf16>
    %cst_10 = arith.constant dense<0.000000e+00> : vector<8x64xf32>
    %9 = tpu.matmul %7, %8, %cst_10 {dimension_numbers = #tpu.dot_dimension_numbers<[1], [0], [0], [1], [0, 0, 1, 1], [], []>} : vector<8x32xbf16>, vector<32x64xbf16>, vector<8x64xf32> -> vector<8x64xf32>
    %10 = vector.extract_strided_slice %9 {offsets = [0, 0], sizes = [8, 32], strides = [1, 1]} : vector<8x64xf32> to vector<8x32xf32>
    %11 = vector.extract_strided_slice %9 {offsets = [0, 32], sizes = [8, 32], strides = [1, 1]} : vector<8x64xf32> to vector<8x32xf32>
    %12 = vector.extract_strided_slice %5 {offsets = [0, 0], sizes = [8, 8], strides = [1, 1]} : vector<8x32xf32> to vector<8x8xf32>
    %13 = arith.truncf %12 : vector<8x8xf32> to vector<8x8xbf16>
    %14 = vector.extract_strided_slice %10 {offsets = [0, 0], sizes = [8, 8], strides = [1, 1]} : vector<8x32xf32> to vector<8x8xf32>
    %15 = arith.truncf %14 : vector<8x8xf32> to vector<8x8xbf16>
    %16 = vector.extract_strided_slice %11 {offsets = [0, 0], sizes = [8, 8], strides = [1, 1]} : vector<8x32xf32> to vector<8x8xf32>
    %17 = arith.truncf %16 : vector<8x8xf32> to vector<8x8xbf16>
    %cst_11 = arith.constant dense<0.000000e+00> : vector<8x8xf32>
    %18 = tpu.matmul %13, %15, %cst_11 {dimension_numbers = #tpu.dot_dimension_numbers<[1], [1], [0], [0], [0, 0, 1, 0], [], []>} : vector<8x8xbf16>, vector<8x8xbf16>, vector<8x8xf32> -> vector<8x8xf32>
    %cst_12 = arith.constant dense<0xFF800000> : vector<8xf32>
    %19 = vector.multi_reduction <maximumf>, %18, %cst_12 [1] : vector<8x8xf32> to vector<8xf32>
    %20 = vector.shape_cast %19 : vector<8xf32> to vector<8x1xf32>
    %21 = vector.broadcast %20 : vector<8x1xf32> to vector<8x8xf32>
    %22 = arith.subf %18, %21 : vector<8x8xf32>
    %23 = math.exp %22 : vector<8x8xf32>
    %cst_13 = arith.constant dense<0.000000e+00> : vector<8xf32>
    %24 = vector.multi_reduction <add>, %23, %cst_13 [1] : vector<8x8xf32> to vector<8xf32>
    %25 = vector.shape_cast %24 : vector<8xf32> to vector<8x1xf32>
    %26 = tpu.reciprocal %25 : vector<8x1xf32> -> vector<8x1xf32>
    %27 = vector.broadcast %26 : vector<8x1xf32> to vector<8x8xf32>
    %28 = arith.mulf %23, %27 : vector<8x8xf32>
    %29 = arith.truncf %28 : vector<8x8xf32> to vector<8x8xbf16>
    %cst_14 = arith.constant dense<0.000000e+00> : vector<8x8xf32>
    %30 = tpu.matmul %29, %17, %cst_14 {dimension_numbers = #tpu.dot_dimension_numbers<[1], [0], [0], [1], [0, 0, 1, 1], [], []>} : vector<8x8xbf16>, vector<8x8xbf16>, vector<8x8xf32> -> vector<8x8xf32>
    %31 = arith.truncf %30 : vector<8x8xf32> to vector<8x8xbf16>
    %c0_15 = arith.constant 0 : index
    %c0_16 = arith.constant 0 : index
    %c0_17 = arith.constant 0 : index
    %32 = vector.load %arg5[%c0_15, %c0_16, %c0_17] : memref<1x8x32xbf16, #tpu.memory_space<vmem>>, vector<1x8x8xbf16>
    %33 = vector.shape_cast %32 : vector<1x8x8xbf16> to vector<8x8xbf16>
    %34 = vector.shape_cast %31 : vector<8x8xbf16> to vector<1x8x8xbf16>
    tpu.vector_store %arg5[%c0_15, %c0_16, %c0_17], %34 {strides = array<i32>} : memref<1x8x32xbf16, #tpu.memory_space<vmem>>, vector<1x8x8xbf16>,
    %35 = vector.extract_strided_slice %5 {offsets = [0, 8], sizes = [8, 8], strides = [1, 1]} : vector<8x32xf32> to vector<8x8xf32>
    %36 = arith.truncf %35 : vector<8x8xf32> to vector<8x8xbf16>
    %37 = vector.extract_strided_slice %10 {offsets = [0, 8], sizes = [8, 8], strides = [1, 1]} : vector<8x32xf32> to vector<8x8xf32>
    %38 = arith.truncf %37 : vector<8x8xf32> to vector<8x8xbf16>
    %39 = vector.extract_strided_slice %11 {offsets = [0, 8], sizes = [8, 8], strides = [1, 1]} : vector<8x32xf32> to vector<8x8xf32>
    %40 = arith.truncf %39 : vector<8x8xf32> to vector<8x8xbf16>
    %cst_18 = arith.constant dense<0.000000e+00> : vector<8x8xf32>
    %41 = tpu.matmul %36, %38, %cst_18 {dimension_numbers = #tpu.dot_dimension_numbers<[1], [1], [0], [0], [0, 0, 1, 0], [], []>} : vector<8x8xbf16>, vector<8x8xbf16>, vector<8x8xf32> -> vector<8x8xf32>
    %cst_19 = arith.constant dense<0xFF800000> : vector<8xf32>
    %42 = vector.multi_reduction <maximumf>, %41, %cst_19 [1] : vector<8x8xf32> to vector<8xf32>
    %43 = vector.shape_cast %42 : vector<8xf32> to vector<8x1xf32>
    %44 = vector.broadcast %43 : vector<8x1xf32> to vector<8x8xf32>
    %45 = arith.subf %41, %44 : vector<8x8xf32>
    %46 = math.exp %45 : vector<8x8xf32>
    %cst_20 = arith.constant dense<0.000000e+00> : vector<8xf32>
    %47 = vector.multi_reduction <add>, %46, %cst_20 [1] : vector<8x8xf32> to vector<8xf32>
    %48 = vector.shape_cast %47 : vector<8xf32> to vector<8x1xf32>
    %49 = tpu.reciprocal %48 : vector<8x1xf32> -> vector<8x1xf32>
    %50 = vector.broadcast %49 : vector<8x1xf32> to vector<8x8xf32>
    %51 = arith.mulf %46, %50 : vector<8x8xf32>
    %52 = arith.truncf %51 : vector<8x8xf32> to vector<8x8xbf16>
    %cst_21 = arith.constant dense<0.000000e+00> : vector<8x8xf32>
    %53 = tpu.matmul %52, %40, %cst_21 {dimension_numbers = #tpu.dot_dimension_numbers<[1], [0], [0], [1], [0, 0, 1, 1], [], []>} : vector<8x8xbf16>, vector<8x8xbf16>, vector<8x8xf32> -> vector<8x8xf32>
    %54 = arith.truncf %53 : vector<8x8xf32> to vector<8x8xbf16>
    %c0_22 = arith.constant 0 : index
    %c0_23 = arith.constant 0 : index
    %c8 = arith.constant 8 : index
    %55 = vector.load %arg5[%c0_22, %c0_23, %c8] : memref<1x8x32xbf16, #tpu.memory_space<vmem>>, vector<1x8x8xbf16>
    %56 = vector.shape_cast %55 : vector<1x8x8xbf16> to vector<8x8xbf16>
    %57 = vector.shape_cast %54 : vector<8x8xbf16> to vector<1x8x8xbf16>
    tpu.vector_store %arg5[%c0_22, %c0_23, %c8], %57 {strides = array<i32>} : memref<1x8x32xbf16, #tpu.memory_space<vmem>>, vector<1x8x8xbf16>,
    %58 = vector.extract_strided_slice %5 {offsets = [0, 16], sizes = [8, 8], strides = [1, 1]} : vector<8x32xf32> to vector<8x8xf32>
    %59 = arith.truncf %58 : vector<8x8xf32> to vector<8x8xbf16>
    %60 = vector.extract_strided_slice %10 {offsets = [0, 16], sizes = [8, 8], strides = [1, 1]} : vector<8x32xf32> to vector<8x8xf32>
    %61 = arith.truncf %60 : vector<8x8xf32> to vector<8x8xbf16>
    %62 = vector.extract_strided_slice %11 {offsets = [0, 16], sizes = [8, 8], strides = [1, 1]} : vector<8x32xf32> to vector<8x8xf32>
    %63 = arith.truncf %62 : vector<8x8xf32> to vector<8x8xbf16>
    %cst_24 = arith.constant dense<0.000000e+00> : vector<8x8xf32>
    %64 = tpu.matmul %59, %61, %cst_24 {dimension_numbers = #tpu.dot_dimension_numbers<[1], [1], [0], [0], [0, 0, 1, 0], [], []>} : vector<8x8xbf16>, vector<8x8xbf16>, vector<8x8xf32> -> vector<8x8xf32>
    %cst_25 = arith.constant dense<0xFF800000> : vector<8xf32>
    %65 = vector.multi_reduction <maximumf>, %64, %cst_25 [1] : vector<8x8xf32> to vector<8xf32>
    %66 = vector.shape_cast %65 : vector<8xf32> to vector<8x1xf32>
    %67 = vector.broadcast %66 : vector<8x1xf32> to vector<8x8xf32>
    %68 = arith.subf %64, %67 : vector<8x8xf32>
    %69 = math.exp %68 : vector<8x8xf32>
    %cst_26 = arith.constant dense<0.000000e+00> : vector<8xf32>
    %70 = vector.multi_reduction <add>, %69, %cst_26 [1] : vector<8x8xf32> to vector<8xf32>
    %71 = vector.shape_cast %70 : vector<8xf32> to vector<8x1xf32>
    %72 = tpu.reciprocal %71 : vector<8x1xf32> -> vector<8x1xf32>
    %73 = vector.broadcast %72 : vector<8x1xf32> to vector<8x8xf32>
    %74 = arith.mulf %69, %73 : vector<8x8xf32>
    %75 = arith.truncf %74 : vector<8x8xf32> to vector<8x8xbf16>
    %cst_27 = arith.constant dense<0.000000e+00> : vector<8x8xf32>
    %76 = tpu.matmul %75, %63, %cst_27 {dimension_numbers = #tpu.dot_dimension_numbers<[1], [0], [0], [1], [0, 0, 1, 1], [], []>} : vector<8x8xbf16>, vector<8x8xbf16>, vector<8x8xf32> -> vector<8x8xf32>
    %77 = arith.truncf %76 : vector<8x8xf32> to vector<8x8xbf16>
    %c0_28 = arith.constant 0 : index
    %c0_29 = arith.constant 0 : index
    %c16 = arith.constant 16 : index
    %78 = vector.load %arg5[%c0_28, %c0_29, %c16] : memref<1x8x32xbf16, #tpu.memory_space<vmem>>, vector<1x8x8xbf16>
    %79 = vector.shape_cast %78 : vector<1x8x8xbf16> to vector<8x8xbf16>
    %80 = vector.shape_cast %77 : vector<8x8xbf16> to vector<1x8x8xbf16>
    tpu.vector_store %arg5[%c0_28, %c0_29, %c16], %80 {strides = array<i32>} : memref<1x8x32xbf16, #tpu.memory_space<vmem>>, vector<1x8x8xbf16>,
    %81 = vector.extract_strided_slice %5 {offsets = [0, 24], sizes = [8, 8], strides = [1, 1]} : vector<8x32xf32> to vector<8x8xf32>
    %82 = arith.truncf %81 : vector<8x8xf32> to vector<8x8xbf16>
    %83 = vector.extract_strided_slice %10 {offsets = [0, 24], sizes = [8, 8], strides = [1, 1]} : vector<8x32xf32> to vector<8x8xf32>
    %84 = arith.truncf %83 : vector<8x8xf32> to vector<8x8xbf16>
    %85 = vector.extract_strided_slice %11 {offsets = [0, 24], sizes = [8, 8], strides = [1, 1]} : vector<8x32xf32> to vector<8x8xf32>
    %86 = arith.truncf %85 : vector<8x8xf32> to vector<8x8xbf16>
    %cst_30 = arith.constant dense<0.000000e+00> : vector<8x8xf32>
    %87 = tpu.matmul %82, %84, %cst_30 {dimension_numbers = #tpu.dot_dimension_numbers<[1], [1], [0], [0], [0, 0, 1, 0], [], []>} : vector<8x8xbf16>, vector<8x8xbf16>, vector<8x8xf32> -> vector<8x8xf32>
    %cst_31 = arith.constant dense<0xFF800000> : vector<8xf32>
    %88 = vector.multi_reduction <maximumf>, %87, %cst_31 [1] : vector<8x8xf32> to vector<8xf32>
    %89 = vector.shape_cast %88 : vector<8xf32> to vector<8x1xf32>
    %90 = vector.broadcast %89 : vector<8x1xf32> to vector<8x8xf32>
    %91 = arith.subf %87, %90 : vector<8x8xf32>
    %92 = math.exp %91 : vector<8x8xf32>
    %cst_32 = arith.constant dense<0.000000e+00> : vector<8xf32>
    %93 = vector.multi_reduction <add>, %92, %cst_32 [1] : vector<8x8xf32> to vector<8xf32>
    %94 = vector.shape_cast %93 : vector<8xf32> to vector<8x1xf32>
    %95 = tpu.reciprocal %94 : vector<8x1xf32> -> vector<8x1xf32>
    %96 = vector.broadcast %95 : vector<8x1xf32> to vector<8x8xf32>
    %97 = arith.mulf %92, %96 : vector<8x8xf32>
    %98 = arith.truncf %97 : vector<8x8xf32> to vector<8x8xbf16>
    %cst_33 = arith.constant dense<0.000000e+00> : vector<8x8xf32>
    %99 = tpu.matmul %98, %86, %cst_33 {dimension_numbers = #tpu.dot_dimension_numbers<[1], [0], [0], [1], [0, 0, 1, 1], [], []>} : vector<8x8xbf16>, vector<8x8xbf16>, vector<8x8xf32> -> vector<8x8xf32>
    %100 = arith.truncf %99 : vector<8x8xf32> to vector<8x8xbf16>
    %c0_34 = arith.constant 0 : index
    %c0_35 = arith.constant 0 : index
    %c24 = arith.constant 24 : index
    %101 = vector.load %arg5[%c0_34, %c0_35, %c24] : memref<1x8x32xbf16, #tpu.memory_space<vmem>>, vector<1x8x8xbf16>
    %102 = vector.shape_cast %101 : vector<1x8x8xbf16> to vector<8x8xbf16>
    %103 = vector.shape_cast %100 : vector<8x8xbf16> to vector<1x8x8xbf16>
    tpu.vector_store %arg5[%c0_34, %c0_35, %c24], %103 {strides = array<i32>} : memref<1x8x32xbf16, #tpu.memory_space<vmem>>, vector<1x8x8xbf16>,
    return
  }
  func.func @transform_0(%arg0: i32) -> (i32, i32, i32) {
    %c0_i32 = arith.constant 0 : i32
    %c0_i32_0 = arith.constant 0 : i32
    %c0_i32_1 = arith.constant 0 : i32
    return %arg0, %c0_i32, %c0_i32_0 : i32, i32, i32
  }
  func.func @transform_1(%arg0: i32) -> (i32, i32, i32) {
    %c0_i32 = arith.constant 0 : i32
    %c0_i32_0 = arith.constant 0 : i32
    %c0_i32_1 = arith.constant 0 : i32
    return %arg0, %c0_i32, %c0_i32_0 : i32, i32, i32
  }
  func.func @transform_2(%arg0: i32) -> (i32, i32) {
    %c0_i32 = arith.constant 0 : i32
    %c0_i32_0 = arith.constant 0 : i32
    %c0_i32_1 = arith.constant 0 : i32
    return %c0_i32, %c0_i32_0 : i32, i32
  }
  func.func @transform_3(%arg0: i32) -> (i32, i32) {
    %c0_i32 = arith.constant 0 : i32
    %c0_i32_0 = arith.constant 0 : i32
    %c0_i32_1 = arith.constant 0 : i32
    return %c0_i32, %c0_i32_0 : i32, i32
  }
  func.func @transform_4(%arg0: i32) -> (i32, i32, i32) {
    %c0_i32 = arith.constant 0 : i32
    %c0_i32_0 = arith.constant 0 : i32
    %c0_i32_1 = arith.constant 0 : i32
    return %arg0, %c0_i32, %c0_i32_0 : i32, i32, i32
  }
}

module attributes {stable_mosaic.version = 11 : i64} {
  func.func @_embed_pe_kernel(%arg0: i32, %arg1: memref<1x8x32xf32, #tpu.memory_space<vmem>>, %arg2: memref<1x8x32xf32, #tpu.memory_space<vmem>>, %arg3: memref<1x8x32xbf16, #tpu.memory_space<vmem>>) attributes {dimension_semantics = [#tpu.dimension_semantics<parallel>], iteration_bounds = array<i64: 2>, scalar_prefetch = 0 : i64, scratch_operands = 0 : i64, tpu.core_type = #tpu.core_type<tc>, window_params = [{transform_indices = @transform_0, window_bounds = array<i64: 1, 8, 32>}, {pipeline_mode = #tpu.pipeline_mode<synchronous>, transform_indices = @transform_1, window_bounds = array<i64: 1, 8, 32>}, {transform_indices = @transform_2, window_bounds = array<i64: 1, 8, 32>}]} {
    %c0 = arith.constant 0 : index
    %c0_0 = arith.constant 0 : index
    %c0_1 = arith.constant 0 : index
    %0 = vector.load %arg1[%c0, %c0_0, %c0_1] : memref<1x8x32xf32, #tpu.memory_space<vmem>>, vector<1x8x32xf32>
    %1 = vector.shape_cast %0 : vector<1x8x32xf32> to vector<8x32xf32>
    %cst = arith.constant 5.65685415 : f32
    %2 = vector.broadcast %cst : f32 to vector<8x32xf32>
    %3 = arith.mulf %1, %2 : vector<8x32xf32>
    %c0_2 = arith.constant 0 : index
    %c0_3 = arith.constant 0 : index
    %c0_4 = arith.constant 0 : index
    %4 = vector.load %arg2[%c0_2, %c0_3, %c0_4] : memref<1x8x32xf32, #tpu.memory_space<vmem>>, vector<1x8x32xf32>
    %5 = vector.shape_cast %4 : vector<1x8x32xf32> to vector<8x32xf32>
    %6 = arith.addf %3, %5 : vector<8x32xf32>
    %7 = arith.truncf %6 : vector<8x32xf32> to vector<8x32xbf16>
    %c0_5 = arith.constant 0 : index
    %c0_6 = arith.constant 0 : index
    %c0_7 = arith.constant 0 : index
    %8 = vector.load %arg3[%c0_5, %c0_6, %c0_7] : memref<1x8x32xbf16, #tpu.memory_space<vmem>>, vector<1x8x32xbf16>
    %9 = vector.shape_cast %8 : vector<1x8x32xbf16> to vector<8x32xbf16>
    %10 = vector.shape_cast %7 : vector<8x32xbf16> to vector<1x8x32xbf16>
    tpu.vector_store %arg3[%c0_5, %c0_6, %c0_7], %10 {strides = array<i32>} : memref<1x8x32xbf16, #tpu.memory_space<vmem>>, vector<1x8x32xbf16>,
    return
  }
  func.func @transform_0(%arg0: i32) -> (i32, i32, i32) {
    %c0_i32 = arith.constant 0 : i32
    %c0_i32_0 = arith.constant 0 : i32
    %c0_i32_1 = arith.constant 0 : i32
    return %arg0, %c0_i32, %c0_i32_0 : i32, i32, i32
  }
  func.func @transform_1(%arg0: i32) -> (i32, i32, i32) {
    %c0_i32 = arith.constant 0 : i32
    %c0_i32_0 = arith.constant 0 : i32
    %c0_i32_1 = arith.constant 0 : i32
    %c0_i32_2 = arith.constant 0 : i32
    return %c0_i32, %c0_i32_0, %c0_i32_1 : i32, i32, i32
  }
  func.func @transform_2(%arg0: i32) -> (i32, i32, i32) {
    %c0_i32 = arith.constant 0 : i32
    %c0_i32_0 = arith.constant 0 : i32
    %c0_i32_1 = arith.constant 0 : i32
    return %arg0, %c0_i32, %c0_i32_0 : i32, i32, i32
  }
}

module attributes {stable_mosaic.version = 11 : i64} {
  func.func @_self_attn_bias_kernel(%arg0: i32, %arg1: memref<1x8x32xbf16, #tpu.memory_space<vmem>>, %arg2: memref<32x96xbf16, #tpu.memory_space<vmem>>, %arg3: memref<1x8x8xbf16, #tpu.memory_space<vmem>>, %arg4: memref<1x8x32xbf16, #tpu.memory_space<vmem>>) attributes {dimension_semantics = [#tpu.dimension_semantics<parallel>], iteration_bounds = array<i64: 2>, scalar_prefetch = 0 : i64, scratch_operands = 0 : i64, tpu.core_type = #tpu.core_type<tc>, window_params = [{transform_indices = @transform_0, window_bounds = array<i64: 1, 8, 32>}, {pipeline_mode = #tpu.pipeline_mode<synchronous>, transform_indices = @transform_1, window_bounds = array<i64: 32, 96>}, {pipeline_mode = #tpu.pipeline_mode<synchronous>, transform_indices = @transform_2, window_bounds = array<i64: 1, 8, 8>}, {transform_indices = @transform_3, window_bounds = array<i64: 1, 8, 32>}]} {
    %c0 = arith.constant 0 : index
    %c0_0 = arith.constant 0 : index
    %c0_1 = arith.constant 0 : index
    %0 = vector.load %arg3[%c0, %c0_0, %c0_1] : memref<1x8x8xbf16, #tpu.memory_space<vmem>>, vector<1x8x8xbf16>
    %1 = vector.shape_cast %0 : vector<1x8x8xbf16> to vector<8x8xbf16>
    %2 = arith.extf %1 : vector<8x8xbf16> to vector<8x8xf32>
    %c0_2 = arith.constant 0 : index
    %c0_3 = arith.constant 0 : index
    %c0_4 = arith.constant 0 : index
    %3 = vector.load %arg1[%c0_2, %c0_3, %c0_4] : memref<1x8x32xbf16, #tpu.memory_space<vmem>>, vector<1x8x32xbf16>
    %4 = vector.shape_cast %3 : vector<1x8x32xbf16> to vector<8x32xbf16>
    %c0_5 = arith.constant 0 : index
    %c0_6 = arith.constant 0 : index
    %5 = vector.load %arg2[%c0_5, %c0_6] : memref<32x96xbf16, #tpu.memory_space<vmem>>, vector<32x96xbf16>
    %cst = arith.constant dense<0.000000e+00> : vector<8x96xf32>
    %6 = tpu.matmul %4, %5, %cst {dimension_numbers = #tpu.dot_dimension_numbers<[1], [0], [0], [1], [0, 0, 1, 1], [], []>} : vector<8x32xbf16>, vector<32x96xbf16>, vector<8x96xf32> -> vector<8x96xf32>
    %7 = vector.extract_strided_slice %6 {offsets = [0, 0], sizes = [8, 32], strides = [1, 1]} : vector<8x96xf32> to vector<8x32xf32>
    %cst_7 = arith.constant 0.353553385 : f32
    %8 = vector.broadcast %cst_7 : f32 to vector<8x32xf32>
    %9 = arith.mulf %7, %8 : vector<8x32xf32>
    %10 = vector.extract_strided_slice %6 {offsets = [0, 32], sizes = [8, 32], strides = [1, 1]} : vector<8x96xf32> to vector<8x32xf32>
    %11 = vector.extract_strided_slice %6 {offsets = [0, 64], sizes = [8, 32], strides = [1, 1]} : vector<8x96xf32> to vector<8x32xf32>
    %12 = vector.extract_strided_slice %9 {offsets = [0, 0], sizes = [8, 8], strides = [1, 1]} : vector<8x32xf32> to vector<8x8xf32>
    %13 = arith.truncf %12 : vector<8x8xf32> to vector<8x8xbf16>
    %14 = vector.extract_strided_slice %10 {offsets = [0, 0], sizes = [8, 8], strides = [1, 1]} : vector<8x32xf32> to vector<8x8xf32>
    %15 = arith.truncf %14 : vector<8x8xf32> to vector<8x8xbf16>
    %16 = vector.extract_strided_slice %11 {offsets = [0, 0], sizes = [8, 8], strides = [1, 1]} : vector<8x32xf32> to vector<8x8xf32>
    %17 = arith.truncf %16 : vector<8x8xf32> to vector<8x8xbf16>
    %cst_8 = arith.constant dense<0.000000e+00> : vector<8x8xf32>
    %18 = tpu.matmul %13, %15, %cst_8 {dimension_numbers = #tpu.dot_dimension_numbers<[1], [1], [0], [0], [0, 0, 1, 0], [], []>} : vector<8x8xbf16>, vector<8x8xbf16>, vector<8x8xf32> -> vector<8x8xf32>
    %19 = arith.addf %18, %2 : vector<8x8xf32>
    %cst_9 = arith.constant dense<0xFF800000> : vector<8xf32>
    %20 = vector.multi_reduction <maximumf>, %19, %cst_9 [1] : vector<8x8xf32> to vector<8xf32>
    %21 = vector.shape_cast %20 : vector<8xf32> to vector<8x1xf32>
    %22 = vector.broadcast %21 : vector<8x1xf32> to vector<8x8xf32>
    %23 = arith.subf %19, %22 : vector<8x8xf32>
    %24 = math.exp %23 : vector<8x8xf32>
    %cst_10 = arith.constant dense<0.000000e+00> : vector<8xf32>
    %25 = vector.multi_reduction <add>, %24, %cst_10 [1] : vector<8x8xf32> to vector<8xf32>
    %26 = vector.shape_cast %25 : vector<8xf32> to vector<8x1xf32>
    %27 = tpu.reciprocal %26 : vector<8x1xf32> -> vector<8x1xf32>
    %28 = vector.broadcast %27 : vector<8x1xf32> to vector<8x8xf32>
    %29 = arith.mulf %24, %28 : vector<8x8xf32>
    %30 = arith.truncf %29 : vector<8x8xf32> to vector<8x8xbf16>
    %cst_11 = arith.constant dense<0.000000e+00> : vector<8x8xf32>
    %31 = tpu.matmul %30, %17, %cst_11 {dimension_numbers = #tpu.dot_dimension_numbers<[1], [0], [0], [1], [0, 0, 1, 1], [], []>} : vector<8x8xbf16>, vector<8x8xbf16>, vector<8x8xf32> -> vector<8x8xf32>
    %32 = arith.truncf %31 : vector<8x8xf32> to vector<8x8xbf16>
    %c0_12 = arith.constant 0 : index
    %c0_13 = arith.constant 0 : index
    %c0_14 = arith.constant 0 : index
    %33 = vector.load %arg4[%c0_12, %c0_13, %c0_14] : memref<1x8x32xbf16, #tpu.memory_space<vmem>>, vector<1x8x8xbf16>
    %34 = vector.shape_cast %33 : vector<1x8x8xbf16> to vector<8x8xbf16>
    %35 = vector.shape_cast %32 : vector<8x8xbf16> to vector<1x8x8xbf16>
    tpu.vector_store %arg4[%c0_12, %c0_13, %c0_14], %35 {strides = array<i32>} : memref<1x8x32xbf16, #tpu.memory_space<vmem>>, vector<1x8x8xbf16>,
    %36 = vector.extract_strided_slice %9 {offsets = [0, 8], sizes = [8, 8], strides = [1, 1]} : vector<8x32xf32> to vector<8x8xf32>
    %37 = arith.truncf %36 : vector<8x8xf32> to vector<8x8xbf16>
    %38 = vector.extract_strided_slice %10 {offsets = [0, 8], sizes = [8, 8], strides = [1, 1]} : vector<8x32xf32> to vector<8x8xf32>
    %39 = arith.truncf %38 : vector<8x8xf32> to vector<8x8xbf16>
    %40 = vector.extract_strided_slice %11 {offsets = [0, 8], sizes = [8, 8], strides = [1, 1]} : vector<8x32xf32> to vector<8x8xf32>
    %41 = arith.truncf %40 : vector<8x8xf32> to vector<8x8xbf16>
    %cst_15 = arith.constant dense<0.000000e+00> : vector<8x8xf32>
    %42 = tpu.matmul %37, %39, %cst_15 {dimension_numbers = #tpu.dot_dimension_numbers<[1], [1], [0], [0], [0, 0, 1, 0], [], []>} : vector<8x8xbf16>, vector<8x8xbf16>, vector<8x8xf32> -> vector<8x8xf32>
    %43 = arith.addf %42, %2 : vector<8x8xf32>
    %cst_16 = arith.constant dense<0xFF800000> : vector<8xf32>
    %44 = vector.multi_reduction <maximumf>, %43, %cst_16 [1] : vector<8x8xf32> to vector<8xf32>
    %45 = vector.shape_cast %44 : vector<8xf32> to vector<8x1xf32>
    %46 = vector.broadcast %45 : vector<8x1xf32> to vector<8x8xf32>
    %47 = arith.subf %43, %46 : vector<8x8xf32>
    %48 = math.exp %47 : vector<8x8xf32>
    %cst_17 = arith.constant dense<0.000000e+00> : vector<8xf32>
    %49 = vector.multi_reduction <add>, %48, %cst_17 [1] : vector<8x8xf32> to vector<8xf32>
    %50 = vector.shape_cast %49 : vector<8xf32> to vector<8x1xf32>
    %51 = tpu.reciprocal %50 : vector<8x1xf32> -> vector<8x1xf32>
    %52 = vector.broadcast %51 : vector<8x1xf32> to vector<8x8xf32>
    %53 = arith.mulf %48, %52 : vector<8x8xf32>
    %54 = arith.truncf %53 : vector<8x8xf32> to vector<8x8xbf16>
    %cst_18 = arith.constant dense<0.000000e+00> : vector<8x8xf32>
    %55 = tpu.matmul %54, %41, %cst_18 {dimension_numbers = #tpu.dot_dimension_numbers<[1], [0], [0], [1], [0, 0, 1, 1], [], []>} : vector<8x8xbf16>, vector<8x8xbf16>, vector<8x8xf32> -> vector<8x8xf32>
    %56 = arith.truncf %55 : vector<8x8xf32> to vector<8x8xbf16>
    %c0_19 = arith.constant 0 : index
    %c0_20 = arith.constant 0 : index
    %c8 = arith.constant 8 : index
    %57 = vector.load %arg4[%c0_19, %c0_20, %c8] : memref<1x8x32xbf16, #tpu.memory_space<vmem>>, vector<1x8x8xbf16>
    %58 = vector.shape_cast %57 : vector<1x8x8xbf16> to vector<8x8xbf16>
    %59 = vector.shape_cast %56 : vector<8x8xbf16> to vector<1x8x8xbf16>
    tpu.vector_store %arg4[%c0_19, %c0_20, %c8], %59 {strides = array<i32>} : memref<1x8x32xbf16, #tpu.memory_space<vmem>>, vector<1x8x8xbf16>,
    %60 = vector.extract_strided_slice %9 {offsets = [0, 16], sizes = [8, 8], strides = [1, 1]} : vector<8x32xf32> to vector<8x8xf32>
    %61 = arith.truncf %60 : vector<8x8xf32> to vector<8x8xbf16>
    %62 = vector.extract_strided_slice %10 {offsets = [0, 16], sizes = [8, 8], strides = [1, 1]} : vector<8x32xf32> to vector<8x8xf32>
    %63 = arith.truncf %62 : vector<8x8xf32> to vector<8x8xbf16>
    %64 = vector.extract_strided_slice %11 {offsets = [0, 16], sizes = [8, 8], strides = [1, 1]} : vector<8x32xf32> to vector<8x8xf32>
    %65 = arith.truncf %64 : vector<8x8xf32> to vector<8x8xbf16>
    %cst_21 = arith.constant dense<0.000000e+00> : vector<8x8xf32>
    %66 = tpu.matmul %61, %63, %cst_21 {dimension_numbers = #tpu.dot_dimension_numbers<[1], [1], [0], [0], [0, 0, 1, 0], [], []>} : vector<8x8xbf16>, vector<8x8xbf16>, vector<8x8xf32> -> vector<8x8xf32>
    %67 = arith.addf %66, %2 : vector<8x8xf32>
    %cst_22 = arith.constant dense<0xFF800000> : vector<8xf32>
    %68 = vector.multi_reduction <maximumf>, %67, %cst_22 [1] : vector<8x8xf32> to vector<8xf32>
    %69 = vector.shape_cast %68 : vector<8xf32> to vector<8x1xf32>
    %70 = vector.broadcast %69 : vector<8x1xf32> to vector<8x8xf32>
    %71 = arith.subf %67, %70 : vector<8x8xf32>
    %72 = math.exp %71 : vector<8x8xf32>
    %cst_23 = arith.constant dense<0.000000e+00> : vector<8xf32>
    %73 = vector.multi_reduction <add>, %72, %cst_23 [1] : vector<8x8xf32> to vector<8xf32>
    %74 = vector.shape_cast %73 : vector<8xf32> to vector<8x1xf32>
    %75 = tpu.reciprocal %74 : vector<8x1xf32> -> vector<8x1xf32>
    %76 = vector.broadcast %75 : vector<8x1xf32> to vector<8x8xf32>
    %77 = arith.mulf %72, %76 : vector<8x8xf32>
    %78 = arith.truncf %77 : vector<8x8xf32> to vector<8x8xbf16>
    %cst_24 = arith.constant dense<0.000000e+00> : vector<8x8xf32>
    %79 = tpu.matmul %78, %65, %cst_24 {dimension_numbers = #tpu.dot_dimension_numbers<[1], [0], [0], [1], [0, 0, 1, 1], [], []>} : vector<8x8xbf16>, vector<8x8xbf16>, vector<8x8xf32> -> vector<8x8xf32>
    %80 = arith.truncf %79 : vector<8x8xf32> to vector<8x8xbf16>
    %c0_25 = arith.constant 0 : index
    %c0_26 = arith.constant 0 : index
    %c16 = arith.constant 16 : index
    %81 = vector.load %arg4[%c0_25, %c0_26, %c16] : memref<1x8x32xbf16, #tpu.memory_space<vmem>>, vector<1x8x8xbf16>
    %82 = vector.shape_cast %81 : vector<1x8x8xbf16> to vector<8x8xbf16>
    %83 = vector.shape_cast %80 : vector<8x8xbf16> to vector<1x8x8xbf16>
    tpu.vector_store %arg4[%c0_25, %c0_26, %c16], %83 {strides = array<i32>} : memref<1x8x32xbf16, #tpu.memory_space<vmem>>, vector<1x8x8xbf16>,
    %84 = vector.extract_strided_slice %9 {offsets = [0, 24], sizes = [8, 8], strides = [1, 1]} : vector<8x32xf32> to vector<8x8xf32>
    %85 = arith.truncf %84 : vector<8x8xf32> to vector<8x8xbf16>
    %86 = vector.extract_strided_slice %10 {offsets = [0, 24], sizes = [8, 8], strides = [1, 1]} : vector<8x32xf32> to vector<8x8xf32>
    %87 = arith.truncf %86 : vector<8x8xf32> to vector<8x8xbf16>
    %88 = vector.extract_strided_slice %11 {offsets = [0, 24], sizes = [8, 8], strides = [1, 1]} : vector<8x32xf32> to vector<8x8xf32>
    %89 = arith.truncf %88 : vector<8x8xf32> to vector<8x8xbf16>
    %cst_27 = arith.constant dense<0.000000e+00> : vector<8x8xf32>
    %90 = tpu.matmul %85, %87, %cst_27 {dimension_numbers = #tpu.dot_dimension_numbers<[1], [1], [0], [0], [0, 0, 1, 0], [], []>} : vector<8x8xbf16>, vector<8x8xbf16>, vector<8x8xf32> -> vector<8x8xf32>
    %91 = arith.addf %90, %2 : vector<8x8xf32>
    %cst_28 = arith.constant dense<0xFF800000> : vector<8xf32>
    %92 = vector.multi_reduction <maximumf>, %91, %cst_28 [1] : vector<8x8xf32> to vector<8xf32>
    %93 = vector.shape_cast %92 : vector<8xf32> to vector<8x1xf32>
    %94 = vector.broadcast %93 : vector<8x1xf32> to vector<8x8xf32>
    %95 = arith.subf %91, %94 : vector<8x8xf32>
    %96 = math.exp %95 : vector<8x8xf32>
    %cst_29 = arith.constant dense<0.000000e+00> : vector<8xf32>
    %97 = vector.multi_reduction <add>, %96, %cst_29 [1] : vector<8x8xf32> to vector<8xf32>
    %98 = vector.shape_cast %97 : vector<8xf32> to vector<8x1xf32>
    %99 = tpu.reciprocal %98 : vector<8x1xf32> -> vector<8x1xf32>
    %100 = vector.broadcast %99 : vector<8x1xf32> to vector<8x8xf32>
    %101 = arith.mulf %96, %100 : vector<8x8xf32>
    %102 = arith.truncf %101 : vector<8x8xf32> to vector<8x8xbf16>
    %cst_30 = arith.constant dense<0.000000e+00> : vector<8x8xf32>
    %103 = tpu.matmul %102, %89, %cst_30 {dimension_numbers = #tpu.dot_dimension_numbers<[1], [0], [0], [1], [0, 0, 1, 1], [], []>} : vector<8x8xbf16>, vector<8x8xbf16>, vector<8x8xf32> -> vector<8x8xf32>
    %104 = arith.truncf %103 : vector<8x8xf32> to vector<8x8xbf16>
    %c0_31 = arith.constant 0 : index
    %c0_32 = arith.constant 0 : index
    %c24 = arith.constant 24 : index
    %105 = vector.load %arg4[%c0_31, %c0_32, %c24] : memref<1x8x32xbf16, #tpu.memory_space<vmem>>, vector<1x8x8xbf16>
    %106 = vector.shape_cast %105 : vector<1x8x8xbf16> to vector<8x8xbf16>
    %107 = vector.shape_cast %104 : vector<8x8xbf16> to vector<1x8x8xbf16>
    tpu.vector_store %arg4[%c0_31, %c0_32, %c24], %107 {strides = array<i32>} : memref<1x8x32xbf16, #tpu.memory_space<vmem>>, vector<1x8x8xbf16>,
    return
  }
  func.func @transform_0(%arg0: i32) -> (i32, i32, i32) {
    %c0_i32 = arith.constant 0 : i32
    %c0_i32_0 = arith.constant 0 : i32
    %c0_i32_1 = arith.constant 0 : i32
    return %arg0, %c0_i32, %c0_i32_0 : i32, i32, i32
  }
  func.func @transform_1(%arg0: i32) -> (i32, i32) {
    %c0_i32 = arith.constant 0 : i32
    %c0_i32_0 = arith.constant 0 : i32
    %c0_i32_1 = arith.constant 0 : i32
    return %c0_i32, %c0_i32_0 : i32, i32
  }
  func.func @transform_2(%arg0: i32) -> (i32, i32, i32) {
    %c0_i32 = arith.constant 0 : i32
    %c0_i32_0 = arith.constant 0 : i32
    %c0_i32_1 = arith.constant 0 : i32
    %c0_i32_2 = arith.constant 0 : i32
    return %c0_i32, %c0_i32_0, %c0_i32_1 : i32, i32, i32
  }
  func.func @transform_3(%arg0: i32) -> (i32, i32, i32) {
    %c0_i32 = arith.constant 0 : i32
    %c0_i32_0 = arith.constant 0 : i32
    %c0_i32_1 = arith.constant 0 : i32
    return %arg0, %c0_i32, %c0_i32_0 : i32, i32, i32
  }
}

module attributes {stable_mosaic.version = 11 : i64} {
  func.func @_proj_addnorm_kernel(%arg0: i32, %arg1: memref<16x32xbf16, #tpu.memory_space<vmem>>, %arg2: memref<16x32xbf16, #tpu.memory_space<vmem>>, %arg3: memref<32x32xbf16, #tpu.memory_space<vmem>>, %arg4: memref<1x32xf32, #tpu.memory_space<vmem>>, %arg5: memref<1x32xf32, #tpu.memory_space<vmem>>, %arg6: memref<1x32xf32, #tpu.memory_space<vmem>>, %arg7: memref<16x32xbf16, #tpu.memory_space<vmem>>) attributes {dimension_semantics = [#tpu.dimension_semantics<parallel>], iteration_bounds = array<i64: 1>, scalar_prefetch = 0 : i64, scratch_operands = 0 : i64, tpu.core_type = #tpu.core_type<tc>, window_params = [{transform_indices = @transform_0, window_bounds = array<i64: 16, 32>}, {transform_indices = @transform_1, window_bounds = array<i64: 16, 32>}, {pipeline_mode = #tpu.pipeline_mode<synchronous>, transform_indices = @transform_2, window_bounds = array<i64: 32, 32>}, {pipeline_mode = #tpu.pipeline_mode<synchronous>, transform_indices = @transform_3, window_bounds = array<i64: 1, 32>}, {pipeline_mode = #tpu.pipeline_mode<synchronous>, transform_indices = @transform_4, window_bounds = array<i64: 1, 32>}, {pipeline_mode = #tpu.pipeline_mode<synchronous>, transform_indices = @transform_5, window_bounds = array<i64: 1, 32>}, {transform_indices = @transform_6, window_bounds = array<i64: 16, 32>}]} {
    %c0 = arith.constant 0 : index
    %c0_0 = arith.constant 0 : index
    %0 = vector.load %arg1[%c0, %c0_0] : memref<16x32xbf16, #tpu.memory_space<vmem>>, vector<16x32xbf16>
    %c0_1 = arith.constant 0 : index
    %c0_2 = arith.constant 0 : index
    %1 = vector.load %arg3[%c0_1, %c0_2] : memref<32x32xbf16, #tpu.memory_space<vmem>>, vector<32x32xbf16>
    %cst = arith.constant dense<0.000000e+00> : vector<16x32xf32>
    %2 = tpu.matmul %0, %1, %cst {dimension_numbers = #tpu.dot_dimension_numbers<[1], [0], [0], [1], [0, 0, 1, 1], [], []>} : vector<16x32xbf16>, vector<32x32xbf16>, vector<16x32xf32> -> vector<16x32xf32>
    %c0_3 = arith.constant 0 : index
    %c0_4 = arith.constant 0 : index
    %3 = vector.load %arg4[%c0_3, %c0_4] : memref<1x32xf32, #tpu.memory_space<vmem>>, vector<1x32xf32>
    %4 = vector.broadcast %3 : vector<1x32xf32> to vector<16x32xf32>
    %5 = arith.addf %2, %4 : vector<16x32xf32>
    %c0_5 = arith.constant 0 : index
    %c0_6 = arith.constant 0 : index
    %6 = vector.load %arg2[%c0_5, %c0_6] : memref<16x32xbf16, #tpu.memory_space<vmem>>, vector<16x32xbf16>
    %7 = arith.extf %6 : vector<16x32xbf16> to vector<16x32xf32>
    %8 = arith.addf %7, %5 : vector<16x32xf32>
    %cst_7 = arith.constant dense<0.000000e+00> : vector<16xf32>
    %9 = vector.multi_reduction <add>, %8, %cst_7 [1] : vector<16x32xf32> to vector<16xf32>
    %10 = vector.shape_cast %9 : vector<16xf32> to vector<16x1xf32>
    %cst_8 = arith.constant 3.200000e+01 : f32
    %11 = vector.broadcast %cst_8 : f32 to vector<16x1xf32>
    %12 = arith.divf %10, %11 : vector<16x1xf32>
    %13 = vector.broadcast %12 : vector<16x1xf32> to vector<16x32xf32>
    %14 = arith.subf %8, %13 : vector<16x32xf32>
    %15 = arith.mulf %14, %14 : vector<16x32xf32>
    %cst_9 = arith.constant dense<0.000000e+00> : vector<16xf32>
    %16 = vector.multi_reduction <add>, %15, %cst_9 [1] : vector<16x32xf32> to vector<16xf32>
    %17 = vector.shape_cast %16 : vector<16xf32> to vector<16x1xf32>
    %cst_10 = arith.constant 3.200000e+01 : f32
    %18 = vector.broadcast %cst_10 : f32 to vector<16x1xf32>
    %19 = arith.divf %17, %18 : vector<16x1xf32>
    %20 = vector.broadcast %12 : vector<16x1xf32> to vector<16x32xf32>
    %21 = arith.subf %8, %20 : vector<16x32xf32>
    %cst_11 = arith.constant 9.99999997E-7 : f32
    %22 = vector.broadcast %cst_11 : f32 to vector<16x1xf32>
    %23 = arith.addf %19, %22 : vector<16x1xf32>
    %24 = math.rsqrt %23 : vector<16x1xf32>
    %25 = vector.broadcast %24 : vector<16x1xf32> to vector<16x32xf32>
    %26 = arith.mulf %21, %25 : vector<16x32xf32>
    %c0_12 = arith.constant 0 : index
    %c0_13 = arith.constant 0 : index
    %27 = vector.load %arg5[%c0_12, %c0_13] : memref<1x32xf32, #tpu.memory_space<vmem>>, vector<1x32xf32>
    %28 = vector.broadcast %27 : vector<1x32xf32> to vector<16x32xf32>
    %29 = arith.mulf %28, %26 : vector<16x32xf32>
    %c0_14 = arith.constant 0 : index
    %c0_15 = arith.constant 0 : index
    %30 = vector.load %arg6[%c0_14, %c0_15] : memref<1x32xf32, #tpu.memory_space<vmem>>, vector<1x32xf32>
    %31 = vector.broadcast %30 : vector<1x32xf32> to vector<16x32xf32>
    %32 = arith.addf %29, %31 : vector<16x32xf32>
    %33 = arith.truncf %32 : vector<16x32xf32> to vector<16x32xbf16>
    %c0_16 = arith.constant 0 : index
    %c0_17 = arith.constant 0 : index
    %34 = vector.load %arg7[%c0_16, %c0_17] : memref<16x32xbf16, #tpu.memory_space<vmem>>, vector<16x32xbf16>
    tpu.vector_store %arg7[%c0_16, %c0_17], %33 {strides = array<i32>} : memref<16x32xbf16, #tpu.memory_space<vmem>>, vector<16x32xbf16>,
    return
  }
  func.func @transform_0(%arg0: i32) -> (i32, i32) {
    %c0_i32 = arith.constant 0 : i32
    %c0_i32_0 = arith.constant 0 : i32
    return %arg0, %c0_i32 : i32, i32
  }
  func.func @transform_1(%arg0: i32) -> (i32, i32) {
    %c0_i32 = arith.constant 0 : i32
    %c0_i32_0 = arith.constant 0 : i32
    return %arg0, %c0_i32 : i32, i32
  }
  func.func @transform_2(%arg0: i32) -> (i32, i32) {
    %c0_i32 = arith.constant 0 : i32
    %c0_i32_0 = arith.constant 0 : i32
    %c0_i32_1 = arith.constant 0 : i32
    return %c0_i32, %c0_i32_0 : i32, i32
  }
  func.func @transform_3(%arg0: i32) -> (i32, i32) {
    %c0_i32 = arith.constant 0 : i32
    %c0_i32_0 = arith.constant 0 : i32
    %c0_i32_1 = arith.constant 0 : i32
    return %c0_i32, %c0_i32_0 : i32, i32
  }
  func.func @transform_4(%arg0: i32) -> (i32, i32) {
    %c0_i32 = arith.constant 0 : i32
    %c0_i32_0 = arith.constant 0 : i32
    %c0_i32_1 = arith.constant 0 : i32
    return %c0_i32, %c0_i32_0 : i32, i32
  }
  func.func @transform_5(%arg0: i32) -> (i32, i32) {
    %c0_i32 = arith.constant 0 : i32
    %c0_i32_0 = arith.constant 0 : i32
    %c0_i32_1 = arith.constant 0 : i32
    return %c0_i32, %c0_i32_0 : i32, i32
  }
  func.func @transform_6(%arg0: i32) -> (i32, i32) {
    %c0_i32 = arith.constant 0 : i32
    %c0_i32_0 = arith.constant 0 : i32
    return %arg0, %c0_i32 : i32, i32
  }
}

module attributes {stable_mosaic.version = 11 : i64} {
  func.func @_ffn_addnorm_kernel(%arg0: i32, %arg1: memref<16x32xbf16, #tpu.memory_space<vmem>>, %arg2: memref<32x64xbf16, #tpu.memory_space<vmem>>, %arg3: memref<1x64xf32, #tpu.memory_space<vmem>>, %arg4: memref<64x32xbf16, #tpu.memory_space<vmem>>, %arg5: memref<1x32xf32, #tpu.memory_space<vmem>>, %arg6: memref<1x32xf32, #tpu.memory_space<vmem>>, %arg7: memref<1x32xf32, #tpu.memory_space<vmem>>, %arg8: memref<16x32xbf16, #tpu.memory_space<vmem>>) attributes {dimension_semantics = [#tpu.dimension_semantics<parallel>], iteration_bounds = array<i64: 1>, scalar_prefetch = 0 : i64, scratch_operands = 0 : i64, tpu.core_type = #tpu.core_type<tc>, window_params = [{transform_indices = @transform_0, window_bounds = array<i64: 16, 32>}, {pipeline_mode = #tpu.pipeline_mode<synchronous>, transform_indices = @transform_1, window_bounds = array<i64: 32, 64>}, {pipeline_mode = #tpu.pipeline_mode<synchronous>, transform_indices = @transform_2, window_bounds = array<i64: 1, 64>}, {pipeline_mode = #tpu.pipeline_mode<synchronous>, transform_indices = @transform_3, window_bounds = array<i64: 64, 32>}, {pipeline_mode = #tpu.pipeline_mode<synchronous>, transform_indices = @transform_4, window_bounds = array<i64: 1, 32>}, {pipeline_mode = #tpu.pipeline_mode<synchronous>, transform_indices = @transform_5, window_bounds = array<i64: 1, 32>}, {pipeline_mode = #tpu.pipeline_mode<synchronous>, transform_indices = @transform_6, window_bounds = array<i64: 1, 32>}, {transform_indices = @transform_7, window_bounds = array<i64: 16, 32>}]} {
    %c0 = arith.constant 0 : index
    %c0_0 = arith.constant 0 : index
    %0 = vector.load %arg1[%c0, %c0_0] : memref<16x32xbf16, #tpu.memory_space<vmem>>, vector<16x32xbf16>
    %c0_1 = arith.constant 0 : index
    %c0_2 = arith.constant 0 : index
    %1 = vector.load %arg2[%c0_1, %c0_2] : memref<32x64xbf16, #tpu.memory_space<vmem>>, vector<32x64xbf16>
    %cst = arith.constant dense<0.000000e+00> : vector<16x64xf32>
    %2 = tpu.matmul %0, %1, %cst {dimension_numbers = #tpu.dot_dimension_numbers<[1], [0], [0], [1], [0, 0, 1, 1], [], []>} : vector<16x32xbf16>, vector<32x64xbf16>, vector<16x64xf32> -> vector<16x64xf32>
    %c0_3 = arith.constant 0 : index
    %c0_4 = arith.constant 0 : index
    %3 = vector.load %arg3[%c0_3, %c0_4] : memref<1x64xf32, #tpu.memory_space<vmem>>, vector<1x64xf32>
    %4 = vector.broadcast %3 : vector<1x64xf32> to vector<16x64xf32>
    %5 = arith.addf %2, %4 : vector<16x64xf32>
    %cst_5 = arith.constant 0.000000e+00 : f32
    %6 = vector.broadcast %cst_5 : f32 to vector<16x64xf32>
    %7 = arith.maximumf %5, %6 : vector<16x64xf32>
    %8 = arith.truncf %7 : vector<16x64xf32> to vector<16x64xbf16>
    %c0_6 = arith.constant 0 : index
    %c0_7 = arith.constant 0 : index
    %9 = vector.load %arg4[%c0_6, %c0_7] : memref<64x32xbf16, #tpu.memory_space<vmem>>, vector<64x32xbf16>
    %cst_8 = arith.constant dense<0.000000e+00> : vector<16x32xf32>
    %10 = tpu.matmul %8, %9, %cst_8 {dimension_numbers = #tpu.dot_dimension_numbers<[1], [0], [0], [1], [0, 0, 1, 1], [], []>} : vector<16x64xbf16>, vector<64x32xbf16>, vector<16x32xf32> -> vector<16x32xf32>
    %c0_9 = arith.constant 0 : index
    %c0_10 = arith.constant 0 : index
    %11 = vector.load %arg5[%c0_9, %c0_10] : memref<1x32xf32, #tpu.memory_space<vmem>>, vector<1x32xf32>
    %12 = vector.broadcast %11 : vector<1x32xf32> to vector<16x32xf32>
    %13 = arith.addf %10, %12 : vector<16x32xf32>
    %14 = arith.extf %0 : vector<16x32xbf16> to vector<16x32xf32>
    %15 = arith.addf %14, %13 : vector<16x32xf32>
    %cst_11 = arith.constant dense<0.000000e+00> : vector<16xf32>
    %16 = vector.multi_reduction <add>, %15, %cst_11 [1] : vector<16x32xf32> to vector<16xf32>
    %17 = vector.shape_cast %16 : vector<16xf32> to vector<16x1xf32>
    %cst_12 = arith.constant 3.200000e+01 : f32
    %18 = vector.broadcast %cst_12 : f32 to vector<16x1xf32>
    %19 = arith.divf %17, %18 : vector<16x1xf32>
    %20 = vector.broadcast %19 : vector<16x1xf32> to vector<16x32xf32>
    %21 = arith.subf %15, %20 : vector<16x32xf32>
    %22 = arith.mulf %21, %21 : vector<16x32xf32>
    %cst_13 = arith.constant dense<0.000000e+00> : vector<16xf32>
    %23 = vector.multi_reduction <add>, %22, %cst_13 [1] : vector<16x32xf32> to vector<16xf32>
    %24 = vector.shape_cast %23 : vector<16xf32> to vector<16x1xf32>
    %cst_14 = arith.constant 3.200000e+01 : f32
    %25 = vector.broadcast %cst_14 : f32 to vector<16x1xf32>
    %26 = arith.divf %24, %25 : vector<16x1xf32>
    %27 = vector.broadcast %19 : vector<16x1xf32> to vector<16x32xf32>
    %28 = arith.subf %15, %27 : vector<16x32xf32>
    %cst_15 = arith.constant 9.99999997E-7 : f32
    %29 = vector.broadcast %cst_15 : f32 to vector<16x1xf32>
    %30 = arith.addf %26, %29 : vector<16x1xf32>
    %31 = math.rsqrt %30 : vector<16x1xf32>
    %32 = vector.broadcast %31 : vector<16x1xf32> to vector<16x32xf32>
    %33 = arith.mulf %28, %32 : vector<16x32xf32>
    %c0_16 = arith.constant 0 : index
    %c0_17 = arith.constant 0 : index
    %34 = vector.load %arg6[%c0_16, %c0_17] : memref<1x32xf32, #tpu.memory_space<vmem>>, vector<1x32xf32>
    %35 = vector.broadcast %34 : vector<1x32xf32> to vector<16x32xf32>
    %36 = arith.mulf %35, %33 : vector<16x32xf32>
    %c0_18 = arith.constant 0 : index
    %c0_19 = arith.constant 0 : index
    %37 = vector.load %arg7[%c0_18, %c0_19] : memref<1x32xf32, #tpu.memory_space<vmem>>, vector<1x32xf32>
    %38 = vector.broadcast %37 : vector<1x32xf32> to vector<16x32xf32>
    %39 = arith.addf %36, %38 : vector<16x32xf32>
    %40 = arith.truncf %39 : vector<16x32xf32> to vector<16x32xbf16>
    %c0_20 = arith.constant 0 : index
    %c0_21 = arith.constant 0 : index
    %41 = vector.load %arg8[%c0_20, %c0_21] : memref<16x32xbf16, #tpu.memory_space<vmem>>, vector<16x32xbf16>
    tpu.vector_store %arg8[%c0_20, %c0_21], %40 {strides = array<i32>} : memref<16x32xbf16, #tpu.memory_space<vmem>>, vector<16x32xbf16>,
    return
  }
  func.func @transform_0(%arg0: i32) -> (i32, i32) {
    %c0_i32 = arith.constant 0 : i32
    %c0_i32_0 = arith.constant 0 : i32
    return %arg0, %c0_i32 : i32, i32
  }
  func.func @transform_1(%arg0: i32) -> (i32, i32) {
    %c0_i32 = arith.constant 0 : i32
    %c0_i32_0 = arith.constant 0 : i32
    %c0_i32_1 = arith.constant 0 : i32
    return %c0_i32, %c0_i32_0 : i32, i32
  }
  func.func @transform_2(%arg0: i32) -> (i32, i32) {
    %c0_i32 = arith.constant 0 : i32
    %c0_i32_0 = arith.constant 0 : i32
    %c0_i32_1 = arith.constant 0 : i32
    return %c0_i32, %c0_i32_0 : i32, i32
  }
  func.func @transform_3(%arg0: i32) -> (i32, i32) {
    %c0_i32 = arith.constant 0 : i32
    %c0_i32_0 = arith.constant 0 : i32
    %c0_i32_1 = arith.constant 0 : i32
    return %c0_i32, %c0_i32_0 : i32, i32
  }
  func.func @transform_4(%arg0: i32) -> (i32, i32) {
    %c0_i32 = arith.constant 0 : i32
    %c0_i32_0 = arith.constant 0 : i32
    %c0_i32_1 = arith.constant 0 : i32
    return %c0_i32, %c0_i32_0 : i32, i32
  }
  func.func @transform_5(%arg0: i32) -> (i32, i32) {
    %c0_i32 = arith.constant 0 : i32
    %c0_i32_0 = arith.constant 0 : i32
    %c0_i32_1 = arith.constant 0 : i32
    return %c0_i32, %c0_i32_0 : i32, i32
  }
  func.func @transform_6(%arg0: i32) -> (i32, i32) {
    %c0_i32 = arith.constant 0 : i32
    %c0_i32_0 = arith.constant 0 : i32
    %c0_i32_1 = arith.constant 0 : i32
    return %c0_i32, %c0_i32_0 : i32, i32
  }
  func.func @transform_7(%arg0: i32) -> (i32, i32) {
    %c0_i32 = arith.constant 0 : i32
    %c0_i32_0 = arith.constant 0 : i32
    return %arg0, %c0_i32 : i32, i32
  }
}

</mosaic_0001>

<llo_original>
// kernel: tpu_custom_call.1
$region0: #{tpu_custom_call.1}
  #allocation0 [shape = 'u32[]', space=smem, size = 0x4, offset = 0x4, fixed_abs, tag = 'smem constant byte address 0x4 - core index']
  #allocation1 [shape = 'u32[144,128]{1,0:T(1,128)}', space=vmem, size = 0x12000, scoped, tag = 'internal scratch']
  %s0 = inlined_call_operand.hbm [shape: f32[8,128], index: 0, kind: input, shape index: {}]
  %s1 = inlined_call_operand.hbm [shape: f32[8,128], index: 1, kind: output, shape index: {}]
  %s2 = sld [smem:[#allocation0]]
  $region18: #{tpu_custom_call.1} parent=0
    _
  %s4 = ssub.s32 1, %s2
  %s5 = scalar_select 0, %s4, %s2
  $region1: #{tpu_custom_call.1} parent=0
    #allocation2 [shape = 'u8[4096]{0}', space=vmem, size = 0x1000, scoped, tag = 'input window, operand 0, single buffered']
    #allocation3 [shape = 's32[1]{0}', space=sflag, size = 0x4, scoped, tag = 'scoped memory for tpu_custom_call.1']
    #allocation4 [shape = 's32[1]{0}', space=sflag, size = 0x4, scoped, tag = 'scoped memory for tpu_custom_call.1']
    #allocation5 [shape = 'u8[4096]{0}', space=vmem, size = 0x1000, scoped, tag = 'output window, operand 0, single buffered']
    %6 = vsyncpa [#allocation3], 0
    %7 = vsyncpa [#allocation4], 0
    // Predicated region
    $region2: #{tpu_custom_call.1} parent=1 // pred_check
      _
    $region3: #{tpu_custom_call.1} parent=1 // pred_check_branch
      %9 = sbr.rel (0) target = $region5
    $region4: #{tpu_custom_call.1} parent=1 // pred_region
      %s11 = ssub.s32 128, 128
      %12 = vsyncadd [#allocation3], %s11
      %s14 = sshll.u32 [#allocation2], 4
      %s15 = int_to_ptr.vmem [resolvable:$true] %s14
      %17 = dma.hbm_to_vmem [thread:$0]  %s0, 128, %s15, [#allocation3]
    $region5: #{tpu_custom_call.1} parent=1 // pred_fallthru
      _
    // Predicated region
    $region6: #{tpu_custom_call.1} parent=1 // pred_check
      _
    $region7: #{tpu_custom_call.1} parent=1 // pred_check_branch
      %19 = sbr.rel (0) target = $region9
    $region8: #{tpu_custom_call.1} parent=1 // pred_region
      %20 = dma.done [#allocation3], 128
    $region9: #{tpu_custom_call.1} parent=1 // pred_fallthru
      _
    %v21 = vld [vmem:[#allocation2] sm:$0xff]
    %v22 = vadd.f32 %v21, 1.0
    %23 = vst [vmem:[#allocation5] sm:$0xff] %v22
    // Predicated region
    $region10: #{tpu_custom_call.1} parent=1 // pred_check
      _
    $region11: #{tpu_custom_call.1} parent=1 // pred_check_branch
      %25 = sbr.rel (0) target = $region13
    $region12: #{tpu_custom_call.1} parent=1 // pred_region
      %s27 = ssub.s32 128, 128
      %28 = vsyncadd [#allocation4], %s27
      %s30 = sshll.u32 [#allocation5], 4
      %s31 = int_to_ptr.vmem [resolvable:$true] %s30
      %33 = dma.vmem_to_hbm [thread:$0]  %s31, 128, %s1, [#allocation4]
    $region13: #{tpu_custom_call.1} parent=1 // pred_fallthru
      _
    // Predicated region
    $region14: #{tpu_custom_call.1} parent=1 // pred_check
      _
    $region15: #{tpu_custom_call.1} parent=1 // pred_check_branch
      %35 = sbr.rel (0) target = $region17
    $region16: #{tpu_custom_call.1} parent=1 // pred_region
      %36 = dma.done [#allocation4], 128
    $region17: #{tpu_custom_call.1} parent=1 // pred_fallthru
      _
    %37 = vsyncpa [#allocation3], 1
    %38 = vsyncpa [#allocation4], 1

// kernel: decoder_forward.11
$region0: #{decoder_forward.11}
  #allocation0 [shape = 'u32[]', space=smem, size = 0x4, offset = 0x4, fixed_abs, tag = 'smem constant byte address 0x4 - core index']
  #allocation1 [shape = 'u32[144,128]{1,0:T(1,128)}', space=vmem, size = 0x12000, scoped, tag = 'internal scratch']
  %s0 = inlined_call_operand.vmem [shape: f32[2,8,32], index: 0, kind: input, shape index: {}]
  %s1 = inlined_call_operand.vmem [shape: f32[1,8,32], index: 1, kind: input, shape index: {}]
  %s2 = inlined_call_operand.vmem [shape: bf16[2,8,32], index: 2, kind: output, shape index: {}]
  %s3 = sld [smem:[#allocation0]]
  $region41: #{decoder_forward.11} parent=0
    _
  %s5 = ssub.s32 1, %s3
  %s6 = scalar_select 0, %s5, %s3
  loop: start=0, step=1, limit=4
  $region2: #{decoder_forward.11} parent=0 // loop_pre_header
    _
  $region3: #{decoder_forward.11} parent=0 // loop_header
    %s8 = sphi 0, %s12
    %p9 = scmp.ge.s32.totalorder %s8, 4
    %s18 = sphi 0, %s20
    %s21 = sphi 0, %s18
    %s22 = sphi 0, %s21
    %s38 = sphi 0, %s22
    %s42 = sphi 0, %s42
    %s44 = sphi 0, %s42
    %s45 = sphi 0, %s44
    %s59 = sphi 0, %s45
    %s65 = sphi 0, %s67
    %s68 = sphi 0, %s65
    %s69 = sphi 0, %s68
    %s85 = sphi 0, %s69
  $region4: #{decoder_forward.11} parent=0 // loop_header_branch
    %11 = sbr.rel (%p9) target = $region8
  $region5: #{decoder_forward.11} parent=0 // loop_body
    %s13 = ssub.s32 %s8, 1
    %s14 = ssub.s32 %s8, 2
    %s15 = sadd.s32 %s8, 1
    %s16 = ssub.s32 %s8, %s15
    %p17 = scmp.eq.s32.totalorder %s16, 0
    %s19 = sadd.s32 %s18, 1
    %s20 = scalar_select %p17, %s18, %s19
    %p23 = pneg %p17
    %p24 = scmp.eq.s32.totalorder %s8, 1
    %p25 = por %p23, %p24
    %p26 = scmp.ne.s32.totalorder %s18, %s21
    %p27 = scmp.eq.s32.totalorder %s8, 0
    %p28 = por %p26, %p27
    %p29 = scmp.ne.s32.totalorder %s18, %s21
    %p30 = scmp.eq.s32.totalorder %s13, 1
    %p31 = por %p29, %p30
    %p32 = scmp.ne.s32.totalorder %s21, %s22
    %p33 = scmp.eq.s32.totalorder %s13, 0
    %p34 = por %p32, %p33
    %p35 = scmp.ne.s32.totalorder %s21, %s22
    %p36 = scmp.eq.s32.totalorder %s14, 1
    %p37 = por %p35, %p36
    %p39 = scmp.ne.s32.totalorder %s22, %s38
    %p40 = scmp.eq.s32.totalorder %s14, 0
    %p41 = por %p39, %p40
    %s43 = sadd.s32 %s42, 1
    %p46 = scmp.eq.s32.totalorder %s8, 1
    %p47 = scmp.ne.s32.totalorder %s42, %s44
    %p48 = scmp.eq.s32.totalorder %s8, 0
    %p49 = por %p47, %p48
    %p50 = scmp.ne.s32.totalorder %s42, %s44
    %p51 = scmp.eq.s32.totalorder %s13, 1
    %p52 = por %p50, %p51
    %p53 = scmp.ne.s32.totalorder %s44, %s45
    %p54 = scmp.eq.s32.totalorder %s13, 0
    %p55 = por %p53, %p54
    %p56 = scmp.ne.s32.totalorder %s44, %s45
    %p57 = scmp.eq.s32.totalorder %s14, 1
    %p58 = por %p56, %p57
    %p60 = scmp.ne.s32.totalorder %s45, %s59
    %p61 = scmp.eq.s32.totalorder %s14, 0
    %p62 = por %p60, %p61
    %s63 = ssub.s32 %s8, %s15
    %p64 = scmp.eq.s32.totalorder %s63, 0
    %s66 = sadd.s32 %s65, 1
    %s67 = scalar_select %p64, %s65, %s66
    %p70 = pneg %p64
    %p71 = scmp.eq.s32.totalorder %s8, 1
    %p72 = por %p70, %p71
    %p73 = scmp.ne.s32.totalorder %s65, %s68
    %p74 = scmp.eq.s32.totalorder %s8, 0
    %p75 = por %p73, %p74
    %p76 = scmp.ne.s32.totalorder %s65, %s68
    %p77 = scmp.eq.s32.totalorder %s13, 1
    %p78 = por %p76, %p77
    %p79 = scmp.ne.s32.totalorder %s68, %s69
    %p80 = scmp.eq.s32.totalorder %s13, 0
    %p81 = por %p79, %p80
    %p82 = scmp.ne.s32.totalorder %s68, %s69
    %p83 = scmp.eq.s32.totalorder %s14, 1
    %p84 = por %p82, %p83
    %p86 = scmp.ne.s32.totalorder %s69, %s85
    %p87 = scmp.eq.s32.totalorder %s14, 0
    %p88 = por %p86, %p87
    %p89 = scmp.le.s32.totalorder 1, %s8
    %p90 = scmp.lt.s32.totalorder %s8, 3
    %p91 = pnand %p89, %p90
    %p92 = pneg %p91
    // Predicated region
    $region9: #{decoder_forward.11} parent=5 // pred_check
      _
    $region10: #{decoder_forward.11} parent=5 // pred_check_branch
      %94 = sbr.rel (%p91) target = $region12
    $region11: #{decoder_forward.11} parent=5 // pred_region
      %s95 = ssub.s32 %s8, 1
      // Predicated region
      $region13: #{decoder_forward.11} parent=11 // pred_check
        %p96 = pneg %p55
      $region14: #{decoder_forward.11} parent=11 // pred_check_branch
        %98 = sbr.rel (%p96) target = $region16
      $region15: #{decoder_forward.11} parent=11 // pred_region
        _
      $region16: #{decoder_forward.11} parent=11 // pred_fallthru
        _
    $region12: #{decoder_forward.11} parent=5 // pred_fallthru
      _
    %p99 = scmp.lt.s32.totalorder %s8, 2
    // Predicated region
    $region17: #{decoder_forward.11} parent=5 // pred_check
      %p100 = pneg %p99
    $region18: #{decoder_forward.11} parent=5 // pred_check_branch
      %102 = sbr.rel (%p100) target = $region20
    $region19: #{decoder_forward.11} parent=5 // pred_region
      // Predicated region
      $region21: #{decoder_forward.11} parent=19 // pred_check
        %p103 = pneg %p28
      $region22: #{decoder_forward.11} parent=19 // pred_check_branch
        %105 = sbr.rel (%p103) target = $region24
      $region23: #{decoder_forward.11} parent=19 // pred_region
        %p106 = scmp.lt.s32.totalorder %s8, 1
        %s107 = scalar_select %p106, %s8, 1
        %s108 = smul.addr %s107, 8
        %s109 = scalar_lea.vmem %s0, %s108
      $region24: #{decoder_forward.11} parent=19 // pred_fallthru
        _
    $region20: #{decoder_forward.11} parent=5 // pred_fallthru
      _
    %p110 = scmp.le.s32.totalorder 1, %s8
    %p111 = scmp.lt.s32.totalorder %s8, 3
    %p112 = pnand %p110, %p111
    %p113 = pneg %p112
    // Predicated region
    $region25: #{decoder_forward.11} parent=5 // pred_check
      _
    $region26: #{decoder_forward.11} parent=5 // pred_check_branch
      %115 = sbr.rel (%p112) target = $region28
    $region27: #{decoder_forward.11} parent=5 // pred_region
      %s116 = ssub.s32 %s8, 1
      %p117 = scmp.lt.s32.totalorder %s13, 1
      %s118 = scalar_select %p117, %s13, 1
      %s119 = smul.addr %s118, 8
      %s120 = scalar_lea.vmem %s0, %s119
      %p121 = pneg %p34
      %p122 = pneg %p31
      %p123 = pneg %p55
      %p124 = pneg %p52
      %p125 = pneg %p81
      %p126 = pneg %p78
      %p127 = scmp.lt.s32.totalorder %s13, 1
      %s128 = scalar_select %p127, %s13, 1
      %s129 = smul.addr %s128, 4
      %s130 = scalar_lea.vmem %s2, %s129
      %p131 = scmp.lt.s32.totalorder %s13, 1
      %s132 = scalar_select %p131, %s13, 1
      %s133 = smul.addr %s132, 8
      %s134 = scalar_lea.vmem %s0, %s133
      %p135 = scmp.lt.s32.totalorder %s13, 1
      %s136 = scalar_select %p135, %s13, 1
      %s137 = smul.addr %s136, 4
      %s138 = scalar_lea.vmem %s2, %s137
      %v139 = vld [vmem:[%s134] sm:$0xff]
      %v140 = vmul.f32 %v139, 5.656854
      %v141 = vld [vmem:[%s1] sm:$0xff]
      %v142 = vadd.f32 %v140, %v141
      %v143 = vpack.c.bf16 %v142, %v142
      %vm144 = vcmask 257024
      %145 = vst.msk [vmem:[%s138] sm:$0xf] %vm144, %v143
      %p146 = scmp.lt.s32.totalorder %s13, 1
      %s147 = scalar_select %p146, %s13, 1
      %s148 = smul.addr %s147, 4
      %s149 = scalar_lea.vmem %s2, %s148
      // Predicated region
      $region29: #{decoder_forward.11} parent=27 // pred_check
        %p150 = pneg %p78
      $region30: #{decoder_forward.11} parent=27 // pred_check_branch
        %152 = sbr.rel (%p150) target = $region32
      $region31: #{decoder_forward.11} parent=27 // pred_region
        _
      $region32: #{decoder_forward.11} parent=27 // pred_fallthru
        _
    $region28: #{decoder_forward.11} parent=5 // pred_fallthru
      _
    %p153 = scmp.le.s32.totalorder 2, %s8
    // Predicated region
    $region33: #{decoder_forward.11} parent=5 // pred_check
      %p154 = pneg %p153
    $region34: #{decoder_forward.11} parent=5 // pred_check_branch
      %156 = sbr.rel (%p154) target = $region36
    $region35: #{decoder_forward.11} parent=5 // pred_region
      %s157 = ssub.s32 %s8, 2
      // Predicated region
      $region37: #{decoder_forward.11} parent=35 // pred_check
        %p158 = pneg %p84
      $region38: #{decoder_forward.11} parent=35 // pred_check_branch
        %160 = sbr.rel (%p158) target = $region40
      $region39: #{decoder_forward.11} parent=35 // pred_region
        %p161 = scmp.lt.s32.totalorder %s14, 1
        %s162 = scalar_select %p161, %s14, 1
        %s163 = smul.addr %s162, 4
        %s164 = scalar_lea.vmem %s2, %s163
      $region40: #{decoder_forward.11} parent=35 // pred_fallthru
        _
    $region36: #{decoder_forward.11} parent=5 // pred_fallthru
      _
  $region6: #{decoder_forward.11} parent=0 // loop_footer
    %s12 = sadd.s32 1, %s8
  $region7: #{decoder_forward.11} parent=0 // loop_footer_branch
    %7 = sbr.rel target = $region3
  $region8: #{decoder_forward.11} parent=0 // loop_exit
    _

// kernel: decoder_forward.13
$region0: #{decoder_forward.13}
  #allocation0 [shape = 'u32[]', space=smem, size = 0x4, offset = 0x4, fixed_abs, tag = 'smem constant byte address 0x4 - core index']
  #allocation1 [shape = 'u32[144,128]{1,0:T(1,128)}', space=vmem, size = 0x12000, scoped, tag = 'internal scratch']
  %s0 = inlined_call_operand.vmem [shape: bf16[16,32], index: 0, kind: input, shape index: {}]
  %s1 = inlined_call_operand.vmem [shape: bf16[16,32], index: 1, kind: input, shape index: {}]
  %s2 = inlined_call_operand.vmem [shape: bf16[32,32], index: 2, kind: input, shape index: {}]
  %s3 = inlined_call_operand.vmem [shape: f32[1,32], index: 3, kind: input, shape index: {}]
  %s4 = inlined_call_operand.vmem [shape: f32[1,32], index: 4, kind: input, shape index: {}]
  %s5 = inlined_call_operand.vmem [shape: f32[1,32], index: 5, kind: input, shape index: {}]
  %s6 = inlined_call_operand.vmem [shape: bf16[16,32], index: 6, kind: output, shape index: {}]
  %s7 = sld [smem:[#allocation0]]
  $region34: #{decoder_forward.13} parent=0
    _
  %s9 = ssub.s32 1, %s7
  %s10 = scalar_select 0, %s9, %s7
  // Predicated region
  $region2: #{decoder_forward.13} parent=0 // pred_check
    _
  $region3: #{decoder_forward.13} parent=0 // pred_check_branch
    %12 = sbr.rel (0) target = $region5
  $region4: #{decoder_forward.13} parent=0 // pred_region
    _
  $region5: #{decoder_forward.13} parent=0 // pred_fallthru
    _
  // Predicated region
  $region6: #{decoder_forward.13} parent=0 // pred_check
    _
  $region7: #{decoder_forward.13} parent=0 // pred_check_branch
    %14 = sbr.rel (0) target = $region9
  $region8: #{decoder_forward.13} parent=0 // pred_region
    _
  $region9: #{decoder_forward.13} parent=0 // pred_fallthru
    _
  // Predicated region
  $region10: #{decoder_forward.13} parent=0 // pred_check
    _
  $region11: #{decoder_forward.13} parent=0 // pred_check_branch
    %16 = sbr.rel (0) target = $region13
  $region12: #{decoder_forward.13} parent=0 // pred_region
    _
  $region13: #{decoder_forward.13} parent=0 // pred_fallthru
    _
  // Predicated region
  $region14: #{decoder_forward.13} parent=0 // pred_check
    _
  $region15: #{decoder_forward.13} parent=0 // pred_check_branch
    %18 = sbr.rel (0) target = $region17
  $region16: #{decoder_forward.13} parent=0 // pred_region
    _
  $region17: #{decoder_forward.13} parent=0 // pred_fallthru
    _
  // Predicated region
  $region18: #{decoder_forward.13} parent=0 // pred_check
    _
  $region19: #{decoder_forward.13} parent=0 // pred_check_branch
    %20 = sbr.rel (0) target = $region21
  $region20: #{decoder_forward.13} parent=0 // pred_region
    _
  $region21: #{decoder_forward.13} parent=0 // pred_fallthru
    _
  // Predicated region
  $region22: #{decoder_forward.13} parent=0 // pred_check
    _
  $region23: #{decoder_forward.13} parent=0 // pred_check_branch
    %22 = sbr.rel (0) target = $region25
  $region24: #{decoder_forward.13} parent=0 // pred_region
    _
  $region25: #{decoder_forward.13} parent=0 // pred_fallthru
    _
  %v24 = vld [vmem:[%s0] sm:$0xf]
  %v25 = vld [vmem:[%s0 + $0x4] sm:$0xf]
  %v26 = vld [vmem:[%s2] sm:$0xf]
  %v27 = vld [vmem:[%s2 + $0x4] sm:$0xf]
  %v28 = vld [vmem:[%s2 + $0x8] sm:$0xf]
  %v29 = vld [vmem:[%s2 + $0xc] sm:$0xf]
  %v30 = vld [vmem:[%s3] sm:$0x1]
  %v32 = vlaneseq
  %v33 = vshrl.u32 %v32, 7
  %v34 = vsub.s32 0, %v33
  %v35 = vrot.slane %v30, %v34
  %v39 = vunpack.c.l.b16 %v24
  %v40 = vunpack.c.l.b16 %v25
  %v41 = vpack.c.b16 %v40, %v39
  %v46 = vunpack.c.l.b16 %v26
  %v47 = vunpack.c.l.b16 %v27
  %v48 = vunpack.c.l.b16 %v28
  %v49 = vunpack.c.l.b16 %v29
  %v50 = vpack.c.b16 %v47, %v46
  %v51 = vpack.c.b16 %v49, %v48
  %vm54 = vcmask 261120
  %v56 = vsel %vm54, %v41, 0
  %58 = vmatprep.subr.bf16.mxu0 0
  %59 = vmatpush1.bf16.msra.mxu0 %v50
  %60 = vmatprep.subr.bf16.mxu0 0
  %61 = vmatpush1.bf16.msra.mxu0 %v51
  %62 = vmatprep.subr.bf16.mxu0 0
  %63 = vmatpush1.bf16.msra.mxu0 0
  %64 = vmatprep.subr.bf16.mxu0 0
  %65 = vmatpush1.bf16.msra.mxu0 0
  %66 = vmatprep.subr.bf16.mxu0 0
  %67 = vmatpush1.bf16.msra.mxu0 0
  %68 = vmatprep.subr.bf16.mxu0 0
  %69 = vmatpush1.bf16.msra.mxu0 0
  %70 = vmatprep.subr.bf16.mxu0 0
  %71 = vmatpush1.bf16.msra.mxu0 0
  %72 = vmatprep.subr.bf16.mxu0 0
  %73 = vmatpush1.bf16.msra.mxu0 0
  %74 = vmatprep.subr.bf16.mxu0 0
  %75 = vmatpush1.bf16.msra.mxu0 0
  %76 = vmatprep.subr.bf16.mxu0 0
  %77 = vmatpush1.bf16.msra.mxu0 0
  %78 = vmatprep.subr.bf16.mxu0 0
  %79 = vmatpush1.bf16.msra.mxu0 0
  %80 = vmatprep.subr.bf16.mxu0 0
  %81 = vmatpush1.bf16.msra.mxu0 0
  %82 = vmatprep.subr.bf16.mxu0 0
  %83 = vmatpush1.bf16.msra.mxu0 0
  %84 = vmatprep.subr.bf16.mxu0 0
  %85 = vmatpush1.bf16.msra.mxu0 0
  %86 = vmatprep.subr.bf16.mxu0 0
  %87 = vmatpush1.bf16.msra.mxu0 0
  %88 = vmatprep.subr.bf16.mxu0 0
  %89 = vmatpush1.bf16.msra.mxu0 0
  %90 = vmatprep.mubr.bf16.mxu0 0
  %91 = vmatmul.mubr.bf16.gmra.mrb[0].mxu0 %v56
  %v92 = vpop.f32.mrb[0].mxu0
  %v93 = vadd.f32 %v35, %v92
  %v94 = vpop.f32.mrb[0].mxu0
  %v95 = vpop.f32.mrb[0].mxu0
  %v96 = vadd.f32 %v35, %v95
  %v97 = vpop.f32.mrb[0].mxu0
  %98 = vdwg.mxu0
  %v99 = vld [vmem:[%s1] sm:$0xf]
  %v100 = vld [vmem:[%s1 + $0x4] sm:$0xf]
  %v101 = vunpack.c.l.bf16 %v99
  %v102 = vunpack.c.l.bf16 %v100
  %v103 = vadd.f32 %v101, %v93
  %v104 = vadd.f32 %v102, %v96
  %v105 = vsel %vm54, %v103, 0.0
  %106 = vadd.xlane.f32.xlu0 %v105
  %v107 = vpop.xlane.xlu0 %106
  %v108 = vsel %vm54, %v104, 0.0
  %109 = vadd.xlane.f32.xlu0 %v108
  %v110 = vpop.xlane.xlu0 %109
  %v111 = vrcp.pop 32.0
  %v112 = vmul.f32 %v107, %v111
  %v113 = vmul.f32 %v110, %v111
  %v114 = vsub.f32 %v103, %v112
  %v115 = vsub.f32 %v104, %v113
  %v116 = vmul.f32 %v114, %v114
  %v117 = vmul.f32 %v115, %v115
  %v118 = vsel %vm54, %v116, 0.0
  %119 = vadd.xlane.f32.xlu0 %v118
  %v120 = vpop.xlane.xlu0 %119
  %v121 = vsel %vm54, %v117, 0.0
  %122 = vadd.xlane.f32.xlu0 %v121
  %v123 = vpop.xlane.xlu0 %122
  %v124 = vmul.f32 %v120, %v111
  %v125 = vmul.f32 %v123, %v111
  %v126 = vadd.f32 %v124, 1e-06
  %v127 = vadd.f32 %v125, 1e-06
  %v128 = vrsqrt.pop %v126
  %v129 = vrsqrt.pop %v127
  %v130 = vmul.f32 %v114, %v128
  %v131 = vmul.f32 %v115, %v129
  %v132 = vld [vmem:[%s4] sm:$0x1]
  %v134 = vlaneseq
  %v135 = vshrl.u32 %v134, 7
  %v136 = vsub.s32 0, %v135
  %v137 = vrot.slane %v132, %v136
  %v139 = vmul.f32 %v137, %v130
  %v140 = vmul.f32 %v137, %v131
  %v141 = vld [vmem:[%s5] sm:$0x1]
  %v143 = vlaneseq
  %v144 = vshrl.u32 %v143, 7
  %v145 = vsub.s32 0, %v144
  %v146 = vrot.slane %v141, %v145
  %v148 = vadd.f32 %v139, %v146
  %v149 = vadd.f32 %v140, %v146
  %v150 = vpack.c.bf16 %v149, %v148
  %v152 = vunpack.c.l.b16 %v150
  %v153 = vunpack.c.h.b16 %v150
  %v154 = vpack.c.b16 %v152, %v152
  %v155 = vpack.c.b16 %v153, %v153
  %vm158 = vcmask 257024
  %159 = vst.msk [vmem:[%s6] sm:$0xf] %vm158, %v154
  %160 = vst.msk [vmem:[%s6 + $0x4] sm:$0xf] %vm158, %v155
  // Predicated region
  $region26: #{decoder_forward.13} parent=0 // pred_check
    _
  $region27: #{decoder_forward.13} parent=0 // pred_check_branch
    %162 = sbr.rel (0) target = $region29
  $region28: #{decoder_forward.13} parent=0 // pred_region
    _
  $region29: #{decoder_forward.13} parent=0 // pred_fallthru
    _
  // Predicated region
  $region30: #{decoder_forward.13} parent=0 // pred_check
    _
  $region31: #{decoder_forward.13} parent=0 // pred_check_branch
    %164 = sbr.rel (0) target = $region33
  $region32: #{decoder_forward.13} parent=0 // pred_region
    _
  $region33: #{decoder_forward.13} parent=0 // pred_fallthru
    _

// kernel: decoder_forward.14
$region0: #{decoder_forward.14}
  #allocation0 [shape = 'u32[]', space=smem, size = 0x4, offset = 0x4, fixed_abs, tag = 'smem constant byte address 0x4 - core index']
  #allocation1 [shape = 'u32[144,128]{1,0:T(1,128)}', space=vmem, size = 0x12000, scoped, tag = 'internal scratch']
  %s0 = inlined_call_operand.vmem [shape: bf16[2,8,32], index: 0, kind: input, shape index: {}]
  %s1 = inlined_call_operand.vmem [shape: bf16[2,8,32], index: 1, kind: input, shape index: {}]
  %s2 = inlined_call_operand.vmem [shape: bf16[32,32], index: 2, kind: input, shape index: {}]
  %s3 = inlined_call_operand.vmem [shape: bf16[32,64], index: 3, kind: input, shape index: {}]
  %s4 = inlined_call_operand.vmem [shape: bf16[2,8,32], index: 4, kind: output, shape index: {}]
  %s5 = sld [smem:[#allocation0]]
  $region49: #{decoder_forward.14} parent=0
    _
  %s7 = ssub.s32 1, %s5
  %s8 = scalar_select 0, %s7, %s5
  loop: start=0, step=1, limit=4
  $region2: #{decoder_forward.14} parent=0 // loop_pre_header
    _
  $region3: #{decoder_forward.14} parent=0 // loop_header
    %s10 = sphi 0, %s14
    %p11 = scmp.ge.s32.totalorder %s10, 4
    %s20 = sphi 0, %s22
    %s23 = sphi 0, %s20
    %s24 = sphi 0, %s23
    %s40 = sphi 0, %s24
    %s46 = sphi 0, %s48
    %s49 = sphi 0, %s46
    %s50 = sphi 0, %s49
    %s66 = sphi 0, %s50
    %s70 = sphi 0, %s70
    %s72 = sphi 0, %s70
    %s73 = sphi 0, %s72
    %s87 = sphi 0, %s73
    %s91 = sphi 0, %s91
    %s93 = sphi 0, %s91
    %s94 = sphi 0, %s93
    %s108 = sphi 0, %s94
    %s114 = sphi 0, %s116
    %s117 = sphi 0, %s114
    %s118 = sphi 0, %s117
    %s134 = sphi 0, %s118
  $region4: #{decoder_forward.14} parent=0 // loop_header_branch
    %13 = sbr.rel (%p11) target = $region8
  $region5: #{decoder_forward.14} parent=0 // loop_body
    %s15 = ssub.s32 %s10, 1
    %s16 = ssub.s32 %s10, 2
    %s17 = sadd.s32 %s10, 1
    %s18 = ssub.s32 %s10, %s17
    %p19 = scmp.eq.s32.totalorder %s18, 0
    %s21 = sadd.s32 %s20, 1
    %s22 = scalar_select %p19, %s20, %s21
    %p25 = pneg %p19
    %p26 = scmp.eq.s32.totalorder %s10, 1
    %p27 = por %p25, %p26
    %p28 = scmp.ne.s32.totalorder %s20, %s23
    %p29 = scmp.eq.s32.totalorder %s10, 0
    %p30 = por %p28, %p29
    %p31 = scmp.ne.s32.totalorder %s20, %s23
    %p32 = scmp.eq.s32.totalorder %s15, 1
    %p33 = por %p31, %p32
    %p34 = scmp.ne.s32.totalorder %s23, %s24
    %p35 = scmp.eq.s32.totalorder %s15, 0
    %p36 = por %p34, %p35
    %p37 = scmp.ne.s32.totalorder %s23, %s24
    %p38 = scmp.eq.s32.totalorder %s16, 1
    %p39 = por %p37, %p38
    %p41 = scmp.ne.s32.totalorder %s24, %s40
    %p42 = scmp.eq.s32.totalorder %s16, 0
    %p43 = por %p41, %p42
    %s44 = ssub.s32 %s10, %s17
    %p45 = scmp.eq.s32.totalorder %s44, 0
    %s47 = sadd.s32 %s46, 1
    %s48 = scalar_select %p45, %s46, %s47
    %p51 = pneg %p45
    %p52 = scmp.eq.s32.totalorder %s10, 1
    %p53 = por %p51, %p52
    %p54 = scmp.ne.s32.totalorder %s46, %s49
    %p55 = scmp.eq.s32.totalorder %s10, 0
    %p56 = por %p54, %p55
    %p57 = scmp.ne.s32.totalorder %s46, %s49
    %p58 = scmp.eq.s32.totalorder %s15, 1
    %p59 = por %p57, %p58
    %p60 = scmp.ne.s32.totalorder %s49, %s50
    %p61 = scmp.eq.s32.totalorder %s15, 0
    %p62 = por %p60, %p61
    %p63 = scmp.ne.s32.totalorder %s49, %s50
    %p64 = scmp.eq.s32.totalorder %s16, 1
    %p65 = por %p63, %p64
    %p67 = scmp.ne.s32.totalorder %s50, %s66
    %p68 = scmp.eq.s32.totalorder %s16, 0
    %p69 = por %p67, %p68
    %s71 = sadd.s32 %s70, 1
    %p74 = scmp.eq.s32.totalorder %s10, 1
    %p75 = scmp.ne.s32.totalorder %s70, %s72
    %p76 = scmp.eq.s32.totalorder %s10, 0
    %p77 = por %p75, %p76
    %p78 = scmp.ne.s32.totalorder %s70, %s72
    %p79 = scmp.eq.s32.totalorder %s15, 1
    %p80 = por %p78, %p79
    %p81 = scmp.ne.s32.totalorder %s72, %s73
    %p82 = scmp.eq.s32.totalorder %s15, 0
    %p83 = por %p81, %p82
    %p84 = scmp.ne.s32.totalorder %s72, %s73
    %p85 = scmp.eq.s32.totalorder %s16, 1
    %p86 = por %p84, %p85
    %p88 = scmp.ne.s32.totalorder %s73, %s87
    %p89 = scmp.eq.s32.totalorder %s16, 0
    %p90 = por %p88, %p89
    %s92 = sadd.s32 %s91, 1
    %p95 = scmp.eq.s32.totalorder %s10, 1
    %p96 = scmp.ne.s32.totalorder %s91, %s93
    %p97 = scmp.eq.s32.totalorder %s10, 0
    %p98 = por %p96, %p97
    %p99 = scmp.ne.s32.totalorder %s91, %s93
    %p100 = scmp.eq.s32.totalorder %s15, 1
    %p101 = por %p99, %p100
    %p102 = scmp.ne.s32.totalorder %s93, %s94
    %p103 = scmp.eq.s32.totalorder %s15, 0
    %p104 = por %p102, %p103
    %p105 = scmp.ne.s32.totalorder %s93, %s94
    %p106 = scmp.eq.s32.totalorder %s16, 1
    %p107 = por %p105, %p106
    %p109 = scmp.ne.s32.totalorder %s94, %s108
    %p110 = scmp.eq.s32.totalorder %s16, 0
    %p111 = por %p109, %p110
    %s112 = ssub.s32 %s10, %s17
    %p113 = scmp.eq.s32.totalorder %s112, 0
    %s115 = sadd.s32 %s114, 1
    %s116 = scalar_select %p113, %s114, %s115
    %p119 = pneg %p113
    %p120 = scmp.eq.s32.totalorder %s10, 1
    %p121 = por %p119, %p120
    %p122 = scmp.ne.s32.totalorder %s114, %s117
    %p123 = scmp.eq.s32.totalorder %s10, 0
    %p124 = por %p122, %p123
    %p125 = scmp.ne.s32.totalorder %s114, %s117
    %p126 = scmp.eq.s32.totalorder %s15, 1
    %p127 = por %p125, %p126
    %p128 = scmp.ne.s32.totalorder %s117, %s118
    %p129 = scmp.eq.s32.totalorder %s15, 0
    %p130 = por %p128, %p129
    %p131 = scmp.ne.s32.totalorder %s117, %s118
    %p132 = scmp.eq.s32.totalorder %s16, 1
    %p133 = por %p131, %p132
    %p135 = scmp.ne.s32.totalorder %s118, %s134
    %p136 = scmp.eq.s32.totalorder %s16, 0
    %p137 = por %p135, %p136
    %p138 = scmp.le.s32.totalorder 1, %s10
    %p139 = scmp.lt.s32.totalorder %s10, 3
    %p140 = pnand %p138, %p139
    %p141 = pneg %p140
    // Predicated region
    $region9: #{decoder_forward.14} parent=5 // pred_check
      _
    $region10: #{decoder_forward.14} parent=5 // pred_check_branch
      %143 = sbr.rel (%p140) target = $region12
    $region11: #{decoder_forward.14} parent=5 // pred_region
      %s144 = ssub.s32 %s10, 1
      // Predicated region
      $region13: #{decoder_forward.14} parent=11 // pred_check
        %p145 = pneg %p83
      $region14: #{decoder_forward.14} parent=11 // pred_check_branch
        %147 = sbr.rel (%p145) target = $region16
      $region15: #{decoder_forward.14} parent=11 // pred_region
        _
      $region16: #{decoder_forward.14} parent=11 // pred_fallthru
        _
      // Predicated region
      $region17: #{decoder_forward.14} parent=11 // pred_check
        %p148 = pneg %p104
      $region18: #{decoder_forward.14} parent=11 // pred_check_branch
        %150 = sbr.rel (%p148) target = $region20
      $region19: #{decoder_forward.14} parent=11 // pred_region
        _
      $region20: #{decoder_forward.14} parent=11 // pred_fallthru
        _
    $region12: #{decoder_forward.14} parent=5 // pred_fallthru
      _
    %p151 = scmp.lt.s32.totalorder %s10, 2
    // Predicated region
    $region21: #{decoder_forward.14} parent=5 // pred_check
      %p152 = pneg %p151
    $region22: #{decoder_forward.14} parent=5 // pred_check_branch
      %154 = sbr.rel (%p152) target = $region24
    $region23: #{decoder_forward.14} parent=5 // pred_region
      // Predicated region
      $region25: #{decoder_forward.14} parent=23 // pred_check
        %p155 = pneg %p30
      $region26: #{decoder_forward.14} parent=23 // pred_check_branch
        %157 = sbr.rel (%p155) target = $region28
      $region27: #{decoder_forward.14} parent=23 // pred_region
        %p158 = scmp.lt.s32.totalorder %s10, 1
        %s159 = scalar_select %p158, %s10, 1
        %s160 = smul.addr %s159, 4
        %s161 = scalar_lea.vmem %s0, %s160
      $region28: #{decoder_forward.14} parent=23 // pred_fallthru
        _
      // Predicated region
      $region29: #{decoder_forward.14} parent=23 // pred_check
        %p162 = pneg %p56
      $region30: #{decoder_forward.14} parent=23 // pred_check_branch
        %164 = sbr.rel (%p162) target = $region32
      $region31: #{decoder_forward.14} parent=23 // pred_region
        %p165 = scmp.lt.s32.totalorder %s10, 1
        %s166 = scalar_select %p165, %s10, 1
        %s167 = smul.addr %s166, 4
        %s168 = scalar_lea.vmem %s1, %s167
      $region32: #{decoder_forward.14} parent=23 // pred_fallthru
        _
    $region24: #{decoder_forward.14} parent=5 // pred_fallthru
      _
    %p169 = scmp.le.s32.totalorder 1, %s10
    %p170 = scmp.lt.s32.totalorder %s10, 3
    %p171 = pnand %p169, %p170
    %p172 = pneg %p171
    // Predicated region
    $region33: #{decoder_forward.14} parent=5 // pred_check
      _
    $region34: #{decoder_forward.14} parent=5 // pred_check_branch
      %174 = sbr.rel (%p171) target = $region36
    $region35: #{decoder_forward.14} parent=5 // pred_region
      %s175 = ssub.s32 %s10, 1
      %p176 = scmp.lt.s32.totalorder %s15, 1
      %s177 = scalar_select %p176, %s15, 1
      %s178 = smul.addr %s177, 4
      %s179 = scalar_lea.vmem %s0, %s178
      %p180 = pneg %p36
      %p181 = pneg %p33
      %p182 = scmp.lt.s32.totalorder %s15, 1
      %s183 = scalar_select %p182, %s15, 1
      %s184 = smul.addr %s183, 4
      %s185 = scalar_lea.vmem %s1, %s184
      %p186 = pneg %p62
      %p187 = pneg %p59
      %p188 = pneg %p83
      %p189 = pneg %p80
      %p190 = pneg %p104
      %p191 = pneg %p101
      %p192 = pneg %p130
      %p193 = pneg %p127
      %p194 = scmp.lt.s32.totalorder %s15, 1
      %s195 = scalar_select %p194, %s15, 1
      %s196 = smul.addr %s195, 4
      %s197 = scalar_lea.vmem %s4, %s196
      %p198 = scmp.lt.s32.totalorder %s15, 1
      %s199 = scalar_select %p198, %s15, 1
      %s200 = smul.addr %s199, 4
      %s201 = scalar_lea.vmem %s0, %s200
      %p202 = scmp.lt.s32.totalorder %s15, 1
      %s203 = scalar_select %p202, %s15, 1
      %s204 = smul.addr %s203, 4
      %s205 = scalar_lea.vmem %s1, %s204
      %p206 = scmp.lt.s32.totalorder %s15, 1
      %s207 = scalar_select %p206, %s15, 1
      %s208 = smul.addr %s207, 4
      %s209 = scalar_lea.vmem %s4, %s208
      %v211 = vld [vmem:[%s201] sm:$0xf]
      %v212 = vld [vmem:[%s2] sm:$0xf]
      %v213 = vld [vmem:[%s2 + $0x4] sm:$0xf]
      %v214 = vld [vmem:[%s2 + $0x8] sm:$0xf]
      %v215 = vld [vmem:[%s2 + $0xc] sm:$0xf]
      %v220 = vunpack.c.l.b16 %v212
      %v221 = vunpack.c.l.b16 %v213
      %v222 = vunpack.c.l.b16 %v214
      %v223 = vunpack.c.l.b16 %v215
      %v224 = vpack.c.b16 %v221, %v220
      %v225 = vpack.c.b16 %v223, %v222
      %vm228 = vcmask 261120
      %v230 = vsel %vm228, %v211, 0
      %232 = vmatprep.subr.bf16.mxu0 0
      %233 = vmatpush1.bf16.msra.mxu0 %v224
      %234 = vmatprep.subr.bf16.mxu0 0
      %235 = vmatpush1.bf16.msra.mxu0 %v225
      %236 = vmatprep.subr.bf16.mxu0 0
      %237 = vmatpush1.bf16.msra.mxu0 0
      %238 = vmatprep.subr.bf16.mxu0 0
      %239 = vmatpush1.bf16.msra.mxu0 0
      %240 = vmatprep.subr.bf16.mxu0 0
      %241 = vmatpush1.bf16.msra.mxu0 0
      %242 = vmatprep.subr.bf16.mxu0 0
      %243 = vmatpush1.bf16.msra.mxu0 0
      %244 = vmatprep.subr.bf16.mxu0 0
      %245 = vmatpush1.bf16.msra.mxu0 0
      %246 = vmatprep.subr.bf16.mxu0 0
      %247 = vmatpush1.bf16.msra.mxu0 0
      %248 = vmatprep.subr.bf16.mxu0 0
      %249 = vmatpush1.bf16.msra.mxu0 0
      %250 = vmatprep.subr.bf16.mxu0 0
      %251 = vmatpush1.bf16.msra.mxu0 0
      %252 = vmatprep.subr.bf16.mxu0 0
      %253 = vmatpush1.bf16.msra.mxu0 0
      %254 = vmatprep.subr.bf16.mxu0 0
      %255 = vmatpush1.bf16.msra.mxu0 0
      %256 = vmatprep.subr.bf16.mxu0 0
      %257 = vmatpush1.bf16.msra.mxu0 0
      %258 = vmatprep.subr.bf16.mxu0 0
      %259 = vmatpush1.bf16.msra.mxu0 0
      %260 = vmatprep.subr.bf16.mxu0 0
      %261 = vmatpush1.bf16.msra.mxu0 0
      %262 = vmatprep.subr.bf16.mxu0 0
      %263 = vmatpush1.bf16.msra.mxu0 0
      %264 = vmatprep.mubr.bf16.mxu0 0
      %265 = vmatmul.mubr.bf16.gmra.mrb[0].mxu0 %v230
      %v266 = vpop.f32.mrb[0].mxu0
      %v267 = vadd.f32 0.0, %v266
      %v268 = vpop.f32.mrb[0].mxu0
      %v269 = vpop.f32.mrb[0].mxu0
      %v270 = vpop.f32.mrb[0].mxu0
      %271 = vdwg.mxu0
      %v272 = vmul.f32 %v267, 0.35355338
      %v273 = vld [vmem:[%s205] sm:$0xf]
      %v274 = vld [vmem:[%s3] sm:$0xf]
      %v275 = vld [vmem:[%s3 + $0x4] sm:$0xf]
      %v276 = vld [vmem:[%s3 + $0x8] sm:$0xf]
      %v277 = vld [vmem:[%s3 + $0xc] sm:$0xf]
      %v282 = vunpack.c.l.b16 %v274
      %v283 = vunpack.c.l.b16 %v275
      %v284 = vunpack.c.l.b16 %v276
      %v285 = vunpack.c.l.b16 %v277
      %v286 = vpack.c.b16 %v283, %v282
      %v287 = vpack.c.b16 %v285, %v284
      %v291 = vsel %vm228, %v273, 0
      %293 = vmatprep.subr.bf16.mxu0 0
      %294 = vmatpush1.bf16.msra.mxu0 %v286
      %295 = vmatprep.subr.bf16.mxu0 0
      %296 = vmatpush1.bf16.msra.mxu0 %v287
      %297 = vmatprep.subr.bf16.mxu0 0
      %298 = vmatpush1.bf16.msra.mxu0 0
      %299 = vmatprep.subr.bf16.mxu0 0
      %300 = vmatpush1.bf16.msra.mxu0 0
      %301 = vmatprep.subr.bf16.mxu0 0
      %302 = vmatpush1.bf16.msra.mxu0 0
      %303 = vmatprep.subr.bf16.mxu0 0
      %304 = vmatpush1.bf16.msra.mxu0 0
      %305 = vmatprep.subr.bf16.mxu0 0
      %306 = vmatpush1.bf16.msra.mxu0 0
      %307 = vmatprep.subr.bf16.mxu0 0
      %308 = vmatpush1.bf16.msra.mxu0 0
      %309 = vmatprep.subr.bf16.mxu0 0
      %310 = vmatpush1.bf16.msra.mxu0 0
      %311 = vmatprep.subr.bf16.mxu0 0
      %312 = vmatpush1.bf16.msra.mxu0 0
      %313 = vmatprep.subr.bf16.mxu0 0
      %314 = vmatpush1.bf16.msra.mxu0 0
      %315 = vmatprep.subr.bf16.mxu0 0
      %316 = vmatpush1.bf16.msra.mxu0 0
      %317 = vmatprep.subr.bf16.mxu0 0
      %318 = vmatpush1.bf16.msra.mxu0 0
      %319 = vmatprep.subr.bf16.mxu0 0
      %320 = vmatpush1.bf16.msra.mxu0 0
      %321 = vmatprep.subr.bf16.mxu0 0
      %322 = vmatpush1.bf16.msra.mxu0 0
      %323 = vmatprep.subr.bf16.mxu0 0
      %324 = vmatpush1.bf16.msra.mxu0 0
      %325 = vmatprep.mubr.bf16.mxu0 0
      %326 = vmatmul.mubr.bf16.gmra.mrb[0].mxu0 %v291
      %v327 = vpop.f32.mrb[0].mxu0
      %v328 = vadd.f32 0.0, %v327
      %v329 = vpop.f32.mrb[0].mxu0
      %v330 = vpop.f32.mrb[0].mxu0
      %v331 = vpop.f32.mrb[0].mxu0
      %332 = vdwg.mxu0
      %v333 = vpack.c.bf16 %v272, %v272
      %v334 = vpack.c.bf16 %v328, %v328
      %vm335 = vcmask 64512
      %v337 = vsel %vm335, %v333, 0
      %v340 = vsel %vm335, %v334, 0
      %342 = vmatprep.subr.bf16.mxu0 0
      %343 = vmatpush1.bf16.xpose.msra.mxu0 %v340
      %344 = vmatprep.subr.bf16.mxu0 0
      %345 = vmatpush1.bf16.xpose.msra.mxu0 0
      %346 = vmatprep.subr.bf16.mxu0 0
      %347 = vmatpush1.bf16.xpose.msra.mxu0 0
      %348 = vmatprep.subr.bf16.mxu0 0
      %349 = vmatpush1.bf16.xpose.msra.mxu0 0
      %350 = vmatprep.subr.bf16.mxu0 0
      %351 = vmatpush1.bf16.xpose.msra.mxu0 0
      %352 = vmatprep.subr.bf16.mxu0 0
      %353 = vmatpush1.bf16.xpose.msra.mxu0 0
      %354 = vmatprep.subr.bf16.mxu0 0
      %355 = vmatpush1.bf16.xpose.msra.mxu0 0
      %356 = vmatprep.subr.bf16.mxu0 0
      %357 = vmatpush1.bf16.xpose.msra.mxu0 0
      %358 = vmatprep.subr.bf16.mxu0 0
      %359 = vmatpush1.bf16.xpose.msra.mxu0 0
      %360 = vmatprep.subr.bf16.mxu0 0
      %361 = vmatpush1.bf16.xpose.msra.mxu0 0
      %362 = vmatprep.subr.bf16.mxu0 0
      %363 = vmatpush1.bf16.xpose.msra.mxu0 0
      %364 = vmatprep.subr.bf16.mxu0 0
      %365 = vmatpush1.bf16.xpose.msra.mxu0 0
      %366 = vmatprep.subr.bf16.mxu0 0
      %367 = vmatpush1.bf16.xpose.msra.mxu0 0
      %368 = vmatprep.subr.bf16.mxu0 0
      %369 = vmatpush1.bf16.xpose.msra.mxu0 0
      %370 = vmatprep.subr.bf16.mxu0 0
      %371 = vmatpush1.bf16.xpose.msra.mxu0 0
      %372 = vmatprep.subr.bf16.mxu0 0
      %373 = vmatpush1.bf16.xpose.msra.mxu0 0
      %374 = vmatprep.mubr.bf16.mxu0 0
      %375 = vmatmul.mubr.bf16.gmra.mrb[0].mxu0 %v337
      %v376 = vpop.f32.mrb[0].mxu0
      %v377 = vadd.f32 0.0, %v376
      %v378 = vpop.f32.mrb[0].mxu0
      %v379 = vpop.f32.mrb[0].mxu0
      %v380 = vpop.f32.mrb[0].mxu0
      %381 = vdwg.mxu0
      %v382 = vsel %vm335, %v377, -inf
      %383 = vmax.xlane.f32.xlu0 %v382
      %v384 = vpop.xlane.xlu0 %383
      %v385 = vsub.f32 %v377, %v384
      %v386 = vmul.f32 %v385, 1.442695
      %v387 = vpow.pop %v386
      %v388 = vsel %vm335, %v387, 0.0
      %389 = vadd.xlane.f32.xlu0 %v388
      %v390 = vpop.xlane.xlu0 %389
      %v391 = vrcp.pop %v390
      %v392 = vmul.f32 %v387, %v391
      %v393 = vpack.c.bf16 %v392, %v392
      %395 = vrot.lane.b32.xlu0 %v334, 96
      %v396 = vpop.permute.xlu0 %395
      %v398 = vsel %vm335, %v393, 0
      %vm400 = vcmask 1043456
      %v402 = vsel %vm400, %v396, 0
      %404 = vmatprep.subr.bf16.mxu0 0
      %405 = vmatpush1.bf16.msra.mxu0 %v402
      %406 = vmatprep.subr.bf16.mxu0 0
      %407 = vmatpush1.bf16.msra.mxu0 0
      %408 = vmatprep.subr.bf16.mxu0 0
      %409 = vmatpush1.bf16.msra.mxu0 0
      %410 = vmatprep.subr.bf16.mxu0 0
      %411 = vmatpush1.bf16.msra.mxu0 0
      %412 = vmatprep.subr.bf16.mxu0 0
      %413 = vmatpush1.bf16.msra.mxu0 0
      %414 = vmatprep.subr.bf16.mxu0 0
      %415 = vmatpush1.bf16.msra.mxu0 0
      %416 = vmatprep.subr.bf16.mxu0 0
      %417 = vmatpush1.bf16.msra.mxu0 0
      %418 = vmatprep.subr.bf16.mxu0 0
      %419 = vmatpush1.bf16.msra.mxu0 0
      %420 = vmatprep.subr.bf16.mxu0 0
      %421 = vmatpush1.bf16.msra.mxu0 0
      %422 = vmatprep.subr.bf16.mxu0 0
      %423 = vmatpush1.bf16.msra.mxu0 0
      %424 = vmatprep.subr.bf16.mxu0 0
      %425 = vmatpush1.bf16.msra.mxu0 0
      %426 = vmatprep.subr.bf16.mxu0 0
      %427 = vmatpush1.bf16.msra.mxu0 0
      %428 = vmatprep.subr.bf16.mxu0 0
      %429 = vmatpush1.bf16.msra.mxu0 0
      %430 = vmatprep.subr.bf16.mxu0 0
      %431 = vmatpush1.bf16.msra.mxu0 0
      %432 = vmatprep.subr.bf16.mxu0 0
      %433 = vmatpush1.bf16.msra.mxu0 0
      %434 = vmatprep.subr.bf16.mxu0 0
      %435 = vmatpush1.bf16.msra.mxu0 0
      %436 = vmatprep.mubr.bf16.mxu0 0
      %437 = vmatmul.mubr.bf16.gmra.mrb[0].mxu0 %v398
      %v438 = vpop.f32.mrb[0].mxu0
      %v439 = vadd.f32 0.0, %v438
      %v440 = vpop.f32.mrb[0].mxu0
      %v441 = vpop.f32.mrb[0].mxu0
      %v442 = vpop.f32.mrb[0].mxu0
      %443 = vdwg.mxu0
      %v444 = vpack.c.bf16 %v439, %v439
      %vm445 = vcmask 60416
      %446 = vst.msk [vmem:[%s209] sm:$0xf] %vm445, %v444
      %448 = vrot.lane.b32.xlu0 %v333, 120
      %v449 = vpop.permute.xlu0 %448
      %450 = vrot.lane.b32.xlu0 %v334, 120
      %v451 = vpop.permute.xlu0 %450
      %v453 = vsel %vm335, %v449, 0
      %v456 = vsel %vm335, %v451, 0
      %458 = vmatprep.subr.bf16.mxu0 0
      %459 = vmatpush1.bf16.xpose.msra.mxu0 %v456
      %460 = vmatprep.subr.bf16.mxu0 0
      %461 = vmatpush1.bf16.xpose.msra.mxu0 0
      %462 = vmatprep.subr.bf16.mxu0 0
      %463 = vmatpush1.bf16.xpose.msra.mxu0 0
      %464 = vmatprep.subr.bf16.mxu0 0
      %465 = vmatpush1.bf16.xpose.msra.mxu0 0
      %466 = vmatprep.subr.bf16.mxu0 0
      %467 = vmatpush1.bf16.xpose.msra.mxu0 0
      %468 = vmatprep.subr.bf16.mxu0 0
      %469 = vmatpush1.bf16.xpose.msra.mxu0 0
      %470 = vmatprep.subr.bf16.mxu0 0
      %471 = vmatpush1.bf16.xpose.msra.mxu0 0
      %472 = vmatprep.subr.bf16.mxu0 0
      %473 = vmatpush1.bf16.xpose.msra.mxu0 0
      %474 = vmatprep.subr.bf16.mxu0 0
      %475 = vmatpush1.bf16.xpose.msra.mxu0 0
      %476 = vmatprep.subr.bf16.mxu0 0
      %477 = vmatpush1.bf16.xpose.msra.mxu0 0
      %478 = vmatprep.subr.bf16.mxu0 0
      %479 = vmatpush1.bf16.xpose.msra.mxu0 0
      %480 = vmatprep.subr.bf16.mxu0 0
      %481 = vmatpush1.bf16.xpose.msra.mxu0 0
      %482 = vmatprep.subr.bf16.mxu0 0
      %483 = vmatpush1.bf16.xpose.msra.mxu0 0
      %484 = vmatprep.subr.bf16.mxu0 0
      %485 = vmatpush1.bf16.xpose.msra.mxu0 0
      %486 = vmatprep.subr.bf16.mxu0 0
      %487 = vmatpush1.bf16.xpose.msra.mxu0 0
      %488 = vmatprep.subr.bf16.mxu0 0
      %489 = vmatpush1.bf16.xpose.msra.mxu0 0
      %490 = vmatprep.mubr.bf16.mxu0 0
      %491 = vmatmul.mubr.bf16.gmra.mrb[0].mxu0 %v453
      %v492 = vpop.f32.mrb[0].mxu0
      %v493 = vadd.f32 0.0, %v492
      %v494 = vpop.f32.mrb[0].mxu0
      %v495 = vpop.f32.mrb[0].mxu0
      %v496 = vpop.f32.mrb[0].mxu0
      %497 = vdwg.mxu0
      %v498 = vsel %vm335, %v493, -inf
      %499 = vmax.xlane.f32.xlu0 %v498
      %v500 = vpop.xlane.xlu0 %499
      %v501 = vsub.f32 %v493, %v500
      %v502 = vmul.f32 %v501, 1.442695
      %v503 = vpow.pop %v502
      %v504 = vsel %vm335, %v503, 0.0
      %505 = vadd.xlane.f32.xlu0 %v504
      %v506 = vpop.xlane.xlu0 %505
      %v507 = vrcp.pop %v506
      %v508 = vmul.f32 %v503, %v507
      %v509 = vpack.c.bf16 %v508, %v508
      %510 = vrot.lane.b32.xlu0 %v334, 88
      %v511 = vpop.permute.xlu0 %510
      %v513 = vsel %vm335, %v509, 0
      %v516 = vsel %vm400, %v511, 0
      %518 = vmatprep.subr.bf16.mxu0 0
      %519 = vmatpush1.bf16.msra.mxu0 %v516
      %520 = vmatprep.subr.bf16.mxu0 0
      %521 = vmatpush1.bf16.msra.mxu0 0
      %522 = vmatprep.subr.bf16.mxu0 0
      %523 = vmatpush1.bf16.msra.mxu0 0
      %524 = vmatprep.subr.bf16.mxu0 0
      %525 = vmatpush1.bf16.msra.mxu0 0
      %526 = vmatprep.subr.bf16.mxu0 0
      %527 = vmatpush1.bf16.msra.mxu0 0
      %528 = vmatprep.subr.bf16.mxu0 0
      %529 = vmatpush1.bf16.msra.mxu0 0
      %530 = vmatprep.subr.bf16.mxu0 0
      %531 = vmatpush1.bf16.msra.mxu0 0
      %532 = vmatprep.subr.bf16.mxu0 0
      %533 = vmatpush1.bf16.msra.mxu0 0
      %534 = vmatprep.subr.bf16.mxu0 0
      %535 = vmatpush1.bf16.msra.mxu0 0
      %536 = vmatprep.subr.bf16.mxu0 0
      %537 = vmatpush1.bf16.msra.mxu0 0
      %538 = vmatprep.subr.bf16.mxu0 0
      %539 = vmatpush1.bf16.msra.mxu0 0
      %540 = vmatprep.subr.bf16.mxu0 0
      %541 = vmatpush1.bf16.msra.mxu0 0
      %542 = vmatprep.subr.bf16.mxu0 0
      %543 = vmatpush1.bf16.msra.mxu0 0
      %544 = vmatprep.subr.bf16.mxu0 0
      %545 = vmatpush1.bf16.msra.mxu0 0
      %546 = vmatprep.subr.bf16.mxu0 0
      %547 = vmatpush1.bf16.msra.mxu0 0
      %548 = vmatprep.subr.bf16.mxu0 0
      %549 = vmatpush1.bf16.msra.mxu0 0
      %550 = vmatprep.mubr.bf16.mxu0 0
      %551 = vmatmul.mubr.bf16.gmra.mrb[0].mxu0 %v513
      %v552 = vpop.f32.mrb[0].mxu0
      %v553 = vadd.f32 0.0, %v552
      %v554 = vpop.f32.mrb[0].mxu0
      %v555 = vpop.f32.mrb[0].mxu0
      %v556 = vpop.f32.mrb[0].mxu0
      %557 = vdwg.mxu0
      %v558 = vpack.c.bf16 %v553, %v553
      %v560 = vunpack.c.l.b16 %v558
      %v561 = vpack.c.b16 %v560, %v560
      %562 = vrot.lane.b32.xlu0 %v561, 8
      %v563 = vpop.permute.xlu0 %562
      %vm565 = vcmask 126016
      %566 = vst.msk [vmem:[%s209] sm:$0xf] %vm565, %v563
      %567 = vrot.lane.b32.xlu0 %v333, 112
      %v568 = vpop.permute.xlu0 %567
      %569 = vrot.lane.b32.xlu0 %v334, 112
      %v570 = vpop.permute.xlu0 %569
      %v572 = vsel %vm335, %v568, 0
      %v575 = vsel %vm335, %v570, 0
      %577 = vmatprep.subr.bf16.mxu0 0
      %578 = vmatpush1.bf16.xpose.msra.mxu0 %v575
      %579 = vmatprep.subr.bf16.mxu0 0
      %580 = vmatpush1.bf16.xpose.msra.mxu0 0
      %581 = vmatprep.subr.bf16.mxu0 0
      %582 = vmatpush1.bf16.xpose.msra.mxu0 0
      %583 = vmatprep.subr.bf16.mxu0 0
      %584 = vmatpush1.bf16.xpose.msra.mxu0 0
      %585 = vmatprep.subr.bf16.mxu0 0
      %586 = vmatpush1.bf16.xpose.msra.mxu0 0
      %587 = vmatprep.subr.bf16.mxu0 0
      %588 = vmatpush1.bf16.xpose.msra.mxu0 0
      %589 = vmatprep.subr.bf16.mxu0 0
      %590 = vmatpush1.bf16.xpose.msra.mxu0 0
      %591 = vmatprep.subr.bf16.mxu0 0
      %592 = vmatpush1.bf16.xpose.msra.mxu0 0
      %593 = vmatprep.subr.bf16.mxu0 0
      %594 = vmatpush1.bf16.xpose.msra.mxu0 0
      %595 = vmatprep.subr.bf16.mxu0 0
      %596 = vmatpush1.bf16.xpose.msra.mxu0 0
      %597 = vmatprep.subr.bf16.mxu0 0
      %598 = vmatpush1.bf16.xpose.msra.mxu0 0
      %599 = vmatprep.subr.bf16.mxu0 0
      %600 = vmatpush1.bf16.xpose.msra.mxu0 0
      %601 = vmatprep.subr.bf16.mxu0 0
      %602 = vmatpush1.bf16.xpose.msra.mxu0 0
      %603 = vmatprep.subr.bf16.mxu0 0
      %604 = vmatpush1.bf16.xpose.msra.mxu0 0
      %605 = vmatprep.subr.bf16.mxu0 0
      %606 = vmatpush1.bf16.xpose.msra.mxu0 0
      %607 = vmatprep.subr.bf16.mxu0 0
      %608 = vmatpush1.bf16.xpose.msra.mxu0 0
      %609 = vmatprep.mubr.bf16.mxu0 0
      %610 = vmatmul.mubr.bf16.gmra.mrb[0].mxu0 %v572
      %v611 = vpop.f32.mrb[0].mxu0
      %v612 = vadd.f32 0.0, %v611
      %v613 = vpop.f32.mrb[0].mxu0
      %v614 = vpop.f32.mrb[0].mxu0
      %v615 = vpop.f32.mrb[0].mxu0
      %616 = vdwg.mxu0
      %v617 = vsel %vm335, %v612, -inf
      %618 = vmax.xlane.f32.xlu0 %v617
      %v619 = vpop.xlane.xlu0 %618
      %v620 = vsub.f32 %v612, %v619
      %v621 = vmul.f32 %v620, 1.442695
      %v622 = vpow.pop %v621
      %v623 = vsel %vm335, %v622, 0.0
      %624 = vadd.xlane.f32.xlu0 %v623
      %v625 = vpop.xlane.xlu0 %624
      %v626 = vrcp.pop %v625
      %v627 = vmul.f32 %v622, %v626
      %v628 = vpack.c.bf16 %v627, %v627
      %629 = vrot.lane.b32.xlu0 %v334, 80
      %v630 = vpop.permute.xlu0 %629
      %v632 = vsel %vm335, %v628, 0
      %v635 = vsel %vm400, %v630, 0
      %637 = vmatprep.subr.bf16.mxu0 0
      %638 = vmatpush1.bf16.msra.mxu0 %v635
      %639 = vmatprep.subr.bf16.mxu0 0
      %640 = vmatpush1.bf16.msra.mxu0 0
      %641 = vmatprep.subr.bf16.mxu0 0
      %642 = vmatpush1.bf16.msra.mxu0 0
      %643 = vmatprep.subr.bf16.mxu0 0
      %644 = vmatpush1.bf16.msra.mxu0 0
      %645 = vmatprep.subr.bf16.mxu0 0
      %646 = vmatpush1.bf16.msra.mxu0 0
      %647 = vmatprep.subr.bf16.mxu0 0
      %648 = vmatpush1.bf16.msra.mxu0 0
      %649 = vmatprep.subr.bf16.mxu0 0
      %650 = vmatpush1.bf16.msra.mxu0 0
      %651 = vmatprep.subr.bf16.mxu0 0
      %652 = vmatpush1.bf16.msra.mxu0 0
      %653 = vmatprep.subr.bf16.mxu0 0
      %654 = vmatpush1.bf16.msra.mxu0 0
      %655 = vmatprep.subr.bf16.mxu0 0
      %656 = vmatpush1.bf16.msra.mxu0 0
      %657 = vmatprep.subr.bf16.mxu0 0
      %658 = vmatpush1.bf16.msra.mxu0 0
      %659 = vmatprep.subr.bf16.mxu0 0
      %660 = vmatpush1.bf16.msra.mxu0 0
      %661 = vmatprep.subr.bf16.mxu0 0
      %662 = vmatpush1.bf16.msra.mxu0 0
      %663 = vmatprep.subr.bf16.mxu0 0
      %664 = vmatpush1.bf16.msra.mxu0 0
      %665 = vmatprep.subr.bf16.mxu0 0
      %666 = vmatpush1.bf16.msra.mxu0 0
      %667 = vmatprep.subr.bf16.mxu0 0
      %668 = vmatpush1.bf16.msra.mxu0 0
      %669 = vmatprep.mubr.bf16.mxu0 0
      %670 = vmatmul.mubr.bf16.gmra.mrb[0].mxu0 %v632
      %v671 = vpop.f32.mrb[0].mxu0
      %v672 = vadd.f32 0.0, %v671
      %v673 = vpop.f32.mrb[0].mxu0
      %v674 = vpop.f32.mrb[0].mxu0
      %v675 = vpop.f32.mrb[0].mxu0
      %676 = vdwg.mxu0
      %v677 = vpack.c.bf16 %v672, %v672
      %v679 = vunpack.c.l.b16 %v677
      %v680 = vpack.c.b16 %v679, %v679
      %681 = vrot.lane.b32.xlu0 %v680, 16
      %v682 = vpop.permute.xlu0 %681
      %vm684 = vcmask 191616
      %685 = vst.msk [vmem:[%s209] sm:$0xf] %vm684, %v682
      %686 = vrot.lane.b32.xlu0 %v333, 104
      %v687 = vpop.permute.xlu0 %686
      %688 = vrot.lane.b32.xlu0 %v334, 104
      %v689 = vpop.permute.xlu0 %688
      %v691 = vsel %vm335, %v687, 0
      %v694 = vsel %vm335, %v689, 0
      %696 = vmatprep.subr.bf16.mxu0 0
      %697 = vmatpush1.bf16.xpose.msra.mxu0 %v694
      %698 = vmatprep.subr.bf16.mxu0 0
      %699 = vmatpush1.bf16.xpose.msra.mxu0 0
      %700 = vmatprep.subr.bf16.mxu0 0
      %701 = vmatpush1.bf16.xpose.msra.mxu0 0
      %702 = vmatprep.subr.bf16.mxu0 0
      %703 = vmatpush1.bf16.xpose.msra.mxu0 0
      %704 = vmatprep.subr.bf16.mxu0 0
      %705 = vmatpush1.bf16.xpose.msra.mxu0 0
      %706 = vmatprep.subr.bf16.mxu0 0
      %707 = vmatpush1.bf16.xpose.msra.mxu0 0
      %708 = vmatprep.subr.bf16.mxu0 0
      %709 = vmatpush1.bf16.xpose.msra.mxu0 0
      %710 = vmatprep.subr.bf16.mxu0 0
      %711 = vmatpush1.bf16.xpose.msra.mxu0 0
      %712 = vmatprep.subr.bf16.mxu0 0
      %713 = vmatpush1.bf16.xpose.msra.mxu0 0
      %714 = vmatprep.subr.bf16.mxu0 0
      %715 = vmatpush1.bf16.xpose.msra.mxu0 0
      %716 = vmatprep.subr.bf16.mxu0 0
      %717 = vmatpush1.bf16.xpose.msra.mxu0 0
      %718 = vmatprep.subr.bf16.mxu0 0
      %719 = vmatpush1.bf16.xpose.msra.mxu0 0
      %720 = vmatprep.subr.bf16.mxu0 0
      %721 = vmatpush1.bf16.xpose.msra.mxu0 0
      %722 = vmatprep.subr.bf16.mxu0 0
      %723 = vmatpush1.bf16.xpose.msra.mxu0 0
      %724 = vmatprep.subr.bf16.mxu0 0
      %725 = vmatpush1.bf16.xpose.msra.mxu0 0
      %726 = vmatprep.subr.bf16.mxu0 0
      %727 = vmatpush1.bf16.xpose.msra.mxu0 0
      %728 = vmatprep.mubr.bf16.mxu0 0
      %729 = vmatmul.mubr.bf16.gmra.mrb[0].mxu0 %v691
      %v730 = vpop.f32.mrb[0].mxu0
      %v731 = vadd.f32 0.0, %v730
      %v732 = vpop.f32.mrb[0].mxu0
      %v733 = vpop.f32.mrb[0].mxu0
      %v734 = vpop.f32.mrb[0].mxu0
      %735 = vdwg.mxu0
      %v736 = vsel %vm335, %v731, -inf
      %737 = vmax.xlane.f32.xlu0 %v736
      %v738 = vpop.xlane.xlu0 %737
      %v739 = vsub.f32 %v731, %v738
      %v740 = vmul.f32 %v739, 1.442695
      %v741 = vpow.pop %v740
      %v742 = vsel %vm335, %v741, 0.0
      %743 = vadd.xlane.f32.xlu0 %v742
      %v744 = vpop.xlane.xlu0 %743
      %v745 = vrcp.pop %v744
      %v746 = vmul.f32 %v741, %v745
      %v747 = vpack.c.bf16 %v746, %v746
      %748 = vrot.lane.b32.xlu0 %v334, 72
      %v749 = vpop.permute.xlu0 %748
      %v751 = vsel %vm335, %v747, 0
      %v754 = vsel %vm400, %v749, 0
      %756 = vmatprep.subr.bf16.mxu0 0
      %757 = vmatpush1.bf16.msra.mxu0 %v754
      %758 = vmatprep.subr.bf16.mxu0 0
      %759 = vmatpush1.bf16.msra.mxu0 0
      %760 = vmatprep.subr.bf16.mxu0 0
      %761 = vmatpush1.bf16.msra.mxu0 0
      %762 = vmatprep.subr.bf16.mxu0 0
      %763 = vmatpush1.bf16.msra.mxu0 0
      %764 = vmatprep.subr.bf16.mxu0 0
      %765 = vmatpush1.bf16.msra.mxu0 0
      %766 = vmatprep.subr.bf16.mxu0 0
      %767 = vmatpush1.bf16.msra.mxu0 0
      %768 = vmatprep.subr.bf16.mxu0 0
      %769 = vmatpush1.bf16.msra.mxu0 0
      %770 = vmatprep.subr.bf16.mxu0 0
      %771 = vmatpush1.bf16.msra.mxu0 0
      %772 = vmatprep.subr.bf16.mxu0 0
      %773 = vmatpush1.bf16.msra.mxu0 0
      %774 = vmatprep.subr.bf16.mxu0 0
      %775 = vmatpush1.bf16.msra.mxu0 0
      %776 = vmatprep.subr.bf16.mxu0 0
      %777 = vmatpush1.bf16.msra.mxu0 0
      %778 = vmatprep.subr.bf16.mxu0 0
      %779 = vmatpush1.bf16.msra.mxu0 0
      %780 = vmatprep.subr.bf16.mxu0 0
      %781 = vmatpush1.bf16.msra.mxu0 0
      %782 = vmatprep.subr.bf16.mxu0 0
      %783 = vmatpush1.bf16.msra.mxu0 0
      %784 = vmatprep.subr.bf16.mxu0 0
      %785 = vmatpush1.bf16.msra.mxu0 0
      %786 = vmatprep.subr.bf16.mxu0 0
      %787 = vmatpush1.bf16.msra.mxu0 0
      %788 = vmatprep.mubr.bf16.mxu0 0
      %789 = vmatmul.mubr.bf16.gmra.mrb[0].mxu0 %v751
      %v790 = vpop.f32.mrb[0].mxu0
      %v791 = vadd.f32 0.0, %v790
      %v792 = vpop.f32.mrb[0].mxu0
      %v793 = vpop.f32.mrb[0].mxu0
      %v794 = vpop.f32.mrb[0].mxu0
      %795 = vdwg.mxu0
      %v796 = vpack.c.bf16 %v791, %v791
      %v798 = vunpack.c.l.b16 %v796
      %v799 = vpack.c.b16 %v798, %v798
      %800 = vrot.lane.b32.xlu0 %v799, 24
      %v801 = vpop.permute.xlu0 %800
      %vm803 = vcmask 257216
      %804 = vst.msk [vmem:[%s209] sm:$0xf] %vm803, %v801
      %p805 = scmp.lt.s32.totalorder %s15, 1
      %s806 = scalar_select %p805, %s15, 1
      %s807 = smul.addr %s806, 4
      %s808 = scalar_lea.vmem %s4, %s807
      // Predicated region
      $region37: #{decoder_forward.14} parent=35 // pred_check
        %p809 = pneg %p127
      $region38: #{decoder_forward.14} parent=35 // pred_check_branch
        %811 = sbr.rel (%p809) target = $region40
      $region39: #{decoder_forward.14} parent=35 // pred_region
        _
      $region40: #{decoder_forward.14} parent=35 // pred_fallthru
        _
    $region36: #{decoder_forward.14} parent=5 // pred_fallthru
      _
    %p812 = scmp.le.s32.totalorder 2, %s10
    // Predicated region
    $region41: #{decoder_forward.14} parent=5 // pred_check
      %p813 = pneg %p812
    $region42: #{decoder_forward.14} parent=5 // pred_check_branch
      %815 = sbr.rel (%p813) target = $region44
    $region43: #{decoder_forward.14} parent=5 // pred_region
      %s816 = ssub.s32 %s10, 2
      // Predicated region
      $region45: #{decoder_forward.14} parent=43 // pred_check
        %p817 = pneg %p133
      $region46: #{decoder_forward.14} parent=43 // pred_check_branch
        %819 = sbr.rel (%p817) target = $region48
      $region47: #{decoder_forward.14} parent=43 // pred_region
        %p820 = scmp.lt.s32.totalorder %s16, 1
        %s821 = scalar_select %p820, %s16, 1
        %s822 = smul.addr %s821, 4
        %s823 = scalar_lea.vmem %s4, %s822
      $region48: #{decoder_forward.14} parent=43 // pred_fallthru
        _
    $region44: #{decoder_forward.14} parent=5 // pred_fallthru
      _
  $region6: #{decoder_forward.14} parent=0 // loop_footer
    %s14 = sadd.s32 1, %s10
  $region7: #{decoder_forward.14} parent=0 // loop_footer_branch
    %9 = sbr.rel target = $region3
  $region8: #{decoder_forward.14} parent=0 // loop_exit
    _

// kernel: decoder_forward.12
$region0: #{decoder_forward.12}
  #allocation0 [shape = 'u32[]', space=smem, size = 0x4, offset = 0x4, fixed_abs, tag = 'smem constant byte address 0x4 - core index']
  #allocation1 [shape = 'u32[144,128]{1,0:T(1,128)}', space=vmem, size = 0x12000, scoped, tag = 'internal scratch']
  %s0 = inlined_call_operand.vmem [shape: bf16[2,8,32], index: 0, kind: input, shape index: {}]
  %s1 = inlined_call_operand.vmem [shape: bf16[32,96], index: 1, kind: input, shape index: {}]
  %s2 = inlined_call_operand.vmem [shape: bf16[1,8,8], index: 2, kind: input, shape index: {}]
  %s3 = inlined_call_operand.vmem [shape: bf16[2,8,32], index: 3, kind: output, shape index: {}]
  %s4 = sld [smem:[#allocation0]]
  $region45: #{decoder_forward.12} parent=0
    _
  %s6 = ssub.s32 1, %s4
  %s7 = scalar_select 0, %s6, %s4
  loop: start=0, step=1, limit=4
  $region2: #{decoder_forward.12} parent=0 // loop_pre_header
    _
  $region3: #{decoder_forward.12} parent=0 // loop_header
    %s9 = sphi 0, %s13
    %p10 = scmp.ge.s32.totalorder %s9, 4
    %s19 = sphi 0, %s21
    %s22 = sphi 0, %s19
    %s23 = sphi 0, %s22
    %s39 = sphi 0, %s23
    %s43 = sphi 0, %s43
    %s45 = sphi 0, %s43
    %s46 = sphi 0, %s45
    %s60 = sphi 0, %s46
    %s64 = sphi 0, %s64
    %s66 = sphi 0, %s64
    %s67 = sphi 0, %s66
    %s81 = sphi 0, %s67
    %s87 = sphi 0, %s89
    %s90 = sphi 0, %s87
    %s91 = sphi 0, %s90
    %s107 = sphi 0, %s91
  $region4: #{decoder_forward.12} parent=0 // loop_header_branch
    %12 = sbr.rel (%p10) target = $region8
  $region5: #{decoder_forward.12} parent=0 // loop_body
    %s14 = ssub.s32 %s9, 1
    %s15 = ssub.s32 %s9, 2
    %s16 = sadd.s32 %s9, 1
    %s17 = ssub.s32 %s9, %s16
    %p18 = scmp.eq.s32.totalorder %s17, 0
    %s20 = sadd.s32 %s19, 1
    %s21 = scalar_select %p18, %s19, %s20
    %p24 = pneg %p18
    %p25 = scmp.eq.s32.totalorder %s9, 1
    %p26 = por %p24, %p25
    %p27 = scmp.ne.s32.totalorder %s19, %s22
    %p28 = scmp.eq.s32.totalorder %s9, 0
    %p29 = por %p27, %p28
    %p30 = scmp.ne.s32.totalorder %s19, %s22
    %p31 = scmp.eq.s32.totalorder %s14, 1
    %p32 = por %p30, %p31
    %p33 = scmp.ne.s32.totalorder %s22, %s23
    %p34 = scmp.eq.s32.totalorder %s14, 0
    %p35 = por %p33, %p34
    %p36 = scmp.ne.s32.totalorder %s22, %s23
    %p37 = scmp.eq.s32.totalorder %s15, 1
    %p38 = por %p36, %p37
    %p40 = scmp.ne.s32.totalorder %s23, %s39
    %p41 = scmp.eq.s32.totalorder %s15, 0
    %p42 = por %p40, %p41
    %s44 = sadd.s32 %s43, 1
    %p47 = scmp.eq.s32.totalorder %s9, 1
    %p48 = scmp.ne.s32.totalorder %s43, %s45
    %p49 = scmp.eq.s32.totalorder %s9, 0
    %p50 = por %p48, %p49
    %p51 = scmp.ne.s32.totalorder %s43, %s45
    %p52 = scmp.eq.s32.totalorder %s14, 1
    %p53 = por %p51, %p52
    %p54 = scmp.ne.s32.totalorder %s45, %s46
    %p55 = scmp.eq.s32.totalorder %s14, 0
    %p56 = por %p54, %p55
    %p57 = scmp.ne.s32.totalorder %s45, %s46
    %p58 = scmp.eq.s32.totalorder %s15, 1
    %p59 = por %p57, %p58
    %p61 = scmp.ne.s32.totalorder %s46, %s60
    %p62 = scmp.eq.s32.totalorder %s15, 0
    %p63 = por %p61, %p62
    %s65 = sadd.s32 %s64, 1
    %p68 = scmp.eq.s32.totalorder %s9, 1
    %p69 = scmp.ne.s32.totalorder %s64, %s66
    %p70 = scmp.eq.s32.totalorder %s9, 0
    %p71 = por %p69, %p70
    %p72 = scmp.ne.s32.totalorder %s64, %s66
    %p73 = scmp.eq.s32.totalorder %s14, 1
    %p74 = por %p72, %p73
    %p75 = scmp.ne.s32.totalorder %s66, %s67
    %p76 = scmp.eq.s32.totalorder %s14, 0
    %p77 = por %p75, %p76
    %p78 = scmp.ne.s32.totalorder %s66, %s67
    %p79 = scmp.eq.s32.totalorder %s15, 1
    %p80 = por %p78, %p79
    %p82 = scmp.ne.s32.totalorder %s67, %s81
    %p83 = scmp.eq.s32.totalorder %s15, 0
    %p84 = por %p82, %p83
    %s85 = ssub.s32 %s9, %s16
    %p86 = scmp.eq.s32.totalorder %s85, 0
    %s88 = sadd.s32 %s87, 1
    %s89 = scalar_select %p86, %s87, %s88
    %p92 = pneg %p86
    %p93 = scmp.eq.s32.totalorder %s9, 1
    %p94 = por %p92, %p93
    %p95 = scmp.ne.s32.totalorder %s87, %s90
    %p96 = scmp.eq.s32.totalorder %s9, 0
    %p97 = por %p95, %p96
    %p98 = scmp.ne.s32.totalorder %s87, %s90
    %p99 = scmp.eq.s32.totalorder %s14, 1
    %p100 = por %p98, %p99
    %p101 = scmp.ne.s32.totalorder %s90, %s91
    %p102 = scmp.eq.s32.totalorder %s14, 0
    %p103 = por %p101, %p102
    %p104 = scmp.ne.s32.totalorder %s90, %s91
    %p105 = scmp.eq.s32.totalorder %s15, 1
    %p106 = por %p104, %p105
    %p108 = scmp.ne.s32.totalorder %s91, %s107
    %p109 = scmp.eq.s32.totalorder %s15, 0
    %p110 = por %p108, %p109
    %p111 = scmp.le.s32.totalorder 1, %s9
    %p112 = scmp.lt.s32.totalorder %s9, 3
    %p113 = pnand %p111, %p112
    %p114 = pneg %p113
    // Predicated region
    $region9: #{decoder_forward.12} parent=5 // pred_check
      _
    $region10: #{decoder_forward.12} parent=5 // pred_check_branch
      %116 = sbr.rel (%p113) target = $region12
    $region11: #{decoder_forward.12} parent=5 // pred_region
      %s117 = ssub.s32 %s9, 1
      // Predicated region
      $region13: #{decoder_forward.12} parent=11 // pred_check
        %p118 = pneg %p56
      $region14: #{decoder_forward.12} parent=11 // pred_check_branch
        %120 = sbr.rel (%p118) target = $region16
      $region15: #{decoder_forward.12} parent=11 // pred_region
        _
      $region16: #{decoder_forward.12} parent=11 // pred_fallthru
        _
      // Predicated region
      $region17: #{decoder_forward.12} parent=11 // pred_check
        %p121 = pneg %p77
      $region18: #{decoder_forward.12} parent=11 // pred_check_branch
        %123 = sbr.rel (%p121) target = $region20
      $region19: #{decoder_forward.12} parent=11 // pred_region
        _
      $region20: #{decoder_forward.12} parent=11 // pred_fallthru
        _
    $region12: #{decoder_forward.12} parent=5 // pred_fallthru
      _
    %p124 = scmp.lt.s32.totalorder %s9, 2
    // Predicated region
    $region21: #{decoder_forward.12} parent=5 // pred_check
      %p125 = pneg %p124
    $region22: #{decoder_forward.12} parent=5 // pred_check_branch
      %127 = sbr.rel (%p125) target = $region24
    $region23: #{decoder_forward.12} parent=5 // pred_region
      // Predicated region
      $region25: #{decoder_forward.12} parent=23 // pred_check
        %p128 = pneg %p29
      $region26: #{decoder_forward.12} parent=23 // pred_check_branch
        %130 = sbr.rel (%p128) target = $region28
      $region27: #{decoder_forward.12} parent=23 // pred_region
        %p131 = scmp.lt.s32.totalorder %s9, 1
        %s132 = scalar_select %p131, %s9, 1
        %s133 = smul.addr %s132, 4
        %s134 = scalar_lea.vmem %s0, %s133
      $region28: #{decoder_forward.12} parent=23 // pred_fallthru
        _
    $region24: #{decoder_forward.12} parent=5 // pred_fallthru
      _
    %p135 = scmp.le.s32.totalorder 1, %s9
    %p136 = scmp.lt.s32.totalorder %s9, 3
    %p137 = pnand %p135, %p136
    %p138 = pneg %p137
    // Predicated region
    $region29: #{decoder_forward.12} parent=5 // pred_check
      _
    $region30: #{decoder_forward.12} parent=5 // pred_check_branch
      %140 = sbr.rel (%p137) target = $region32
    $region31: #{decoder_forward.12} parent=5 // pred_region
      %s141 = ssub.s32 %s9, 1
      %p142 = scmp.lt.s32.totalorder %s14, 1
      %s143 = scalar_select %p142, %s14, 1
      %s144 = smul.addr %s143, 4
      %s145 = scalar_lea.vmem %s0, %s144
      %p146 = pneg %p35
      %p147 = pneg %p32
      %p148 = pneg %p56
      %p149 = pneg %p53
      %p150 = pneg %p77
      %p151 = pneg %p74
      %p152 = pneg %p103
      %p153 = pneg %p100
      %p154 = scmp.lt.s32.totalorder %s14, 1
      %s155 = scalar_select %p154, %s14, 1
      %s156 = smul.addr %s155, 4
      %s157 = scalar_lea.vmem %s3, %s156
      %p158 = scmp.lt.s32.totalorder %s14, 1
      %s159 = scalar_select %p158, %s14, 1
      %s160 = smul.addr %s159, 4
      %s161 = scalar_lea.vmem %s0, %s160
      %p162 = scmp.lt.s32.totalorder %s14, 1
      %s163 = scalar_select %p162, %s14, 1
      %s164 = smul.addr %s163, 4
      %s165 = scalar_lea.vmem %s3, %s164
      %v167 = vld [vmem:[%s2] sm:$0xf]
      %v168 = vunpack.c.l.bf16 %v167
      %v169 = vld [vmem:[%s161] sm:$0xf]
      %v170 = vld [vmem:[%s1] sm:$0xf]
      %v171 = vld [vmem:[%s1 + $0x4] sm:$0xf]
      %v172 = vld [vmem:[%s1 + $0x8] sm:$0xf]
      %v173 = vld [vmem:[%s1 + $0xc] sm:$0xf]
      %v178 = vunpack.c.l.b16 %v170
      %v179 = vunpack.c.l.b16 %v171
      %v180 = vunpack.c.l.b16 %v172
      %v181 = vunpack.c.l.b16 %v173
      %v182 = vpack.c.b16 %v179, %v178
      %v183 = vpack.c.b16 %v181, %v180
      %vm186 = vcmask 261120
      %v188 = vsel %vm186, %v169, 0
      %190 = vmatprep.subr.bf16.mxu0 0
      %191 = vmatpush1.bf16.msra.mxu0 %v182
      %192 = vmatprep.subr.bf16.mxu0 0
      %193 = vmatpush1.bf16.msra.mxu0 %v183
      %194 = vmatprep.subr.bf16.mxu0 0
      %195 = vmatpush1.bf16.msra.mxu0 0
      %196 = vmatprep.subr.bf16.mxu0 0
      %197 = vmatpush1.bf16.msra.mxu0 0
      %198 = vmatprep.subr.bf16.mxu0 0
      %199 = vmatpush1.bf16.msra.mxu0 0
      %200 = vmatprep.subr.bf16.mxu0 0
      %201 = vmatpush1.bf16.msra.mxu0 0
      %202 = vmatprep.subr.bf16.mxu0 0
      %203 = vmatpush1.bf16.msra.mxu0 0
      %204 = vmatprep.subr.bf16.mxu0 0
      %205 = vmatpush1.bf16.msra.mxu0 0
      %206 = vmatprep.subr.bf16.mxu0 0
      %207 = vmatpush1.bf16.msra.mxu0 0
      %208 = vmatprep.subr.bf16.mxu0 0
      %209 = vmatpush1.bf16.msra.mxu0 0
      %210 = vmatprep.subr.bf16.mxu0 0
      %211 = vmatpush1.bf16.msra.mxu0 0
      %212 = vmatprep.subr.bf16.mxu0 0
      %213 = vmatpush1.bf16.msra.mxu0 0
      %214 = vmatprep.subr.bf16.mxu0 0
      %215 = vmatpush1.bf16.msra.mxu0 0
      %216 = vmatprep.subr.bf16.mxu0 0
      %217 = vmatpush1.bf16.msra.mxu0 0
      %218 = vmatprep.subr.bf16.mxu0 0
      %219 = vmatpush1.bf16.msra.mxu0 0
      %220 = vmatprep.subr.bf16.mxu0 0
      %221 = vmatpush1.bf16.msra.mxu0 0
      %222 = vmatprep.mubr.bf16.mxu0 0
      %223 = vmatmul.mubr.bf16.gmra.mrb[0].mxu0 %v188
      %v224 = vpop.f32.mrb[0].mxu0
      %v225 = vadd.f32 0.0, %v224
      %v226 = vpop.f32.mrb[0].mxu0
      %v227 = vpop.f32.mrb[0].mxu0
      %v228 = vpop.f32.mrb[0].mxu0
      %229 = vdwg.mxu0
      %v230 = vmul.f32 %v225, 0.35355338
      %v231 = vpack.c.bf16 %v230, %v230
      %v232 = vpack.c.bf16 %v225, %v225
      %234 = vrot.lane.b32.xlu0 %v232, 96
      %v235 = vpop.permute.xlu0 %234
      %vm236 = vcmask 64512
      %v238 = vsel %vm236, %v231, 0
      %v241 = vsel %vm236, %v235, 0
      %243 = vmatprep.subr.bf16.mxu0 0
      %244 = vmatpush1.bf16.xpose.msra.mxu0 %v241
      %245 = vmatprep.subr.bf16.mxu0 0
      %246 = vmatpush1.bf16.xpose.msra.mxu0 0
      %247 = vmatprep.subr.bf16.mxu0 0
      %248 = vmatpush1.bf16.xpose.msra.mxu0 0
      %249 = vmatprep.subr.bf16.mxu0 0
      %250 = vmatpush1.bf16.xpose.msra.mxu0 0
      %251 = vmatprep.subr.bf16.mxu0 0
      %252 = vmatpush1.bf16.xpose.msra.mxu0 0
      %253 = vmatprep.subr.bf16.mxu0 0
      %254 = vmatpush1.bf16.xpose.msra.mxu0 0
      %255 = vmatprep.subr.bf16.mxu0 0
      %256 = vmatpush1.bf16.xpose.msra.mxu0 0
      %257 = vmatprep.subr.bf16.mxu0 0
      %258 = vmatpush1.bf16.xpose.msra.mxu0 0
      %259 = vmatprep.subr.bf16.mxu0 0
      %260 = vmatpush1.bf16.xpose.msra.mxu0 0
      %261 = vmatprep.subr.bf16.mxu0 0
      %262 = vmatpush1.bf16.xpose.msra.mxu0 0
      %263 = vmatprep.subr.bf16.mxu0 0
      %264 = vmatpush1.bf16.xpose.msra.mxu0 0
      %265 = vmatprep.subr.bf16.mxu0 0
      %266 = vmatpush1.bf16.xpose.msra.mxu0 0
      %267 = vmatprep.subr.bf16.mxu0 0
      %268 = vmatpush1.bf16.xpose.msra.mxu0 0
      %269 = vmatprep.subr.bf16.mxu0 0
      %270 = vmatpush1.bf16.xpose.msra.mxu0 0
      %271 = vmatprep.subr.bf16.mxu0 0
      %272 = vmatpush1.bf16.xpose.msra.mxu0 0
      %273 = vmatprep.subr.bf16.mxu0 0
      %274 = vmatpush1.bf16.xpose.msra.mxu0 0
      %275 = vmatprep.mubr.bf16.mxu0 0
      %276 = vmatmul.mubr.bf16.gmra.mrb[0].mxu0 %v238
      %v277 = vpop.f32.mrb[0].mxu0
      %v278 = vadd.f32 %v168, %v277
      %v279 = vpop.f32.mrb[0].mxu0
      %v280 = vpop.f32.mrb[0].mxu0
      %v281 = vpop.f32.mrb[0].mxu0
      %282 = vdwg.mxu0
      %v283 = vsel %vm236, %v278, -inf
      %284 = vmax.xlane.f32.xlu0 %v283
      %v285 = vpop.xlane.xlu0 %284
      %v286 = vsub.f32 %v278, %v285
      %v287 = vmul.f32 %v286, 1.442695
      %v288 = vpow.pop %v287
      %v289 = vsel %vm236, %v288, 0.0
      %290 = vadd.xlane.f32.xlu0 %v289
      %v291 = vpop.xlane.xlu0 %290
      %v292 = vrcp.pop %v291
      %v293 = vmul.f32 %v288, %v292
      %v294 = vpack.c.bf16 %v293, %v293
      %295 = vrot.lane.b32.xlu0 %v232, 64
      %v296 = vpop.permute.xlu0 %295
      %v298 = vsel %vm236, %v294, 0
      %vm300 = vcmask 1043456
      %v302 = vsel %vm300, %v296, 0
      %304 = vmatprep.subr.bf16.mxu0 0
      %305 = vmatpush1.bf16.msra.mxu0 %v302
      %306 = vmatprep.subr.bf16.mxu0 0
      %307 = vmatpush1.bf16.msra.mxu0 0
      %308 = vmatprep.subr.bf16.mxu0 0
      %309 = vmatpush1.bf16.msra.mxu0 0
      %310 = vmatprep.subr.bf16.mxu0 0
      %311 = vmatpush1.bf16.msra.mxu0 0
      %312 = vmatprep.subr.bf16.mxu0 0
      %313 = vmatpush1.bf16.msra.mxu0 0
      %314 = vmatprep.subr.bf16.mxu0 0
      %315 = vmatpush1.bf16.msra.mxu0 0
      %316 = vmatprep.subr.bf16.mxu0 0
      %317 = vmatpush1.bf16.msra.mxu0 0
      %318 = vmatprep.subr.bf16.mxu0 0
      %319 = vmatpush1.bf16.msra.mxu0 0
      %320 = vmatprep.subr.bf16.mxu0 0
      %321 = vmatpush1.bf16.msra.mxu0 0
      %322 = vmatprep.subr.bf16.mxu0 0
      %323 = vmatpush1.bf16.msra.mxu0 0
      %324 = vmatprep.subr.bf16.mxu0 0
      %325 = vmatpush1.bf16.msra.mxu0 0
      %326 = vmatprep.subr.bf16.mxu0 0
      %327 = vmatpush1.bf16.msra.mxu0 0
      %328 = vmatprep.subr.bf16.mxu0 0
      %329 = vmatpush1.bf16.msra.mxu0 0
      %330 = vmatprep.subr.bf16.mxu0 0
      %331 = vmatpush1.bf16.msra.mxu0 0
      %332 = vmatprep.subr.bf16.mxu0 0
      %333 = vmatpush1.bf16.msra.mxu0 0
      %334 = vmatprep.subr.bf16.mxu0 0
      %335 = vmatpush1.bf16.msra.mxu0 0
      %336 = vmatprep.mubr.bf16.mxu0 0
      %337 = vmatmul.mubr.bf16.gmra.mrb[0].mxu0 %v298
      %v338 = vpop.f32.mrb[0].mxu0
      %v339 = vadd.f32 0.0, %v338
      %v340 = vpop.f32.mrb[0].mxu0
      %v341 = vpop.f32.mrb[0].mxu0
      %v342 = vpop.f32.mrb[0].mxu0
      %343 = vdwg.mxu0
      %v344 = vpack.c.bf16 %v339, %v339
      %vm345 = vcmask 60416
      %346 = vst.msk [vmem:[%s165] sm:$0xf] %vm345, %v344
      %348 = vrot.lane.b32.xlu0 %v231, 120
      %v349 = vpop.permute.xlu0 %348
      %350 = vrot.lane.b32.xlu0 %v232, 88
      %v351 = vpop.permute.xlu0 %350
      %v353 = vsel %vm236, %v349, 0
      %v356 = vsel %vm236, %v351, 0
      %358 = vmatprep.subr.bf16.mxu0 0
      %359 = vmatpush1.bf16.xpose.msra.mxu0 %v356
      %360 = vmatprep.subr.bf16.mxu0 0
      %361 = vmatpush1.bf16.xpose.msra.mxu0 0
      %362 = vmatprep.subr.bf16.mxu0 0
      %363 = vmatpush1.bf16.xpose.msra.mxu0 0
      %364 = vmatprep.subr.bf16.mxu0 0
      %365 = vmatpush1.bf16.xpose.msra.mxu0 0
      %366 = vmatprep.subr.bf16.mxu0 0
      %367 = vmatpush1.bf16.xpose.msra.mxu0 0
      %368 = vmatprep.subr.bf16.mxu0 0
      %369 = vmatpush1.bf16.xpose.msra.mxu0 0
      %370 = vmatprep.subr.bf16.mxu0 0
      %371 = vmatpush1.bf16.xpose.msra.mxu0 0
      %372 = vmatprep.subr.bf16.mxu0 0
      %373 = vmatpush1.bf16.xpose.msra.mxu0 0
      %374 = vmatprep.subr.bf16.mxu0 0
      %375 = vmatpush1.bf16.xpose.msra.mxu0 0
      %376 = vmatprep.subr.bf16.mxu0 0
      %377 = vmatpush1.bf16.xpose.msra.mxu0 0
      %378 = vmatprep.subr.bf16.mxu0 0
      %379 = vmatpush1.bf16.xpose.msra.mxu0 0
      %380 = vmatprep.subr.bf16.mxu0 0
      %381 = vmatpush1.bf16.xpose.msra.mxu0 0
      %382 = vmatprep.subr.bf16.mxu0 0
      %383 = vmatpush1.bf16.xpose.msra.mxu0 0
      %384 = vmatprep.subr.bf16.mxu0 0
      %385 = vmatpush1.bf16.xpose.msra.mxu0 0
      %386 = vmatprep.subr.bf16.mxu0 0
      %387 = vmatpush1.bf16.xpose.msra.mxu0 0
      %388 = vmatprep.subr.bf16.mxu0 0
      %389 = vmatpush1.bf16.xpose.msra.mxu0 0
      %390 = vmatprep.mubr.bf16.mxu0 0
      %391 = vmatmul.mubr.bf16.gmra.mrb[0].mxu0 %v353
      %v392 = vpop.f32.mrb[0].mxu0
      %v393 = vadd.f32 %v168, %v392
      %v394 = vpop.f32.mrb[0].mxu0
      %v395 = vpop.f32.mrb[0].mxu0
      %v396 = vpop.f32.mrb[0].mxu0
      %397 = vdwg.mxu0
      %v398 = vsel %vm236, %v393, -inf
      %399 = vmax.xlane.f32.xlu0 %v398
      %v400 = vpop.xlane.xlu0 %399
      %v401 = vsub.f32 %v393, %v400
      %v402 = vmul.f32 %v401, 1.442695
      %v403 = vpow.pop %v402
      %v404 = vsel %vm236, %v403, 0.0
      %405 = vadd.xlane.f32.xlu0 %v404
      %v406 = vpop.xlane.xlu0 %405
      %v407 = vrcp.pop %v406
      %v408 = vmul.f32 %v403, %v407
      %v409 = vpack.c.bf16 %v408, %v408
      %410 = vrot.lane.b32.xlu0 %v232, 56
      %v411 = vpop.permute.xlu0 %410
      %v413 = vsel %vm236, %v409, 0
      %v416 = vsel %vm300, %v411, 0
      %418 = vmatprep.subr.bf16.mxu0 0
      %419 = vmatpush1.bf16.msra.mxu0 %v416
      %420 = vmatprep.subr.bf16.mxu0 0
      %421 = vmatpush1.bf16.msra.mxu0 0
      %422 = vmatprep.subr.bf16.mxu0 0
      %423 = vmatpush1.bf16.msra.mxu0 0
      %424 = vmatprep.subr.bf16.mxu0 0
      %425 = vmatpush1.bf16.msra.mxu0 0
      %426 = vmatprep.subr.bf16.mxu0 0
      %427 = vmatpush1.bf16.msra.mxu0 0
      %428 = vmatprep.subr.bf16.mxu0 0
      %429 = vmatpush1.bf16.msra.mxu0 0
      %430 = vmatprep.subr.bf16.mxu0 0
      %431 = vmatpush1.bf16.msra.mxu0 0
      %432 = vmatprep.subr.bf16.mxu0 0
      %433 = vmatpush1.bf16.msra.mxu0 0
      %434 = vmatprep.subr.bf16.mxu0 0
      %435 = vmatpush1.bf16.msra.mxu0 0
      %436 = vmatprep.subr.bf16.mxu0 0
      %437 = vmatpush1.bf16.msra.mxu0 0
      %438 = vmatprep.subr.bf16.mxu0 0
      %439 = vmatpush1.bf16.msra.mxu0 0
      %440 = vmatprep.subr.bf16.mxu0 0
      %441 = vmatpush1.bf16.msra.mxu0 0
      %442 = vmatprep.subr.bf16.mxu0 0
      %443 = vmatpush1.bf16.msra.mxu0 0
      %444 = vmatprep.subr.bf16.mxu0 0
      %445 = vmatpush1.bf16.msra.mxu0 0
      %446 = vmatprep.subr.bf16.mxu0 0
      %447 = vmatpush1.bf16.msra.mxu0 0
      %448 = vmatprep.subr.bf16.mxu0 0
      %449 = vmatpush1.bf16.msra.mxu0 0
      %450 = vmatprep.mubr.bf16.mxu0 0
      %451 = vmatmul.mubr.bf16.gmra.mrb[0].mxu0 %v413
      %v452 = vpop.f32.mrb[0].mxu0
      %v453 = vadd.f32 0.0, %v452
      %v454 = vpop.f32.mrb[0].mxu0
      %v455 = vpop.f32.mrb[0].mxu0
      %v456 = vpop.f32.mrb[0].mxu0
      %457 = vdwg.mxu0
      %v458 = vpack.c.bf16 %v453, %v453
      %v460 = vunpack.c.l.b16 %v458
      %v461 = vpack.c.b16 %v460, %v460
      %462 = vrot.lane.b32.xlu0 %v461, 8
      %v463 = vpop.permute.xlu0 %462
      %vm465 = vcmask 126016
      %466 = vst.msk [vmem:[%s165] sm:$0xf] %vm465, %v463
      %467 = vrot.lane.b32.xlu0 %v231, 112
      %v468 = vpop.permute.xlu0 %467
      %469 = vrot.lane.b32.xlu0 %v232, 80
      %v470 = vpop.permute.xlu0 %469
      %v472 = vsel %vm236, %v468, 0
      %v475 = vsel %vm236, %v470, 0
      %477 = vmatprep.subr.bf16.mxu0 0
      %478 = vmatpush1.bf16.xpose.msra.mxu0 %v475
      %479 = vmatprep.subr.bf16.mxu0 0
      %480 = vmatpush1.bf16.xpose.msra.mxu0 0
      %481 = vmatprep.subr.bf16.mxu0 0
      %482 = vmatpush1.bf16.xpose.msra.mxu0 0
      %483 = vmatprep.subr.bf16.mxu0 0
      %484 = vmatpush1.bf16.xpose.msra.mxu0 0
      %485 = vmatprep.subr.bf16.mxu0 0
      %486 = vmatpush1.bf16.xpose.msra.mxu0 0
      %487 = vmatprep.subr.bf16.mxu0 0
      %488 = vmatpush1.bf16.xpose.msra.mxu0 0
      %489 = vmatprep.subr.bf16.mxu0 0
      %490 = vmatpush1.bf16.xpose.msra.mxu0 0
      %491 = vmatprep.subr.bf16.mxu0 0
      %492 = vmatpush1.bf16.xpose.msra.mxu0 0
      %493 = vmatprep.subr.bf16.mxu0 0
      %494 = vmatpush1.bf16.xpose.msra.mxu0 0
      %495 = vmatprep.subr.bf16.mxu0 0
      %496 = vmatpush1.bf16.xpose.msra.mxu0 0
      %497 = vmatprep.subr.bf16.mxu0 0
      %498 = vmatpush1.bf16.xpose.msra.mxu0 0
      %499 = vmatprep.subr.bf16.mxu0 0
      %500 = vmatpush1.bf16.xpose.msra.mxu0 0
      %501 = vmatprep.subr.bf16.mxu0 0
      %502 = vmatpush1.bf16.xpose.msra.mxu0 0
      %503 = vmatprep.subr.bf16.mxu0 0
      %504 = vmatpush1.bf16.xpose.msra.mxu0 0
      %505 = vmatprep.subr.bf16.mxu0 0
      %506 = vmatpush1.bf16.xpose.msra.mxu0 0
      %507 = vmatprep.subr.bf16.mxu0 0
      %508 = vmatpush1.bf16.xpose.msra.mxu0 0
      %509 = vmatprep.mubr.bf16.mxu0 0
      %510 = vmatmul.mubr.bf16.gmra.mrb[0].mxu0 %v472
      %v511 = vpop.f32.mrb[0].mxu0
      %v512 = vadd.f32 %v168, %v511
      %v513 = vpop.f32.mrb[0].mxu0
      %v514 = vpop.f32.mrb[0].mxu0
      %v515 = vpop.f32.mrb[0].mxu0
      %516 = vdwg.mxu0
      %v517 = vsel %vm236, %v512, -inf
      %518 = vmax.xlane.f32.xlu0 %v517
      %v519 = vpop.xlane.xlu0 %518
      %v520 = vsub.f32 %v512, %v519
      %v521 = vmul.f32 %v520, 1.442695
      %v522 = vpow.pop %v521
      %v523 = vsel %vm236, %v522, 0.0
      %524 = vadd.xlane.f32.xlu0 %v523
      %v525 = vpop.xlane.xlu0 %524
      %v526 = vrcp.pop %v525
      %v527 = vmul.f32 %v522, %v526
      %v528 = vpack.c.bf16 %v527, %v527
      %529 = vrot.lane.b32.xlu0 %v232, 48
      %v530 = vpop.permute.xlu0 %529
      %v532 = vsel %vm236, %v528, 0
      %v535 = vsel %vm300, %v530, 0
      %537 = vmatprep.subr.bf16.mxu0 0
      %538 = vmatpush1.bf16.msra.mxu0 %v535
      %539 = vmatprep.subr.bf16.mxu0 0
      %540 = vmatpush1.bf16.msra.mxu0 0
      %541 = vmatprep.subr.bf16.mxu0 0
      %542 = vmatpush1.bf16.msra.mxu0 0
      %543 = vmatprep.subr.bf16.mxu0 0
      %544 = vmatpush1.bf16.msra.mxu0 0
      %545 = vmatprep.subr.bf16.mxu0 0
      %546 = vmatpush1.bf16.msra.mxu0 0
      %547 = vmatprep.subr.bf16.mxu0 0
      %548 = vmatpush1.bf16.msra.mxu0 0
      %549 = vmatprep.subr.bf16.mxu0 0
      %550 = vmatpush1.bf16.msra.mxu0 0
      %551 = vmatprep.subr.bf16.mxu0 0
      %552 = vmatpush1.bf16.msra.mxu0 0
      %553 = vmatprep.subr.bf16.mxu0 0
      %554 = vmatpush1.bf16.msra.mxu0 0
      %555 = vmatprep.subr.bf16.mxu0 0
      %556 = vmatpush1.bf16.msra.mxu0 0
      %557 = vmatprep.subr.bf16.mxu0 0
      %558 = vmatpush1.bf16.msra.mxu0 0
      %559 = vmatprep.subr.bf16.mxu0 0
      %560 = vmatpush1.bf16.msra.mxu0 0
      %561 = vmatprep.subr.bf16.mxu0 0
      %562 = vmatpush1.bf16.msra.mxu0 0
      %563 = vmatprep.subr.bf16.mxu0 0
      %564 = vmatpush1.bf16.msra.mxu0 0
      %565 = vmatprep.subr.bf16.mxu0 0
      %566 = vmatpush1.bf16.msra.mxu0 0
      %567 = vmatprep.subr.bf16.mxu0 0
      %568 = vmatpush1.bf16.msra.mxu0 0
      %569 = vmatprep.mubr.bf16.mxu0 0
      %570 = vmatmul.mubr.bf16.gmra.mrb[0].mxu0 %v532
      %v571 = vpop.f32.mrb[0].mxu0
      %v572 = vadd.f32 0.0, %v571
      %v573 = vpop.f32.mrb[0].mxu0
      %v574 = vpop.f32.mrb[0].mxu0
      %v575 = vpop.f32.mrb[0].mxu0
      %576 = vdwg.mxu0
      %v577 = vpack.c.bf16 %v572, %v572
      %v579 = vunpack.c.l.b16 %v577
      %v580 = vpack.c.b16 %v579, %v579
      %581 = vrot.lane.b32.xlu0 %v580, 16
      %v582 = vpop.permute.xlu0 %581
      %vm584 = vcmask 191616
      %585 = vst.msk [vmem:[%s165] sm:$0xf] %vm584, %v582
      %586 = vrot.lane.b32.xlu0 %v231, 104
      %v587 = vpop.permute.xlu0 %586
      %588 = vrot.lane.b32.xlu0 %v232, 72
      %v589 = vpop.permute.xlu0 %588
      %v591 = vsel %vm236, %v587, 0
      %v594 = vsel %vm236, %v589, 0
      %596 = vmatprep.subr.bf16.mxu0 0
      %597 = vmatpush1.bf16.xpose.msra.mxu0 %v594
      %598 = vmatprep.subr.bf16.mxu0 0
      %599 = vmatpush1.bf16.xpose.msra.mxu0 0
      %600 = vmatprep.subr.bf16.mxu0 0
      %601 = vmatpush1.bf16.xpose.msra.mxu0 0
      %602 = vmatprep.subr.bf16.mxu0 0
      %603 = vmatpush1.bf16.xpose.msra.mxu0 0
      %604 = vmatprep.subr.bf16.mxu0 0
      %605 = vmatpush1.bf16.xpose.msra.mxu0 0
      %606 = vmatprep.subr.bf16.mxu0 0
      %607 = vmatpush1.bf16.xpose.msra.mxu0 0
      %608 = vmatprep.subr.bf16.mxu0 0
      %609 = vmatpush1.bf16.xpose.msra.mxu0 0
      %610 = vmatprep.subr.bf16.mxu0 0
      %611 = vmatpush1.bf16.xpose.msra.mxu0 0
      %612 = vmatprep.subr.bf16.mxu0 0
      %613 = vmatpush1.bf16.xpose.msra.mxu0 0
      %614 = vmatprep.subr.bf16.mxu0 0
      %615 = vmatpush1.bf16.xpose.msra.mxu0 0
      %616 = vmatprep.subr.bf16.mxu0 0
      %617 = vmatpush1.bf16.xpose.msra.mxu0 0
      %618 = vmatprep.subr.bf16.mxu0 0
      %619 = vmatpush1.bf16.xpose.msra.mxu0 0
      %620 = vmatprep.subr.bf16.mxu0 0
      %621 = vmatpush1.bf16.xpose.msra.mxu0 0
      %622 = vmatprep.subr.bf16.mxu0 0
      %623 = vmatpush1.bf16.xpose.msra.mxu0 0
      %624 = vmatprep.subr.bf16.mxu0 0
      %625 = vmatpush1.bf16.xpose.msra.mxu0 0
      %626 = vmatprep.subr.bf16.mxu0 0
      %627 = vmatpush1.bf16.xpose.msra.mxu0 0
      %628 = vmatprep.mubr.bf16.mxu0 0
      %629 = vmatmul.mubr.bf16.gmra.mrb[0].mxu0 %v591
      %v630 = vpop.f32.mrb[0].mxu0
      %v631 = vadd.f32 %v168, %v630
      %v632 = vpop.f32.mrb[0].mxu0
      %v633 = vpop.f32.mrb[0].mxu0
      %v634 = vpop.f32.mrb[0].mxu0
      %635 = vdwg.mxu0
      %v636 = vsel %vm236, %v631, -inf
      %637 = vmax.xlane.f32.xlu0 %v636
      %v638 = vpop.xlane.xlu0 %637
      %v639 = vsub.f32 %v631, %v638
      %v640 = vmul.f32 %v639, 1.442695
      %v641 = vpow.pop %v640
      %v642 = vsel %vm236, %v641, 0.0
      %643 = vadd.xlane.f32.xlu0 %v642
      %v644 = vpop.xlane.xlu0 %643
      %v645 = vrcp.pop %v644
      %v646 = vmul.f32 %v641, %v645
      %v647 = vpack.c.bf16 %v646, %v646
      %648 = vrot.lane.b32.xlu0 %v232, 40
      %v649 = vpop.permute.xlu0 %648
      %v651 = vsel %vm236, %v647, 0
      %v654 = vsel %vm300, %v649, 0
      %656 = vmatprep.subr.bf16.mxu0 0
      %657 = vmatpush1.bf16.msra.mxu0 %v654
      %658 = vmatprep.subr.bf16.mxu0 0
      %659 = vmatpush1.bf16.msra.mxu0 0
      %660 = vmatprep.subr.bf16.mxu0 0
      %661 = vmatpush1.bf16.msra.mxu0 0
      %662 = vmatprep.subr.bf16.mxu0 0
      %663 = vmatpush1.bf16.msra.mxu0 0
      %664 = vmatprep.subr.bf16.mxu0 0
      %665 = vmatpush1.bf16.msra.mxu0 0
      %666 = vmatprep.subr.bf16.mxu0 0
      %667 = vmatpush1.bf16.msra.mxu0 0
      %668 = vmatprep.subr.bf16.mxu0 0
      %669 = vmatpush1.bf16.msra.mxu0 0
      %670 = vmatprep.subr.bf16.mxu0 0
      %671 = vmatpush1.bf16.msra.mxu0 0
      %672 = vmatprep.subr.bf16.mxu0 0
      %673 = vmatpush1.bf16.msra.mxu0 0
      %674 = vmatprep.subr.bf16.mxu0 0
      %675 = vmatpush1.bf16.msra.mxu0 0
      %676 = vmatprep.subr.bf16.mxu0 0
      %677 = vmatpush1.bf16.msra.mxu0 0
      %678 = vmatprep.subr.bf16.mxu0 0
      %679 = vmatpush1.bf16.msra.mxu0 0
      %680 = vmatprep.subr.bf16.mxu0 0
      %681 = vmatpush1.bf16.msra.mxu0 0
      %682 = vmatprep.subr.bf16.mxu0 0
      %683 = vmatpush1.bf16.msra.mxu0 0
      %684 = vmatprep.subr.bf16.mxu0 0
      %685 = vmatpush1.bf16.msra.mxu0 0
      %686 = vmatprep.subr.bf16.mxu0 0
      %687 = vmatpush1.bf16.msra.mxu0 0
      %688 = vmatprep.mubr.bf16.mxu0 0
      %689 = vmatmul.mubr.bf16.gmra.mrb[0].mxu0 %v651
      %v690 = vpop.f32.mrb[0].mxu0
      %v691 = vadd.f32 0.0, %v690
      %v692 = vpop.f32.mrb[0].mxu0
      %v693 = vpop.f32.mrb[0].mxu0
      %v694 = vpop.f32.mrb[0].mxu0
      %695 = vdwg.mxu0
      %v696 = vpack.c.bf16 %v691, %v691
      %v698 = vunpack.c.l.b16 %v696
      %v699 = vpack.c.b16 %v698, %v698
      %700 = vrot.lane.b32.xlu0 %v699, 24
      %v701 = vpop.permute.xlu0 %700
      %vm703 = vcmask 257216
      %704 = vst.msk [vmem:[%s165] sm:$0xf] %vm703, %v701
      %p705 = scmp.lt.s32.totalorder %s14, 1
      %s706 = scalar_select %p705, %s14, 1
      %s707 = smul.addr %s706, 4
      %s708 = scalar_lea.vmem %s3, %s707
      // Predicated region
      $region33: #{decoder_forward.12} parent=31 // pred_check
        %p709 = pneg %p100
      $region34: #{decoder_forward.12} parent=31 // pred_check_branch
        %711 = sbr.rel (%p709) target = $region36
      $region35: #{decoder_forward.12} parent=31 // pred_region
        _
      $region36: #{decoder_forward.12} parent=31 // pred_fallthru
        _
    $region32: #{decoder_forward.12} parent=5 // pred_fallthru
      _
    %p712 = scmp.le.s32.totalorder 2, %s9
    // Predicated region
    $region37: #{decoder_forward.12} parent=5 // pred_check
      %p713 = pneg %p712
    $region38: #{decoder_forward.12} parent=5 // pred_check_branch
      %715 = sbr.rel (%p713) target = $region40
    $region39: #{decoder_forward.12} parent=5 // pred_region
      %s716 = ssub.s32 %s9, 2
      // Predicated region
      $region41: #{decoder_forward.12} parent=39 // pred_check
        %p717 = pneg %p106
      $region42: #{decoder_forward.12} parent=39 // pred_check_branch
        %719 = sbr.rel (%p717) target = $region44
      $region43: #{decoder_forward.12} parent=39 // pred_region
        %p720 = scmp.lt.s32.totalorder %s15, 1
        %s721 = scalar_select %p720, %s15, 1
        %s722 = smul.addr %s721, 4
        %s723 = scalar_lea.vmem %s3, %s722
      $region44: #{decoder_forward.12} parent=39 // pred_fallthru
        _
    $region40: #{decoder_forward.12} parent=5 // pred_fallthru
      _
  $region6: #{decoder_forward.12} parent=0 // loop_footer
    %s13 = sadd.s32 1, %s9
  $region7: #{decoder_forward.12} parent=0 // loop_footer_branch
    %8 = sbr.rel target = $region3
  $region8: #{decoder_forward.12} parent=0 // loop_exit
    _

// kernel: decoder_forward.16
$region0: #{decoder_forward.16}
  #allocation0 [shape = 'u32[]', space=smem, size = 0x4, offset = 0x4, fixed_abs, tag = 'smem constant byte address 0x4 - core index']
  #allocation1 [shape = 'u32[144,128]{1,0:T(1,128)}', space=vmem, size = 0x12000, scoped, tag = 'internal scratch']
  %s0 = inlined_call_operand.vmem [shape: bf16[16,32], index: 0, kind: input, shape index: {}]
  %s1 = inlined_call_operand.vmem [shape: bf16[32,64], index: 1, kind: input, shape index: {}]
  %s2 = inlined_call_operand.vmem [shape: f32[1,64], index: 2, kind: input, shape index: {}]
  %s3 = inlined_call_operand.vmem [shape: bf16[64,32], index: 3, kind: input, shape index: {}]
  %s4 = inlined_call_operand.vmem [shape: f32[1,32], index: 4, kind: input, shape index: {}]
  %s5 = inlined_call_operand.vmem [shape: f32[1,32], index: 5, kind: input, shape index: {}]
  %s6 = inlined_call_operand.vmem [shape: f32[1,32], index: 6, kind: input, shape index: {}]
  %s7 = inlined_call_operand.vmem [shape: bf16[16,32], index: 7, kind: output, shape index: {}]
  %s8 = sld [smem:[#allocation0]]
  $region38: #{decoder_forward.16} parent=0
    _
  %s10 = ssub.s32 1, %s8
  %s11 = scalar_select 0, %s10, %s8
  // Predicated region
  $region2: #{decoder_forward.16} parent=0 // pred_check
    _
  $region3: #{decoder_forward.16} parent=0 // pred_check_branch
    %13 = sbr.rel (0) target = $region5
  $region4: #{decoder_forward.16} parent=0 // pred_region
    _
  $region5: #{decoder_forward.16} parent=0 // pred_fallthru
    _
  // Predicated region
  $region6: #{decoder_forward.16} parent=0 // pred_check
    _
  $region7: #{decoder_forward.16} parent=0 // pred_check_branch
    %15 = sbr.rel (0) target = $region9
  $region8: #{decoder_forward.16} parent=0 // pred_region
    _
  $region9: #{decoder_forward.16} parent=0 // pred_fallthru
    _
  // Predicated region
  $region10: #{decoder_forward.16} parent=0 // pred_check
    _
  $region11: #{decoder_forward.16} parent=0 // pred_check_branch
    %17 = sbr.rel (0) target = $region13
  $region12: #{decoder_forward.16} parent=0 // pred_region
    _
  $region13: #{decoder_forward.16} parent=0 // pred_fallthru
    _
  // Predicated region
  $region14: #{decoder_forward.16} parent=0 // pred_check
    _
  $region15: #{decoder_forward.16} parent=0 // pred_check_branch
    %19 = sbr.rel (0) target = $region17
  $region16: #{decoder_forward.16} parent=0 // pred_region
    _
  $region17: #{decoder_forward.16} parent=0 // pred_fallthru
    _
  // Predicated region
  $region18: #{decoder_forward.16} parent=0 // pred_check
    _
  $region19: #{decoder_forward.16} parent=0 // pred_check_branch
    %21 = sbr.rel (0) target = $region21
  $region20: #{decoder_forward.16} parent=0 // pred_region
    _
  $region21: #{decoder_forward.16} parent=0 // pred_fallthru
    _
  // Predicated region
  $region22: #{decoder_forward.16} parent=0 // pred_check
    _
  $region23: #{decoder_forward.16} parent=0 // pred_check_branch
    %23 = sbr.rel (0) target = $region25
  $region24: #{decoder_forward.16} parent=0 // pred_region
    _
  $region25: #{decoder_forward.16} parent=0 // pred_fallthru
    _
  // Predicated region
  $region26: #{decoder_forward.16} parent=0 // pred_check
    _
  $region27: #{decoder_forward.16} parent=0 // pred_check_branch
    %25 = sbr.rel (0) target = $region29
  $region28: #{decoder_forward.16} parent=0 // pred_region
    _
  $region29: #{decoder_forward.16} parent=0 // pred_fallthru
    _
  %v27 = vld [vmem:[%s0] sm:$0xf]
  %v28 = vld [vmem:[%s0 + $0x4] sm:$0xf]
  %v29 = vld [vmem:[%s1] sm:$0xf]
  %v30 = vld [vmem:[%s1 + $0x4] sm:$0xf]
  %v31 = vld [vmem:[%s1 + $0x8] sm:$0xf]
  %v32 = vld [vmem:[%s1 + $0xc] sm:$0xf]
  %v33 = vld [vmem:[%s2] sm:$0x1]
  %v35 = vlaneseq
  %v36 = vshrl.u32 %v35, 7
  %v37 = vsub.s32 0, %v36
  %v38 = vrot.slane %v33, %v37
  %v42 = vunpack.c.l.b16 %v27
  %v43 = vunpack.c.l.b16 %v28
  %v44 = vpack.c.b16 %v43, %v42
  %v49 = vunpack.c.l.b16 %v29
  %v50 = vunpack.c.l.b16 %v30
  %v51 = vunpack.c.l.b16 %v31
  %v52 = vunpack.c.l.b16 %v32
  %v53 = vpack.c.b16 %v50, %v49
  %v54 = vpack.c.b16 %v52, %v51
  %vm57 = vcmask 261120
  %v59 = vsel %vm57, %v44, 0
  %61 = vmatprep.subr.bf16.mxu0 0
  %62 = vmatpush1.bf16.msra.mxu0 %v53
  %63 = vmatprep.subr.bf16.mxu0 0
  %64 = vmatpush1.bf16.msra.mxu0 %v54
  %65 = vmatprep.subr.bf16.mxu0 0
  %66 = vmatpush1.bf16.msra.mxu0 0
  %67 = vmatprep.subr.bf16.mxu0 0
  %68 = vmatpush1.bf16.msra.mxu0 0
  %69 = vmatprep.subr.bf16.mxu0 0
  %70 = vmatpush1.bf16.msra.mxu0 0
  %71 = vmatprep.subr.bf16.mxu0 0
  %72 = vmatpush1.bf16.msra.mxu0 0
  %73 = vmatprep.subr.bf16.mxu0 0
  %74 = vmatpush1.bf16.msra.mxu0 0
  %75 = vmatprep.subr.bf16.mxu0 0
  %76 = vmatpush1.bf16.msra.mxu0 0
  %77 = vmatprep.subr.bf16.mxu0 0
  %78 = vmatpush1.bf16.msra.mxu0 0
  %79 = vmatprep.subr.bf16.mxu0 0
  %80 = vmatpush1.bf16.msra.mxu0 0
  %81 = vmatprep.subr.bf16.mxu0 0
  %82 = vmatpush1.bf16.msra.mxu0 0
  %83 = vmatprep.subr.bf16.mxu0 0
  %84 = vmatpush1.bf16.msra.mxu0 0
  %85 = vmatprep.subr.bf16.mxu0 0
  %86 = vmatpush1.bf16.msra.mxu0 0
  %87 = vmatprep.subr.bf16.mxu0 0
  %88 = vmatpush1.bf16.msra.mxu0 0
  %89 = vmatprep.subr.bf16.mxu0 0
  %90 = vmatpush1.bf16.msra.mxu0 0
  %91 = vmatprep.subr.bf16.mxu0 0
  %92 = vmatpush1.bf16.msra.mxu0 0
  %93 = vmatprep.mubr.bf16.mxu0 0
  %94 = vmatmul.mubr.bf16.gmra.mrb[0].mxu0 %v59
  %v95 = vpop.f32.mrb[0].mxu0
  %v96 = vadd.f32 %v38, %v95
  %v97 = vpop.f32.mrb[0].mxu0
  %v98 = vpop.f32.mrb[0].mxu0
  %v99 = vadd.f32 %v38, %v98
  %v100 = vpop.f32.mrb[0].mxu0
  %101 = vdwg.mxu0
  %v102 = vmax.f32 %v96, 0.0
  %v103 = vmax.f32 %v99, 0.0
  %v104 = vpack.c.bf16 %v103, %v102
  %v105 = vld [vmem:[%s3] sm:$0xf]
  %v106 = vld [vmem:[%s3 + $0x4] sm:$0xf]
  %v107 = vld [vmem:[%s3 + $0x8] sm:$0xf]
  %v108 = vld [vmem:[%s3 + $0xc] sm:$0xf]
  %v109 = vld [vmem:[%s3 + $0x10] sm:$0xf]
  %v110 = vld [vmem:[%s3 + $0x14] sm:$0xf]
  %v111 = vld [vmem:[%s3 + $0x18] sm:$0xf]
  %v112 = vld [vmem:[%s3 + $0x1c] sm:$0xf]
  %v113 = vld [vmem:[%s4] sm:$0x1]
  %v115 = vlaneseq
  %v116 = vshrl.u32 %v115, 7
  %v117 = vsub.s32 0, %v116
  %v118 = vrot.slane %v113, %v117
  %v128 = vunpack.c.l.b16 %v105
  %v129 = vunpack.c.l.b16 %v106
  %v130 = vunpack.c.l.b16 %v107
  %v131 = vunpack.c.l.b16 %v108
  %v132 = vunpack.c.l.b16 %v109
  %v133 = vunpack.c.l.b16 %v110
  %v134 = vunpack.c.l.b16 %v111
  %v135 = vunpack.c.l.b16 %v112
  %v136 = vpack.c.b16 %v129, %v128
  %v137 = vpack.c.b16 %v131, %v130
  %v138 = vpack.c.b16 %v133, %v132
  %v139 = vpack.c.b16 %v135, %v134
  %vm144 = vcmask 523264
  %v146 = vsel %vm144, %v104, 0
  %148 = vmatprep.subr.bf16.mxu0 0
  %149 = vmatpush1.bf16.msra.mxu0 %v136
  %150 = vmatprep.subr.bf16.mxu0 0
  %151 = vmatpush1.bf16.msra.mxu0 %v137
  %152 = vmatprep.subr.bf16.mxu0 0
  %153 = vmatpush1.bf16.msra.mxu0 %v138
  %154 = vmatprep.subr.bf16.mxu0 0
  %155 = vmatpush1.bf16.msra.mxu0 %v139
  %156 = vmatprep.subr.bf16.mxu0 0
  %157 = vmatpush1.bf16.msra.mxu0 0
  %158 = vmatprep.subr.bf16.mxu0 0
  %159 = vmatpush1.bf16.msra.mxu0 0
  %160 = vmatprep.subr.bf16.mxu0 0
  %161 = vmatpush1.bf16.msra.mxu0 0
  %162 = vmatprep.subr.bf16.mxu0 0
  %163 = vmatpush1.bf16.msra.mxu0 0
  %164 = vmatprep.subr.bf16.mxu0 0
  %165 = vmatpush1.bf16.msra.mxu0 0
  %166 = vmatprep.subr.bf16.mxu0 0
  %167 = vmatpush1.bf16.msra.mxu0 0
  %168 = vmatprep.subr.bf16.mxu0 0
  %169 = vmatpush1.bf16.msra.mxu0 0
  %170 = vmatprep.subr.bf16.mxu0 0
  %171 = vmatpush1.bf16.msra.mxu0 0
  %172 = vmatprep.subr.bf16.mxu0 0
  %173 = vmatpush1.bf16.msra.mxu0 0
  %174 = vmatprep.subr.bf16.mxu0 0
  %175 = vmatpush1.bf16.msra.mxu0 0
  %176 = vmatprep.subr.bf16.mxu0 0
  %177 = vmatpush1.bf16.msra.mxu0 0
  %178 = vmatprep.subr.bf16.mxu0 0
  %179 = vmatpush1.bf16.msra.mxu0 0
  %180 = vmatprep.mubr.bf16.mxu0 0
  %181 = vmatmul.mubr.bf16.gmra.mrb[0].mxu0 %v146
  %v182 = vpop.f32.mrb[0].mxu0
  %v183 = vadd.f32 %v118, %v182
  %v184 = vpop.f32.mrb[0].mxu0
  %v185 = vpop.f32.mrb[0].mxu0
  %v186 = vadd.f32 %v118, %v185
  %v187 = vpop.f32.mrb[0].mxu0
  %188 = vdwg.mxu0
  %v189 = vunpack.c.l.bf16 %v27
  %v190 = vunpack.c.l.bf16 %v28
  %v191 = vadd.f32 %v189, %v183
  %v192 = vadd.f32 %v190, %v186
  %v193 = vsel %vm57, %v191, 0.0
  %194 = vadd.xlane.f32.xlu0 %v193
  %v195 = vpop.xlane.xlu0 %194
  %v196 = vsel %vm57, %v192, 0.0
  %197 = vadd.xlane.f32.xlu0 %v196
  %v198 = vpop.xlane.xlu0 %197
  %v199 = vrcp.pop 32.0
  %v200 = vmul.f32 %v195, %v199
  %v201 = vmul.f32 %v198, %v199
  %v202 = vsub.f32 %v191, %v200
  %v203 = vsub.f32 %v192, %v201
  %v204 = vmul.f32 %v202, %v202
  %v205 = vmul.f32 %v203, %v203
  %v206 = vsel %vm57, %v204, 0.0
  %207 = vadd.xlane.f32.xlu0 %v206
  %v208 = vpop.xlane.xlu0 %207
  %v209 = vsel %vm57, %v205, 0.0
  %210 = vadd.xlane.f32.xlu0 %v209
  %v211 = vpop.xlane.xlu0 %210
  %v212 = vmul.f32 %v208, %v199
  %v213 = vmul.f32 %v211, %v199
  %v214 = vadd.f32 %v212, 1e-06
  %v215 = vadd.f32 %v213, 1e-06
  %v216 = vrsqrt.pop %v214
  %v217 = vrsqrt.pop %v215
  %v218 = vmul.f32 %v202, %v216
  %v219 = vmul.f32 %v203, %v217
  %v220 = vld [vmem:[%s5] sm:$0x1]
  %v222 = vlaneseq
  %v223 = vshrl.u32 %v222, 7
  %v224 = vsub.s32 0, %v223
  %v225 = vrot.slane %v220, %v224
  %v227 = vmul.f32 %v225, %v218
  %v228 = vmul.f32 %v225, %v219
  %v229 = vld [vmem:[%s6] sm:$0x1]
  %v231 = vlaneseq
  %v232 = vshrl.u32 %v231, 7
  %v233 = vsub.s32 0, %v232
  %v234 = vrot.slane %v229, %v233
  %v236 = vadd.f32 %v227, %v234
  %v237 = vadd.f32 %v228, %v234
  %v238 = vpack.c.bf16 %v237, %v236
  %v240 = vunpack.c.l.b16 %v238
  %v241 = vunpack.c.h.b16 %v238
  %v242 = vpack.c.b16 %v240, %v240
  %v243 = vpack.c.b16 %v241, %v241
  %vm246 = vcmask 257024
  %247 = vst.msk [vmem:[%s7] sm:$0xf] %vm246, %v242
  %248 = vst.msk [vmem:[%s7 + $0x4] sm:$0xf] %vm246, %v243
  // Predicated region
  $region30: #{decoder_forward.16} parent=0 // pred_check
    _
  $region31: #{decoder_forward.16} parent=0 // pred_check_branch
    %250 = sbr.rel (0) target = $region33
  $region32: #{decoder_forward.16} parent=0 // pred_region
    _
  $region33: #{decoder_forward.16} parent=0 // pred_fallthru
    _
  // Predicated region
  $region34: #{decoder_forward.16} parent=0 // pred_check
    _
  $region35: #{decoder_forward.16} parent=0 // pred_check_branch
    %252 = sbr.rel (0) target = $region37
  $region36: #{decoder_forward.16} parent=0 // pred_region
    _
  $region37: #{decoder_forward.16} parent=0 // pred_fallthru
    _

</llo_original>
